<compile_context>
chip_gen: v5e
topology: v5e:2x2
jax: 0.10.0
libtpu: 0.0.40
codegen_flags: <defaults>
</compile_context>

<pallas_src>
import math
import jax
import jax.numpy as jnp
from jax import lax
from jax.experimental import pallas as pl
from jax.experimental.pallas import tpu as pltpu


def _round_up(v, m):
    return ((v + m - 1) // m) * m


def make_mlp_kernel(B, H, W, C, HID, PAD):
    N = H * W
    INV_SQRT2 = 0.7071067811865476
    # Depthwise weight layout: wd[(di+1)*3 + (dj+1), c] multiplies in(i+di, j+dj, c).
    OFFS = [(di, dj) for di in (-1, 0, 1) for dj in (-1, 0, 1)]

    def kernel(x_ref, w1_ref, b1_ref, wd_ref, bd_ref, w2_ref, b2_ref,
               o_ref, hbuf_ref):
        # ---------------- fc1: (N, C) @ (C, HID) + b1 ----------------
        x = x_ref[0]                                                  # (N, C)
        h = jnp.dot(x, w1_ref[...],
                    preferred_element_type=jnp.float32) + b1_ref[...]  # (N, HID)

        # Stash h in a lightly padded VMEM buffer so every conv tap is a
        # static full-height slice at a constant offset.  PAD is a multiple
        # of 8 -> this interior store is sublane-aligned and unmasked.
        hbuf_ref[PAD:PAD + N, :] = h
        # Pad rows are not needed for correctness (masks below zero all
        # out-of-image taps); zero them anyway so no uninitialized VMEM is
        # ever read.  This is 2*PAD rows, not a full-array memset.
        zpad = jnp.zeros((PAD, HID), jnp.float32)
        hbuf_ref[0:PAD, :] = zpad
        hbuf_ref[PAD + N:PAD + N + PAD, :] = zpad

        # -------- depthwise 3x3 conv, padding 1, via shift-based taps --------
        # In the flattened (N, HID) layout a spatial shift (di, dj) is a shift
        # of s = di*W + dj along N, plus a border-validity mask.
        n_idx = lax.broadcasted_iota(jnp.int32, (N, HID), 0)          # token id
        if (W & (W - 1)) == 0:
            col = jnp.bitwise_and(n_idx, W - 1)                       # j = n % W
        else:
            col = n_idx % W
        # Row validity reduces to a bound check on n (since 0 <= j < W):
        #   0 <= i+di < H  <=>  0 <= n + di*W < N
        row_ok = {-1: n_idx >= W, 0: None, 1: n_idx < (N - W)}
        col_ok = {-1: col >= 1,   0: None, 1: col <= (W - 2)}

        acc = jnp.zeros((N, HID), jnp.float32)
        for di, dj in OFFS:
            wrow = wd_ref[(di + 1) * 3 + (dj + 1), :]                 # (HID,)
            if di == 0 and dj == 0:
                acc = acc + h * wrow          # center tap: reuse in-register h
                continue
            s = di * W + dj
            tap = hbuf_ref[PAD + s:PAD + s + N, :]                    # (N, HID)
            mask = row_ok[di]
            if col_ok[dj] is not None:
                mask = col_ok[dj] if mask is None else jnp.logical_and(mask, col_ok[dj])
            tap = jnp.where(mask, tap, 0.0)
            acc = acc + tap * wrow
        acc = acc + bd_ref[...]                                       # conv bias

        # ---------------- exact (erf) GELU ----------------
        g = 0.5 * acc * (1.0 + lax.erf(acc * INV_SQRT2))

        # ---------------- fc2: (N, HID) @ (HID, C) + b2 ----------------
        out = jnp.dot(g, w2_ref[...],
                      preferred_element_type=jnp.float32) + b2_ref[...]  # (N, C)
        o_ref[0] = out.astype(o_ref.dtype)

    return kernel


def mlp_pallas(x, w1, b1, wd, bd, w2, b2, H, W):
    B, N, C = x.shape
    HID = w1.shape[1]
    assert N == H * W
    PAD = _round_up(W + 1, 8)        # >= max tap offset (W+1), sublane-aligned

    kernel = make_mlp_kernel(B, H, W, C, HID, PAD)

    grid_spec = pltpu.PrefetchScalarGridSpec(
        num_scalar_prefetch=0,
        grid=(B,),
        in_specs=[
            pl.BlockSpec((1, N, C), lambda b: (b, 0, 0)),   # x
            pl.BlockSpec((C, HID), lambda b: (0, 0)),       # w1
            pl.BlockSpec((1, HID), lambda b: (0, 0)),       # b1
            pl.BlockSpec((9, HID), lambda b: (0, 0)),       # dw weights (3*3, HID)
            pl.BlockSpec((1, HID), lambda b: (0, 0)),       # dw bias
            pl.BlockSpec((HID, C), lambda b: (0, 0)),       # w2
            pl.BlockSpec((1, C), lambda b: (0, 0)),         # b2
        ],
        out_specs=pl.BlockSpec((1, N, C), lambda b: (b, 0, 0)),
        scratch_shapes=[pltpu.VMEM((PAD + N + PAD, HID), jnp.float32)],
    )

    return pl.pallas_call(
        kernel,
        out_shape=jax.ShapeDtypeStruct((B, N, C), x.dtype),
        grid_spec=grid_spec,
        compiler_params=pltpu.CompilerParams(
            # Output blocks are disjoint per batch element -> safe to shard the
            # batch axis across TensorCores (2x on v7x; no-op on v5e/v6e).
            dimension_semantics=("parallel",)),
    )(x, w1, b1, wd, bd, w2, b2)


def mlp_reference(x, w1, b1, wd, bd, w2, b2, H, W):
    B, N, C = x.shape
    HID = w1.shape[1]
    h = x @ w1 + b1                                              # (B, N, HID)
    hh = h.reshape(B, H, W, HID)
    k = wd.reshape(3, 3, 1, HID)                                 # HWIO, depthwise
    d = lax.conv_general_dilated(
        hh, k, window_strides=(1, 1), padding="SAME",
        dimension_numbers=("NHWC", "HWIO", "NHWC"),
        feature_group_count=HID) + bd
    g = 0.5 * d * (1.0 + lax.erf(d * 0.7071067811865476))
    return g.reshape(B, N, HID) @ w2 + b2


if __name__ == "__main__":
    # Small shapes consistent with the module: B=2, H=W=16 (N=256), C=8, hidden=32.
    B, H, W = 2, 16, 16
    C, HID = 8, 32
    N = H * W

    key = jax.random.PRNGKey(0)
    kx, k1, kd, k2 = jax.random.split(key, 4)

    x = jax.random.normal(kx, (B, N, C), dtype=jnp.float32)

    # fc1: trunc_normal(std=0.02) weights, zero bias (stored pre-transposed: (in, out))
    w1 = 0.02 * jax.random.truncated_normal(k1, -2.0, 2.0, (C, HID), jnp.float32)
    b1 = jnp.zeros((1, HID), jnp.float32)

    # depthwise conv: normal(0, sqrt(2/fan_out)), fan_out = 3*3*HID/HID = 9, zero bias
    wd = math.sqrt(2.0 / 9.0) * jax.random.normal(kd, (9, HID), jnp.float32)
    bd = jnp.zeros((1, HID), jnp.float32)

    # fc2: trunc_normal(std=0.02) weights, zero bias (stored pre-transposed: (in, out))
    w2 = 0.02 * jax.random.truncated_normal(k2, -2.0, 2.0, (HID, C), jnp.float32)
    b2 = jnp.zeros((1, C), jnp.float32)

    # Dropout p=0.0 -> identity; nothing to implement.
    out = mlp_pallas(x, w1, b1, wd, bd, w2, b2, H, W)
    out = jax.block_until_ready(out)

    ref = mlp_reference(x, w1, b1, wd, bd, w2, b2, H, W)
    assert out.shape == (B, N, C)
    assert jnp.allclose(out, ref, atol=1e-4, rtol=1e-4), (
        float(jnp.max(jnp.abs(out - ref))))

    print("KERNEL_OK")
</pallas_src>

<mosaic_0001>
module attributes {stable_mosaic.version = 11 : i64} {
  func.func @kernel(%arg0: i32, %arg1: memref<1x256x8xf32, #tpu.memory_space<vmem>>, %arg2: memref<8x32xf32, #tpu.memory_space<vmem>>, %arg3: memref<1x32xf32, #tpu.memory_space<vmem>>, %arg4: memref<9x32xf32, #tpu.memory_space<vmem>>, %arg5: memref<1x32xf32, #tpu.memory_space<vmem>>, %arg6: memref<32x8xf32, #tpu.memory_space<vmem>>, %arg7: memref<1x8xf32, #tpu.memory_space<vmem>>, %arg8: memref<1x256x8xf32, #tpu.memory_space<vmem>>, %arg9: memref<304x32xf32, #tpu.memory_space<vmem>>) attributes {dimension_semantics = [#tpu.dimension_semantics<parallel>], iteration_bounds = array<i64: 2>, scalar_prefetch = 0 : i64, scratch_operands = 1 : i64, tpu.core_type = #tpu.core_type<tc>, window_params = [{transform_indices = @transform_0, window_bounds = array<i64: 1, 256, 8>}, {pipeline_mode = #tpu.pipeline_mode<synchronous>, transform_indices = @transform_1, window_bounds = array<i64: 8, 32>}, {pipeline_mode = #tpu.pipeline_mode<synchronous>, transform_indices = @transform_2, window_bounds = array<i64: 1, 32>}, {pipeline_mode = #tpu.pipeline_mode<synchronous>, transform_indices = @transform_3, window_bounds = array<i64: 9, 32>}, {pipeline_mode = #tpu.pipeline_mode<synchronous>, transform_indices = @transform_4, window_bounds = array<i64: 1, 32>}, {pipeline_mode = #tpu.pipeline_mode<synchronous>, transform_indices = @transform_5, window_bounds = array<i64: 32, 8>}, {pipeline_mode = #tpu.pipeline_mode<synchronous>, transform_indices = @transform_6, window_bounds = array<i64: 1, 8>}, {transform_indices = @transform_7, window_bounds = array<i64: 1, 256, 8>}]} {
    %c0 = arith.constant 0 : index
    %c0_0 = arith.constant 0 : index
    %c0_1 = arith.constant 0 : index
    %0 = vector.load %arg1[%c0, %c0_0, %c0_1] : memref<1x256x8xf32, #tpu.memory_space<vmem>>, vector<1x256x8xf32>
    %1 = vector.shape_cast %0 : vector<1x256x8xf32> to vector<256x8xf32>
    %c0_2 = arith.constant 0 : index
    %c0_3 = arith.constant 0 : index
    %2 = vector.load %arg2[%c0_2, %c0_3] : memref<8x32xf32, #tpu.memory_space<vmem>>, vector<8x32xf32>
    %cst = arith.constant dense<0.000000e+00> : vector<256x32xf32>
    %3 = tpu.matmul %1, %2, %cst {dimension_numbers = #tpu.dot_dimension_numbers<[1], [0], [0], [1], [0, 0, 1, 1], [], []>} : vector<256x8xf32>, vector<8x32xf32>, vector<256x32xf32> -> vector<256x32xf32>
    %c0_4 = arith.constant 0 : index
    %c0_5 = arith.constant 0 : index
    %4 = vector.load %arg3[%c0_4, %c0_5] : memref<1x32xf32, #tpu.memory_space<vmem>>, vector<1x32xf32>
    %5 = vector.broadcast %4 : vector<1x32xf32> to vector<256x32xf32>
    %6 = arith.addf %3, %5 : vector<256x32xf32>
    %c24 = arith.constant 24 : index
    %c0_6 = arith.constant 0 : index
    %7 = vector.load %arg9[%c24, %c0_6] : memref<304x32xf32, #tpu.memory_space<vmem>>, vector<256x32xf32>
    tpu.vector_store %arg9[%c24, %c0_6], %6 {strides = array<i32>} : memref<304x32xf32, #tpu.memory_space<vmem>>, vector<256x32xf32>,
    %cst_7 = arith.constant 0.000000e+00 : f32
    %8 = vector.broadcast %cst_7 : f32 to vector<24x32xf32>
    %c0_8 = arith.constant 0 : index
    %c0_9 = arith.constant 0 : index
    %9 = vector.load %arg9[%c0_8, %c0_9] : memref<304x32xf32, #tpu.memory_space<vmem>>, vector<24x32xf32>
    tpu.vector_store %arg9[%c0_8, %c0_9], %8 {strides = array<i32>} : memref<304x32xf32, #tpu.memory_space<vmem>>, vector<24x32xf32>,
    %c280 = arith.constant 280 : index
    %c0_10 = arith.constant 0 : index
    %10 = vector.load %arg9[%c280, %c0_10] : memref<304x32xf32, #tpu.memory_space<vmem>>, vector<24x32xf32>
    tpu.vector_store %arg9[%c280, %c0_10], %8 {strides = array<i32>} : memref<304x32xf32, #tpu.memory_space<vmem>>, vector<24x32xf32>,
    %11 = tpu.iota {dimensions = array<i32: 0>} : vector<256x32xi32>
    %c15_i32 = arith.constant 15 : i32
    %12 = vector.broadcast %c15_i32 : i32 to vector<256x32xi32>
    %13 = arith.andi %11, %12 : vector<256x32xi32>
    %c16_i32 = arith.constant 16 : i32
    %14 = vector.broadcast %c16_i32 : i32 to vector<256x32xi32>
    %15 = arith.cmpi sge, %11, %14 : vector<256x32xi32>
    %c240_i32 = arith.constant 240 : i32
    %16 = vector.broadcast %c240_i32 : i32 to vector<256x32xi32>
    %17 = arith.cmpi slt, %11, %16 : vector<256x32xi32>
    %c1_i32 = arith.constant 1 : i32
    %18 = vector.broadcast %c1_i32 : i32 to vector<256x32xi32>
    %19 = arith.cmpi sge, %13, %18 : vector<256x32xi32>
    %c14_i32 = arith.constant 14 : i32
    %20 = vector.broadcast %c14_i32 : i32 to vector<256x32xi32>
    %21 = arith.cmpi sle, %13, %20 : vector<256x32xi32>
    %cst_11 = arith.constant 0.000000e+00 : f32
    %22 = vector.broadcast %cst_11 : f32 to vector<256x32xf32>
    %c0_12 = arith.constant 0 : index
    %c0_13 = arith.constant 0 : index
    %23 = vector.load %arg4[%c0_12, %c0_13] : memref<9x32xf32, #tpu.memory_space<vmem>>, vector<1x32xf32>
    %24 = vector.shape_cast %23 : vector<1x32xf32> to vector<32xf32>
    %c7 = arith.constant 7 : index
    %c0_14 = arith.constant 0 : index
    %25 = vector.load %arg9[%c7, %c0_14] : memref<304x32xf32, #tpu.memory_space<vmem>>, vector<256x32xf32>
    %26 = arith.andi %15, %19 : vector<256x32xi1>
    %cst_15 = arith.constant 0.000000e+00 : f32
    %27 = vector.broadcast %cst_15 : f32 to vector<256x32xf32>
    %28 = arith.select %26, %25, %27 : vector<256x32xi1>, vector<256x32xf32>
    %29 = vector.shape_cast %24 : vector<32xf32> to vector<1x32xf32>
    %30 = vector.broadcast %29 : vector<1x32xf32> to vector<256x32xf32>
    %31 = arith.mulf %28, %30 : vector<256x32xf32>
    %32 = arith.addf %22, %31 : vector<256x32xf32>
    %c1 = arith.constant 1 : index
    %c0_16 = arith.constant 0 : index
    %33 = vector.load %arg4[%c1, %c0_16] : memref<9x32xf32, #tpu.memory_space<vmem>>, vector<1x32xf32>
    %34 = vector.shape_cast %33 : vector<1x32xf32> to vector<32xf32>
    %c8 = arith.constant 8 : index
    %c0_17 = arith.constant 0 : index
    %35 = vector.load %arg9[%c8, %c0_17] : memref<304x32xf32, #tpu.memory_space<vmem>>, vector<256x32xf32>
    %cst_18 = arith.constant 0.000000e+00 : f32
    %36 = vector.broadcast %cst_18 : f32 to vector<256x32xf32>
    %37 = arith.select %15, %35, %36 : vector<256x32xi1>, vector<256x32xf32>
    %38 = vector.shape_cast %34 : vector<32xf32> to vector<1x32xf32>
    %39 = vector.broadcast %38 : vector<1x32xf32> to vector<256x32xf32>
    %40 = arith.mulf %37, %39 : vector<256x32xf32>
    %41 = arith.addf %32, %40 : vector<256x32xf32>
    %c2 = arith.constant 2 : index
    %c0_19 = arith.constant 0 : index
    %42 = vector.load %arg4[%c2, %c0_19] : memref<9x32xf32, #tpu.memory_space<vmem>>, vector<1x32xf32>
    %43 = vector.shape_cast %42 : vector<1x32xf32> to vector<32xf32>
    %c9 = arith.constant 9 : index
    %c0_20 = arith.constant 0 : index
    %44 = vector.load %arg9[%c9, %c0_20] : memref<304x32xf32, #tpu.memory_space<vmem>>, vector<256x32xf32>
    %45 = arith.andi %15, %21 : vector<256x32xi1>
    %cst_21 = arith.constant 0.000000e+00 : f32
    %46 = vector.broadcast %cst_21 : f32 to vector<256x32xf32>
    %47 = arith.select %45, %44, %46 : vector<256x32xi1>, vector<256x32xf32>
    %48 = vector.shape_cast %43 : vector<32xf32> to vector<1x32xf32>
    %49 = vector.broadcast %48 : vector<1x32xf32> to vector<256x32xf32>
    %50 = arith.mulf %47, %49 : vector<256x32xf32>
    %51 = arith.addf %41, %50 : vector<256x32xf32>
    %c3 = arith.constant 3 : index
    %c0_22 = arith.constant 0 : index
    %52 = vector.load %arg4[%c3, %c0_22] : memref<9x32xf32, #tpu.memory_space<vmem>>, vector<1x32xf32>
    %53 = vector.shape_cast %52 : vector<1x32xf32> to vector<32xf32>
    %c23 = arith.constant 23 : index
    %c0_23 = arith.constant 0 : index
    %54 = vector.load %arg9[%c23, %c0_23] : memref<304x32xf32, #tpu.memory_space<vmem>>, vector<256x32xf32>
    %cst_24 = arith.constant 0.000000e+00 : f32
    %55 = vector.broadcast %cst_24 : f32 to vector<256x32xf32>
    %56 = arith.select %19, %54, %55 : vector<256x32xi1>, vector<256x32xf32>
    %57 = vector.shape_cast %53 : vector<32xf32> to vector<1x32xf32>
    %58 = vector.broadcast %57 : vector<1x32xf32> to vector<256x32xf32>
    %59 = arith.mulf %56, %58 : vector<256x32xf32>
    %60 = arith.addf %51, %59 : vector<256x32xf32>
    %c4 = arith.constant 4 : index
    %c0_25 = arith.constant 0 : index
    %61 = vector.load %arg4[%c4, %c0_25] : memref<9x32xf32, #tpu.memory_space<vmem>>, vector<1x32xf32>
    %62 = vector.shape_cast %61 : vector<1x32xf32> to vector<32xf32>
    %63 = vector.shape_cast %62 : vector<32xf32> to vector<1x32xf32>
    %64 = vector.broadcast %63 : vector<1x32xf32> to vector<256x32xf32>
    %65 = arith.mulf %6, %64 : vector<256x32xf32>
    %66 = arith.addf %60, %65 : vector<256x32xf32>
    %c5 = arith.constant 5 : index
    %c0_26 = arith.constant 0 : index
    %67 = vector.load %arg4[%c5, %c0_26] : memref<9x32xf32, #tpu.memory_space<vmem>>, vector<1x32xf32>
    %68 = vector.shape_cast %67 : vector<1x32xf32> to vector<32xf32>
    %c25 = arith.constant 25 : index
    %c0_27 = arith.constant 0 : index
    %69 = vector.load %arg9[%c25, %c0_27] : memref<304x32xf32, #tpu.memory_space<vmem>>, vector<256x32xf32>
    %cst_28 = arith.constant 0.000000e+00 : f32
    %70 = vector.broadcast %cst_28 : f32 to vector<256x32xf32>
    %71 = arith.select %21, %69, %70 : vector<256x32xi1>, vector<256x32xf32>
    %72 = vector.shape_cast %68 : vector<32xf32> to vector<1x32xf32>
    %73 = vector.broadcast %72 : vector<1x32xf32> to vector<256x32xf32>
    %74 = arith.mulf %71, %73 : vector<256x32xf32>
    %75 = arith.addf %66, %74 : vector<256x32xf32>
    %c6 = arith.constant 6 : index
    %c0_29 = arith.constant 0 : index
    %76 = vector.load %arg4[%c6, %c0_29] : memref<9x32xf32, #tpu.memory_space<vmem>>, vector<1x32xf32>
    %77 = vector.shape_cast %76 : vector<1x32xf32> to vector<32xf32>
    %c39 = arith.constant 39 : index
    %c0_30 = arith.constant 0 : index
    %78 = vector.load %arg9[%c39, %c0_30] : memref<304x32xf32, #tpu.memory_space<vmem>>, vector<256x32xf32>
    %79 = arith.andi %17, %19 : vector<256x32xi1>
    %cst_31 = arith.constant 0.000000e+00 : f32
    %80 = vector.broadcast %cst_31 : f32 to vector<256x32xf32>
    %81 = arith.select %79, %78, %80 : vector<256x32xi1>, vector<256x32xf32>
    %82 = vector.shape_cast %77 : vector<32xf32> to vector<1x32xf32>
    %83 = vector.broadcast %82 : vector<1x32xf32> to vector<256x32xf32>
    %84 = arith.mulf %81, %83 : vector<256x32xf32>
    %85 = arith.addf %75, %84 : vector<256x32xf32>
    %c7_32 = arith.constant 7 : index
    %c0_33 = arith.constant 0 : index
    %86 = vector.load %arg4[%c7_32, %c0_33] : memref<9x32xf32, #tpu.memory_space<vmem>>, vector<1x32xf32>
    %87 = vector.shape_cast %86 : vector<1x32xf32> to vector<32xf32>
    %c40 = arith.constant 40 : index
    %c0_34 = arith.constant 0 : index
    %88 = vector.load %arg9[%c40, %c0_34] : memref<304x32xf32, #tpu.memory_space<vmem>>, vector<256x32xf32>
    %cst_35 = arith.constant 0.000000e+00 : f32
    %89 = vector.broadcast %cst_35 : f32 to vector<256x32xf32>
    %90 = arith.select %17, %88, %89 : vector<256x32xi1>, vector<256x32xf32>
    %91 = vector.shape_cast %87 : vector<32xf32> to vector<1x32xf32>
    %92 = vector.broadcast %91 : vector<1x32xf32> to vector<256x32xf32>
    %93 = arith.mulf %90, %92 : vector<256x32xf32>
    %94 = arith.addf %85, %93 : vector<256x32xf32>
    %c8_36 = arith.constant 8 : index
    %c0_37 = arith.constant 0 : index
    %95 = vector.load %arg4[%c8_36, %c0_37] : memref<9x32xf32, #tpu.memory_space<vmem>>, vector<1x32xf32>
    %96 = vector.shape_cast %95 : vector<1x32xf32> to vector<32xf32>
    %c41 = arith.constant 41 : index
    %c0_38 = arith.constant 0 : index
    %97 = vector.load %arg9[%c41, %c0_38] : memref<304x32xf32, #tpu.memory_space<vmem>>, vector<256x32xf32>
    %98 = arith.andi %17, %21 : vector<256x32xi1>
    %cst_39 = arith.constant 0.000000e+00 : f32
    %99 = vector.broadcast %cst_39 : f32 to vector<256x32xf32>
    %100 = arith.select %98, %97, %99 : vector<256x32xi1>, vector<256x32xf32>
    %101 = vector.shape_cast %96 : vector<32xf32> to vector<1x32xf32>
    %102 = vector.broadcast %101 : vector<1x32xf32> to vector<256x32xf32>
    %103 = arith.mulf %100, %102 : vector<256x32xf32>
    %104 = arith.addf %94, %103 : vector<256x32xf32>
    %c0_40 = arith.constant 0 : index
    %c0_41 = arith.constant 0 : index
    %105 = vector.load %arg5[%c0_40, %c0_41] : memref<1x32xf32, #tpu.memory_space<vmem>>, vector<1x32xf32>
    %106 = vector.broadcast %105 : vector<1x32xf32> to vector<256x32xf32>
    %107 = arith.addf %104, %106 : vector<256x32xf32>
    %cst_42 = arith.constant 5.000000e-01 : f32
    %108 = vector.broadcast %cst_42 : f32 to vector<256x32xf32>
    %109 = arith.mulf %108, %107 : vector<256x32xf32>
    %cst_43 = arith.constant 0.707106769 : f32
    %110 = vector.broadcast %cst_43 : f32 to vector<256x32xf32>
    %111 = arith.mulf %107, %110 : vector<256x32xf32>
    %112 = math.erf %111 : vector<256x32xf32>
    %cst_44 = arith.constant 1.000000e+00 : f32
    %113 = vector.broadcast %cst_44 : f32 to vector<256x32xf32>
    %114 = arith.addf %113, %112 : vector<256x32xf32>
    %115 = arith.mulf %109, %114 : vector<256x32xf32>
    %c0_45 = arith.constant 0 : index
    %c0_46 = arith.constant 0 : index
    %116 = vector.load %arg6[%c0_45, %c0_46] : memref<32x8xf32, #tpu.memory_space<vmem>>, vector<32x8xf32>
    %cst_47 = arith.constant dense<0.000000e+00> : vector<256x8xf32>
    %117 = tpu.matmul %115, %116, %cst_47 {dimension_numbers = #tpu.dot_dimension_numbers<[1], [0], [0], [1], [0, 0, 1, 1], [], []>} : vector<256x32xf32>, vector<32x8xf32>, vector<256x8xf32> -> vector<256x8xf32>
    %c0_48 = arith.constant 0 : index
    %c0_49 = arith.constant 0 : index
    %118 = vector.load %arg7[%c0_48, %c0_49] : memref<1x8xf32, #tpu.memory_space<vmem>>, vector<1x8xf32>
    %119 = vector.broadcast %118 : vector<1x8xf32> to vector<256x8xf32>
    %120 = arith.addf %117, %119 : vector<256x8xf32>
    %c0_50 = arith.constant 0 : index
    %c0_51 = arith.constant 0 : index
    %c0_52 = arith.constant 0 : index
    %121 = vector.load %arg8[%c0_50, %c0_51, %c0_52] : memref<1x256x8xf32, #tpu.memory_space<vmem>>, vector<1x256x8xf32>
    %122 = vector.shape_cast %121 : vector<1x256x8xf32> to vector<256x8xf32>
    %123 = vector.shape_cast %120 : vector<256x8xf32> to vector<1x256x8xf32>
    tpu.vector_store %arg8[%c0_50, %c0_51, %c0_52], %123 {strides = array<i32>} : memref<1x256x8xf32, #tpu.memory_space<vmem>>, vector<1x256x8xf32>,
    return
  }
  func.func @transform_0(%arg0: i32) -> (i32, i32, i32) {
    %c0_i32 = arith.constant 0 : i32
    %c0_i32_0 = arith.constant 0 : i32
    %c0_i32_1 = arith.constant 0 : i32
    return %arg0, %c0_i32, %c0_i32_0 : i32, i32, i32
  }
  func.func @transform_1(%arg0: i32) -> (i32, i32) {
    %c0_i32 = arith.constant 0 : i32
    %c0_i32_0 = arith.constant 0 : i32
    %c0_i32_1 = arith.constant 0 : i32
    return %c0_i32, %c0_i32_0 : i32, i32
  }
  func.func @transform_2(%arg0: i32) -> (i32, i32) {
    %c0_i32 = arith.constant 0 : i32
    %c0_i32_0 = arith.constant 0 : i32
    %c0_i32_1 = arith.constant 0 : i32
    return %c0_i32, %c0_i32_0 : i32, i32
  }
  func.func @transform_3(%arg0: i32) -> (i32, i32) {
    %c0_i32 = arith.constant 0 : i32
    %c0_i32_0 = arith.constant 0 : i32
    %c0_i32_1 = arith.constant 0 : i32
    return %c0_i32, %c0_i32_0 : i32, i32
  }
  func.func @transform_4(%arg0: i32) -> (i32, i32) {
    %c0_i32 = arith.constant 0 : i32
    %c0_i32_0 = arith.constant 0 : i32
    %c0_i32_1 = arith.constant 0 : i32
    return %c0_i32, %c0_i32_0 : i32, i32
  }
  func.func @transform_5(%arg0: i32) -> (i32, i32) {
    %c0_i32 = arith.constant 0 : i32
    %c0_i32_0 = arith.constant 0 : i32
    %c0_i32_1 = arith.constant 0 : i32
    return %c0_i32, %c0_i32_0 : i32, i32
  }
  func.func @transform_6(%arg0: i32) -> (i32, i32) {
    %c0_i32 = arith.constant 0 : i32
    %c0_i32_0 = arith.constant 0 : i32
    %c0_i32_1 = arith.constant 0 : i32
    return %c0_i32, %c0_i32_0 : i32, i32
  }
  func.func @transform_7(%arg0: i32) -> (i32, i32, i32) {
    %c0_i32 = arith.constant 0 : i32
    %c0_i32_0 = arith.constant 0 : i32
    %c0_i32_1 = arith.constant 0 : i32
    return %arg0, %c0_i32, %c0_i32_0 : i32, i32, i32
  }
}

</mosaic_0001>

<llo_original>
// kernel: tpu_custom_call.1
$region0: #{tpu_custom_call.1}
  #allocation0 [shape = 'u32[]', space=smem, size = 0x4, offset = 0x4, fixed_abs, tag = 'smem constant byte address 0x4 - core index']
  #allocation1 [shape = 'u32[72,128]{1,0:T(1,128)}', space=vmem, size = 0x9000, scoped, tag = 'internal scratch']
  #allocation2 [shape = 'f32[304,32]{1,0:T(8,128)}', space=vmem, size = 0x26000, scoped, tag = 'scratch operand']
  %s0 = inlined_call_operand.vmem [shape: f32[2,256,8], index: 0, kind: input, shape index: {}]
  %s1 = inlined_call_operand.vmem [shape: f32[8,32], index: 1, kind: input, shape index: {}]
  %s2 = inlined_call_operand.vmem [shape: f32[1,32], index: 2, kind: input, shape index: {}]
  %s3 = inlined_call_operand.vmem [shape: f32[9,32], index: 3, kind: input, shape index: {}]
  %s4 = inlined_call_operand.vmem [shape: f32[1,32], index: 4, kind: input, shape index: {}]
  %s5 = inlined_call_operand.vmem [shape: f32[32,8], index: 5, kind: input, shape index: {}]
  %s6 = inlined_call_operand.vmem [shape: f32[1,8], index: 6, kind: input, shape index: {}]
  %s7 = inlined_call_operand.vmem [shape: f32[2,256,8], index: 7, kind: output, shape index: {}]
  %s8 = sld [smem:[#allocation0]]
  $region61: #{tpu_custom_call.1} parent=0
    _
  %s10 = ssub.s32 1, %s8
  %s11 = scalar_select 0, %s10, %s8
  loop: start=0, step=1, limit=4
  $region2: #{tpu_custom_call.1} parent=0 // loop_pre_header
    _
  $region3: #{tpu_custom_call.1} parent=0 // loop_header
    %s13 = sphi 0, %s17
    %p14 = scmp.ge.s32.totalorder %s13, 4
    %s23 = sphi 0, %s25
    %s26 = sphi 0, %s23
    %s27 = sphi 0, %s26
    %s43 = sphi 0, %s27
    %s47 = sphi 0, %s47
    %s49 = sphi 0, %s47
    %s50 = sphi 0, %s49
    %s64 = sphi 0, %s50
    %s68 = sphi 0, %s68
    %s70 = sphi 0, %s68
    %s71 = sphi 0, %s70
    %s85 = sphi 0, %s71
    %s89 = sphi 0, %s89
    %s91 = sphi 0, %s89
    %s92 = sphi 0, %s91
    %s106 = sphi 0, %s92
    %s110 = sphi 0, %s110
    %s112 = sphi 0, %s110
    %s113 = sphi 0, %s112
    %s127 = sphi 0, %s113
    %s131 = sphi 0, %s131
    %s133 = sphi 0, %s131
    %s134 = sphi 0, %s133
    %s148 = sphi 0, %s134
    %s152 = sphi 0, %s152
    %s154 = sphi 0, %s152
    %s155 = sphi 0, %s154
    %s169 = sphi 0, %s155
    %s175 = sphi 0, %s177
    %s178 = sphi 0, %s175
    %s179 = sphi 0, %s178
    %s195 = sphi 0, %s179
  $region4: #{tpu_custom_call.1} parent=0 // loop_header_branch
    %16 = sbr.rel (%p14) target = $region8
  $region5: #{tpu_custom_call.1} parent=0 // loop_body
    %s18 = ssub.s32 %s13, 1
    %s19 = ssub.s32 %s13, 2
    %s20 = sadd.s32 %s13, 1
    %s21 = ssub.s32 %s13, %s20
    %p22 = scmp.eq.s32.totalorder %s21, 0
    %s24 = sadd.s32 %s23, 1
    %s25 = scalar_select %p22, %s23, %s24
    %p28 = pneg %p22
    %p29 = scmp.eq.s32.totalorder %s13, 1
    %p30 = por %p28, %p29
    %p31 = scmp.ne.s32.totalorder %s23, %s26
    %p32 = scmp.eq.s32.totalorder %s13, 0
    %p33 = por %p31, %p32
    %p34 = scmp.ne.s32.totalorder %s23, %s26
    %p35 = scmp.eq.s32.totalorder %s18, 1
    %p36 = por %p34, %p35
    %p37 = scmp.ne.s32.totalorder %s26, %s27
    %p38 = scmp.eq.s32.totalorder %s18, 0
    %p39 = por %p37, %p38
    %p40 = scmp.ne.s32.totalorder %s26, %s27
    %p41 = scmp.eq.s32.totalorder %s19, 1
    %p42 = por %p40, %p41
    %p44 = scmp.ne.s32.totalorder %s27, %s43
    %p45 = scmp.eq.s32.totalorder %s19, 0
    %p46 = por %p44, %p45
    %s48 = sadd.s32 %s47, 1
    %p51 = scmp.eq.s32.totalorder %s13, 1
    %p52 = scmp.ne.s32.totalorder %s47, %s49
    %p53 = scmp.eq.s32.totalorder %s13, 0
    %p54 = por %p52, %p53
    %p55 = scmp.ne.s32.totalorder %s47, %s49
    %p56 = scmp.eq.s32.totalorder %s18, 1
    %p57 = por %p55, %p56
    %p58 = scmp.ne.s32.totalorder %s49, %s50
    %p59 = scmp.eq.s32.totalorder %s18, 0
    %p60 = por %p58, %p59
    %p61 = scmp.ne.s32.totalorder %s49, %s50
    %p62 = scmp.eq.s32.totalorder %s19, 1
    %p63 = por %p61, %p62
    %p65 = scmp.ne.s32.totalorder %s50, %s64
    %p66 = scmp.eq.s32.totalorder %s19, 0
    %p67 = por %p65, %p66
    %s69 = sadd.s32 %s68, 1
    %p72 = scmp.eq.s32.totalorder %s13, 1
    %p73 = scmp.ne.s32.totalorder %s68, %s70
    %p74 = scmp.eq.s32.totalorder %s13, 0
    %p75 = por %p73, %p74
    %p76 = scmp.ne.s32.totalorder %s68, %s70
    %p77 = scmp.eq.s32.totalorder %s18, 1
    %p78 = por %p76, %p77
    %p79 = scmp.ne.s32.totalorder %s70, %s71
    %p80 = scmp.eq.s32.totalorder %s18, 0
    %p81 = por %p79, %p80
    %p82 = scmp.ne.s32.totalorder %s70, %s71
    %p83 = scmp.eq.s32.totalorder %s19, 1
    %p84 = por %p82, %p83
    %p86 = scmp.ne.s32.totalorder %s71, %s85
    %p87 = scmp.eq.s32.totalorder %s19, 0
    %p88 = por %p86, %p87
    %s90 = sadd.s32 %s89, 1
    %p93 = scmp.eq.s32.totalorder %s13, 1
    %p94 = scmp.ne.s32.totalorder %s89, %s91
    %p95 = scmp.eq.s32.totalorder %s13, 0
    %p96 = por %p94, %p95
    %p97 = scmp.ne.s32.totalorder %s89, %s91
    %p98 = scmp.eq.s32.totalorder %s18, 1
    %p99 = por %p97, %p98
    %p100 = scmp.ne.s32.totalorder %s91, %s92
    %p101 = scmp.eq.s32.totalorder %s18, 0
    %p102 = por %p100, %p101
    %p103 = scmp.ne.s32.totalorder %s91, %s92
    %p104 = scmp.eq.s32.totalorder %s19, 1
    %p105 = por %p103, %p104
    %p107 = scmp.ne.s32.totalorder %s92, %s106
    %p108 = scmp.eq.s32.totalorder %s19, 0
    %p109 = por %p107, %p108
    %s111 = sadd.s32 %s110, 1
    %p114 = scmp.eq.s32.totalorder %s13, 1
    %p115 = scmp.ne.s32.totalorder %s110, %s112
    %p116 = scmp.eq.s32.totalorder %s13, 0
    %p117 = por %p115, %p116
    %p118 = scmp.ne.s32.totalorder %s110, %s112
    %p119 = scmp.eq.s32.totalorder %s18, 1
    %p120 = por %p118, %p119
    %p121 = scmp.ne.s32.totalorder %s112, %s113
    %p122 = scmp.eq.s32.totalorder %s18, 0
    %p123 = por %p121, %p122
    %p124 = scmp.ne.s32.totalorder %s112, %s113
    %p125 = scmp.eq.s32.totalorder %s19, 1
    %p126 = por %p124, %p125
    %p128 = scmp.ne.s32.totalorder %s113, %s127
    %p129 = scmp.eq.s32.totalorder %s19, 0
    %p130 = por %p128, %p129
    %s132 = sadd.s32 %s131, 1
    %p135 = scmp.eq.s32.totalorder %s13, 1
    %p136 = scmp.ne.s32.totalorder %s131, %s133
    %p137 = scmp.eq.s32.totalorder %s13, 0
    %p138 = por %p136, %p137
    %p139 = scmp.ne.s32.totalorder %s131, %s133
    %p140 = scmp.eq.s32.totalorder %s18, 1
    %p141 = por %p139, %p140
    %p142 = scmp.ne.s32.totalorder %s133, %s134
    %p143 = scmp.eq.s32.totalorder %s18, 0
    %p144 = por %p142, %p143
    %p145 = scmp.ne.s32.totalorder %s133, %s134
    %p146 = scmp.eq.s32.totalorder %s19, 1
    %p147 = por %p145, %p146
    %p149 = scmp.ne.s32.totalorder %s134, %s148
    %p150 = scmp.eq.s32.totalorder %s19, 0
    %p151 = por %p149, %p150
    %s153 = sadd.s32 %s152, 1
    %p156 = scmp.eq.s32.totalorder %s13, 1
    %p157 = scmp.ne.s32.totalorder %s152, %s154
    %p158 = scmp.eq.s32.totalorder %s13, 0
    %p159 = por %p157, %p158
    %p160 = scmp.ne.s32.totalorder %s152, %s154
    %p161 = scmp.eq.s32.totalorder %s18, 1
    %p162 = por %p160, %p161
    %p163 = scmp.ne.s32.totalorder %s154, %s155
    %p164 = scmp.eq.s32.totalorder %s18, 0
    %p165 = por %p163, %p164
    %p166 = scmp.ne.s32.totalorder %s154, %s155
    %p167 = scmp.eq.s32.totalorder %s19, 1
    %p168 = por %p166, %p167
    %p170 = scmp.ne.s32.totalorder %s155, %s169
    %p171 = scmp.eq.s32.totalorder %s19, 0
    %p172 = por %p170, %p171
    %s173 = ssub.s32 %s13, %s20
    %p174 = scmp.eq.s32.totalorder %s173, 0
    %s176 = sadd.s32 %s175, 1
    %s177 = scalar_select %p174, %s175, %s176
    %p180 = pneg %p174
    %p181 = scmp.eq.s32.totalorder %s13, 1
    %p182 = por %p180, %p181
    %p183 = scmp.ne.s32.totalorder %s175, %s178
    %p184 = scmp.eq.s32.totalorder %s13, 0
    %p185 = por %p183, %p184
    %p186 = scmp.ne.s32.totalorder %s175, %s178
    %p187 = scmp.eq.s32.totalorder %s18, 1
    %p188 = por %p186, %p187
    %p189 = scmp.ne.s32.totalorder %s178, %s179
    %p190 = scmp.eq.s32.totalorder %s18, 0
    %p191 = por %p189, %p190
    %p192 = scmp.ne.s32.totalorder %s178, %s179
    %p193 = scmp.eq.s32.totalorder %s19, 1
    %p194 = por %p192, %p193
    %p196 = scmp.ne.s32.totalorder %s179, %s195
    %p197 = scmp.eq.s32.totalorder %s19, 0
    %p198 = por %p196, %p197
    %p199 = scmp.le.s32.totalorder 1, %s13
    %p200 = scmp.lt.s32.totalorder %s13, 3
    %p201 = pnand %p199, %p200
    %p202 = pneg %p201
    // Predicated region
    $region9: #{tpu_custom_call.1} parent=5 // pred_check
      _
    $region10: #{tpu_custom_call.1} parent=5 // pred_check_branch
      %204 = sbr.rel (%p201) target = $region12
    $region11: #{tpu_custom_call.1} parent=5 // pred_region
      %s205 = ssub.s32 %s13, 1
      // Predicated region
      $region13: #{tpu_custom_call.1} parent=11 // pred_check
        %p206 = pneg %p60
      $region14: #{tpu_custom_call.1} parent=11 // pred_check_branch
        %208 = sbr.rel (%p206) target = $region16
      $region15: #{tpu_custom_call.1} parent=11 // pred_region
        _
      $region16: #{tpu_custom_call.1} parent=11 // pred_fallthru
        _
      // Predicated region
      $region17: #{tpu_custom_call.1} parent=11 // pred_check
        %p209 = pneg %p81
      $region18: #{tpu_custom_call.1} parent=11 // pred_check_branch
        %211 = sbr.rel (%p209) target = $region20
      $region19: #{tpu_custom_call.1} parent=11 // pred_region
        _
      $region20: #{tpu_custom_call.1} parent=11 // pred_fallthru
        _
      // Predicated region
      $region21: #{tpu_custom_call.1} parent=11 // pred_check
        %p212 = pneg %p102
      $region22: #{tpu_custom_call.1} parent=11 // pred_check_branch
        %214 = sbr.rel (%p212) target = $region24
      $region23: #{tpu_custom_call.1} parent=11 // pred_region
        _
      $region24: #{tpu_custom_call.1} parent=11 // pred_fallthru
        _
      // Predicated region
      $region25: #{tpu_custom_call.1} parent=11 // pred_check
        %p215 = pneg %p123
      $region26: #{tpu_custom_call.1} parent=11 // pred_check_branch
        %217 = sbr.rel (%p215) target = $region28
      $region27: #{tpu_custom_call.1} parent=11 // pred_region
        _
      $region28: #{tpu_custom_call.1} parent=11 // pred_fallthru
        _
      // Predicated region
      $region29: #{tpu_custom_call.1} parent=11 // pred_check
        %p218 = pneg %p144
      $region30: #{tpu_custom_call.1} parent=11 // pred_check_branch
        %220 = sbr.rel (%p218) target = $region32
      $region31: #{tpu_custom_call.1} parent=11 // pred_region
        _
      $region32: #{tpu_custom_call.1} parent=11 // pred_fallthru
        _
      // Predicated region
      $region33: #{tpu_custom_call.1} parent=11 // pred_check
        %p221 = pneg %p165
      $region34: #{tpu_custom_call.1} parent=11 // pred_check_branch
        %223 = sbr.rel (%p221) target = $region36
      $region35: #{tpu_custom_call.1} parent=11 // pred_region
        _
      $region36: #{tpu_custom_call.1} parent=11 // pred_fallthru
        _
    $region12: #{tpu_custom_call.1} parent=5 // pred_fallthru
      _
    %p224 = scmp.lt.s32.totalorder %s13, 2
    // Predicated region
    $region37: #{tpu_custom_call.1} parent=5 // pred_check
      %p225 = pneg %p224
    $region38: #{tpu_custom_call.1} parent=5 // pred_check_branch
      %227 = sbr.rel (%p225) target = $region40
    $region39: #{tpu_custom_call.1} parent=5 // pred_region
      // Predicated region
      $region41: #{tpu_custom_call.1} parent=39 // pred_check
        %p228 = pneg %p33
      $region42: #{tpu_custom_call.1} parent=39 // pred_check_branch
        %230 = sbr.rel (%p228) target = $region44
      $region43: #{tpu_custom_call.1} parent=39 // pred_region
        %p231 = scmp.lt.s32.totalorder %s13, 1
        %s232 = scalar_select %p231, %s13, 1
        %s233 = smul.addr %s232, 32
        %s234 = smul.addr %s233, 8
        %s235 = scalar_lea.vmem %s0, %s234
      $region44: #{tpu_custom_call.1} parent=39 // pred_fallthru
        _
    $region40: #{tpu_custom_call.1} parent=5 // pred_fallthru
      _
    %p236 = scmp.le.s32.totalorder 1, %s13
    %p237 = scmp.lt.s32.totalorder %s13, 3
    %p238 = pnand %p236, %p237
    %p239 = pneg %p238
    // Predicated region
    $region45: #{tpu_custom_call.1} parent=5 // pred_check
      _
    $region46: #{tpu_custom_call.1} parent=5 // pred_check_branch
      %241 = sbr.rel (%p238) target = $region48
    $region47: #{tpu_custom_call.1} parent=5 // pred_region
      %s242 = ssub.s32 %s13, 1
      %p243 = scmp.lt.s32.totalorder %s18, 1
      %s244 = scalar_select %p243, %s18, 1
      %s245 = smul.addr %s244, 32
      %s246 = smul.addr %s245, 8
      %s247 = scalar_lea.vmem %s0, %s246
      %p248 = pneg %p39
      %p249 = pneg %p36
      %p250 = pneg %p60
      %p251 = pneg %p57
      %p252 = pneg %p81
      %p253 = pneg %p78
      %p254 = pneg %p102
      %p255 = pneg %p99
      %p256 = pneg %p123
      %p257 = pneg %p120
      %p258 = pneg %p144
      %p259 = pneg %p141
      %p260 = pneg %p165
      %p261 = pneg %p162
      %p262 = pneg %p191
      %p263 = pneg %p188
      %p264 = scmp.lt.s32.totalorder %s18, 1
      %s265 = scalar_select %p264, %s18, 1
      %s266 = smul.addr %s265, 32
      %s267 = smul.addr %s266, 8
      %s268 = scalar_lea.vmem %s7, %s267
      %p269 = scmp.lt.s32.totalorder %s18, 1
      %s270 = scalar_select %p269, %s18, 1
      %s271 = smul.addr %s270, 32
      %s272 = smul.addr %s271, 8
      %s273 = scalar_lea.vmem %s0, %s272
      %p274 = scmp.lt.s32.totalorder %s18, 1
      %s275 = scalar_select %p274, %s18, 1
      %s276 = smul.addr %s275, 32
      %s277 = smul.addr %s276, 8
      %s278 = scalar_lea.vmem %s7, %s277
      %v279 = vld [vmem:[%s273] sm:$0xff]
      %v280 = vld [vmem:[%s273 + $0x8] sm:$0xff]
      %v281 = vld [vmem:[%s273 + $0x10] sm:$0xff]
      %v282 = vld [vmem:[%s273 + $0x18] sm:$0xff]
      %v283 = vld [vmem:[%s273 + $0x20] sm:$0xff]
      %v284 = vld [vmem:[%s273 + $0x28] sm:$0xff]
      %v285 = vld [vmem:[%s273 + $0x30] sm:$0xff]
      %v286 = vld [vmem:[%s273 + $0x38] sm:$0xff]
      %v287 = vld [vmem:[%s273 + $0x40] sm:$0xff]
      %v288 = vld [vmem:[%s273 + $0x48] sm:$0xff]
      %v289 = vld [vmem:[%s273 + $0x50] sm:$0xff]
      %v290 = vld [vmem:[%s273 + $0x58] sm:$0xff]
      %v291 = vld [vmem:[%s273 + $0x60] sm:$0xff]
      %v292 = vld [vmem:[%s273 + $0x68] sm:$0xff]
      %v293 = vld [vmem:[%s273 + $0x70] sm:$0xff]
      %v294 = vld [vmem:[%s273 + $0x78] sm:$0xff]
      %v295 = vld [vmem:[%s273 + $0x80] sm:$0xff]
      %v296 = vld [vmem:[%s273 + $0x88] sm:$0xff]
      %v297 = vld [vmem:[%s273 + $0x90] sm:$0xff]
      %v298 = vld [vmem:[%s273 + $0x98] sm:$0xff]
      %v299 = vld [vmem:[%s273 + $0xa0] sm:$0xff]
      %v300 = vld [vmem:[%s273 + $0xa8] sm:$0xff]
      %v301 = vld [vmem:[%s273 + $0xb0] sm:$0xff]
      %v302 = vld [vmem:[%s273 + $0xb8] sm:$0xff]
      %v303 = vld [vmem:[%s273 + $0xc0] sm:$0xff]
      %v304 = vld [vmem:[%s273 + $0xc8] sm:$0xff]
      %v305 = vld [vmem:[%s273 + $0xd0] sm:$0xff]
      %v306 = vld [vmem:[%s273 + $0xd8] sm:$0xff]
      %v307 = vld [vmem:[%s273 + $0xe0] sm:$0xff]
      %v308 = vld [vmem:[%s273 + $0xe8] sm:$0xff]
      %v309 = vld [vmem:[%s273 + $0xf0] sm:$0xff]
      %v310 = vld [vmem:[%s273 + $0xf8] sm:$0xff]
      %v311 = vld [vmem:[%s1] sm:$0xff]
      %v312 = vld [vmem:[%s2] sm:$0x1]
      %v314 = vperm.slane %v312, 0
      %vm316 = vcmask 64512
      %v318 = vsel %vm316, %v279, 0
      %v321 = vsel %vm316, %v280, 0
      %v324 = vsel %vm316, %v281, 0
      %v327 = vsel %vm316, %v282, 0
      %v330 = vsel %vm316, %v283, 0
      %v333 = vsel %vm316, %v284, 0
      %v336 = vsel %vm316, %v285, 0
      %v339 = vsel %vm316, %v286, 0
      %v342 = vsel %vm316, %v287, 0
      %v345 = vsel %vm316, %v288, 0
      %v348 = vsel %vm316, %v289, 0
      %v351 = vsel %vm316, %v290, 0
      %v354 = vsel %vm316, %v291, 0
      %v357 = vsel %vm316, %v292, 0
      %v360 = vsel %vm316, %v293, 0
      %v363 = vsel %vm316, %v294, 0
      %v366 = vsel %vm316, %v295, 0
      %v369 = vsel %vm316, %v296, 0
      %v372 = vsel %vm316, %v297, 0
      %v375 = vsel %vm316, %v298, 0
      %v378 = vsel %vm316, %v299, 0
      %v381 = vsel %vm316, %v300, 0
      %v384 = vsel %vm316, %v301, 0
      %v387 = vsel %vm316, %v302, 0
      %v390 = vsel %vm316, %v303, 0
      %v393 = vsel %vm316, %v304, 0
      %v396 = vsel %vm316, %v305, 0
      %v399 = vsel %vm316, %v306, 0
      %v402 = vsel %vm316, %v307, 0
      %v405 = vsel %vm316, %v308, 0
      %v408 = vsel %vm316, %v309, 0
      %v411 = vsel %vm316, %v310, 0
      %413 = vmatpush.msra.mxu0 0.0
      %414 = vmatpush.msra.mxu0 0.0
      %415 = vmatpush.msra.mxu0 0.0
      %416 = vmatpush.msra.mxu0 0.0
      %417 = vmatpush.msra.mxu0 0.0
      %418 = vmatpush.msra.mxu0 0.0
      %419 = vmatpush.msra.mxu0 0.0
      %420 = vmatpush.msra.mxu0 0.0
      %421 = vmatpush.msra.mxu0 0.0
      %422 = vmatpush.msra.mxu0 0.0
      %423 = vmatpush.msra.mxu0 0.0
      %424 = vmatpush.msra.mxu0 0.0
      %425 = vmatpush.msra.mxu0 0.0
      %426 = vmatpush.msra.mxu0 0.0
      %427 = vmatpush.msra.mxu0 0.0
      %428 = vmatpush.msra.mxu0 %v311
      %429 = vmatmul.f32.gmra.mxu0 %v318
      %v430 = vpop.f32.mrf.mxu0
      %v431 = vadd.f32 %v314, %v430
      %432 = vmatmul.f32.gmra.mxu0 %v321
      %v433 = vpop.f32.mrf.mxu0
      %v434 = vadd.f32 %v314, %v433
      %435 = vmatmul.f32.gmra.mxu0 %v324
      %v436 = vpop.f32.mrf.mxu0
      %v437 = vadd.f32 %v314, %v436
      %438 = vmatmul.f32.gmra.mxu0 %v327
      %v439 = vpop.f32.mrf.mxu0
      %v440 = vadd.f32 %v314, %v439
      %441 = vmatmul.f32.gmra.mxu0 %v330
      %v442 = vpop.f32.mrf.mxu0
      %v443 = vadd.f32 %v314, %v442
      %444 = vmatmul.f32.gmra.mxu0 %v333
      %v445 = vpop.f32.mrf.mxu0
      %v446 = vadd.f32 %v314, %v445
      %447 = vmatmul.f32.gmra.mxu0 %v336
      %v448 = vpop.f32.mrf.mxu0
      %v449 = vadd.f32 %v314, %v448
      %450 = vmatmul.f32.gmra.mxu0 %v339
      %v451 = vpop.f32.mrf.mxu0
      %v452 = vadd.f32 %v314, %v451
      %453 = vmatmul.f32.gmra.mxu0 %v342
      %v454 = vpop.f32.mrf.mxu0
      %v455 = vadd.f32 %v314, %v454
      %456 = vmatmul.f32.gmra.mxu0 %v345
      %v457 = vpop.f32.mrf.mxu0
      %v458 = vadd.f32 %v314, %v457
      %459 = vmatmul.f32.gmra.mxu0 %v348
      %v460 = vpop.f32.mrf.mxu0
      %v461 = vadd.f32 %v314, %v460
      %462 = vmatmul.f32.gmra.mxu0 %v351
      %v463 = vpop.f32.mrf.mxu0
      %v464 = vadd.f32 %v314, %v463
      %465 = vmatmul.f32.gmra.mxu0 %v354
      %v466 = vpop.f32.mrf.mxu0
      %v467 = vadd.f32 %v314, %v466
      %468 = vmatmul.f32.gmra.mxu0 %v357
      %v469 = vpop.f32.mrf.mxu0
      %v470 = vadd.f32 %v314, %v469
      %471 = vmatmul.f32.gmra.mxu0 %v360
      %v472 = vpop.f32.mrf.mxu0
      %v473 = vadd.f32 %v314, %v472
      %474 = vmatmul.f32.gmra.mxu0 %v363
      %v475 = vpop.f32.mrf.mxu0
      %v476 = vadd.f32 %v314, %v475
      %477 = vmatmul.f32.gmra.mxu0 %v366
      %v478 = vpop.f32.mrf.mxu0
      %v479 = vadd.f32 %v314, %v478
      %480 = vmatmul.f32.gmra.mxu0 %v369
      %v481 = vpop.f32.mrf.mxu0
      %v482 = vadd.f32 %v314, %v481
      %483 = vmatmul.f32.gmra.mxu0 %v372
      %v484 = vpop.f32.mrf.mxu0
      %v485 = vadd.f32 %v314, %v484
      %486 = vmatmul.f32.gmra.mxu0 %v375
      %v487 = vpop.f32.mrf.mxu0
      %v488 = vadd.f32 %v314, %v487
      %489 = vmatmul.f32.gmra.mxu0 %v378
      %v490 = vpop.f32.mrf.mxu0
      %v491 = vadd.f32 %v314, %v490
      %492 = vmatmul.f32.gmra.mxu0 %v381
      %v493 = vpop.f32.mrf.mxu0
      %v494 = vadd.f32 %v314, %v493
      %495 = vmatmul.f32.gmra.mxu0 %v384
      %v496 = vpop.f32.mrf.mxu0
      %v497 = vadd.f32 %v314, %v496
      %498 = vmatmul.f32.gmra.mxu0 %v387
      %v499 = vpop.f32.mrf.mxu0
      %v500 = vadd.f32 %v314, %v499
      %501 = vmatmul.f32.gmra.mxu0 %v390
      %v502 = vpop.f32.mrf.mxu0
      %v503 = vadd.f32 %v314, %v502
      %504 = vmatmul.f32.gmra.mxu0 %v393
      %v505 = vpop.f32.mrf.mxu0
      %v506 = vadd.f32 %v314, %v505
      %507 = vmatmul.f32.gmra.mxu0 %v396
      %v508 = vpop.f32.mrf.mxu0
      %v509 = vadd.f32 %v314, %v508
      %510 = vmatmul.f32.gmra.mxu0 %v399
      %v511 = vpop.f32.mrf.mxu0
      %v512 = vadd.f32 %v314, %v511
      %513 = vmatmul.f32.gmra.mxu0 %v402
      %v514 = vpop.f32.mrf.mxu0
      %v515 = vadd.f32 %v314, %v514
      %516 = vmatmul.f32.gmra.mxu0 %v405
      %v517 = vpop.f32.mrf.mxu0
      %v518 = vadd.f32 %v314, %v517
      %519 = vmatmul.f32.gmra.mxu0 %v408
      %v520 = vpop.f32.mrf.mxu0
      %v521 = vadd.f32 %v314, %v520
      %522 = vmatmul.f32.gmra.mxu0 %v411
      %v523 = vpop.f32.mrf.mxu0
      %v524 = vadd.f32 %v314, %v523
      %525 = vdwg.mxu0
      %vm526 = vcmask 261120
      %527 = vst.msk [vmem:[#allocation2 + $0x18] sm:$0xff] %vm526, %v431
      %528 = vst.msk [vmem:[#allocation2 + $0x20] sm:$0xff] %vm526, %v434
      %529 = vst.msk [vmem:[#allocation2 + $0x28] sm:$0xff] %vm526, %v437
      %530 = vst.msk [vmem:[#allocation2 + $0x30] sm:$0xff] %vm526, %v440
      %531 = vst.msk [vmem:[#allocation2 + $0x38] sm:$0xff] %vm526, %v443
      %532 = vst.msk [vmem:[#allocation2 + $0x40] sm:$0xff] %vm526, %v446
      %533 = vst.msk [vmem:[#allocation2 + $0x48] sm:$0xff] %vm526, %v449
      %534 = vst.msk [vmem:[#allocation2 + $0x50] sm:$0xff] %vm526, %v452
      %535 = vst.msk [vmem:[#allocation2 + $0x58] sm:$0xff] %vm526, %v455
      %536 = vst.msk [vmem:[#allocation2 + $0x60] sm:$0xff] %vm526, %v458
      %537 = vst.msk [vmem:[#allocation2 + $0x68] sm:$0xff] %vm526, %v461
      %538 = vst.msk [vmem:[#allocation2 + $0x70] sm:$0xff] %vm526, %v464
      %539 = vst.msk [vmem:[#allocation2 + $0x78] sm:$0xff] %vm526, %v467
      %540 = vst.msk [vmem:[#allocation2 + $0x80] sm:$0xff] %vm526, %v470
      %541 = vst.msk [vmem:[#allocation2 + $0x88] sm:$0xff] %vm526, %v473
      %542 = vst.msk [vmem:[#allocation2 + $0x90] sm:$0xff] %vm526, %v476
      %543 = vst.msk [vmem:[#allocation2 + $0x98] sm:$0xff] %vm526, %v479
      %544 = vst.msk [vmem:[#allocation2 + $0xa0] sm:$0xff] %vm526, %v482
      %545 = vst.msk [vmem:[#allocation2 + $0xa8] sm:$0xff] %vm526, %v485
      %546 = vst.msk [vmem:[#allocation2 + $0xb0] sm:$0xff] %vm526, %v488
      %547 = vst.msk [vmem:[#allocation2 + $0xb8] sm:$0xff] %vm526, %v491
      %548 = vst.msk [vmem:[#allocation2 + $0xc0] sm:$0xff] %vm526, %v494
      %549 = vst.msk [vmem:[#allocation2 + $0xc8] sm:$0xff] %vm526, %v497
      %550 = vst.msk [vmem:[#allocation2 + $0xd0] sm:$0xff] %vm526, %v500
      %551 = vst.msk [vmem:[#allocation2 + $0xd8] sm:$0xff] %vm526, %v503
      %552 = vst.msk [vmem:[#allocation2 + $0xe0] sm:$0xff] %vm526, %v506
      %553 = vst.msk [vmem:[#allocation2 + $0xe8] sm:$0xff] %vm526, %v509
      %554 = vst.msk [vmem:[#allocation2 + $0xf0] sm:$0xff] %vm526, %v512
      %555 = vst.msk [vmem:[#allocation2 + $0xf8] sm:$0xff] %vm526, %v515
      %556 = vst.msk [vmem:[#allocation2 + $0x100] sm:$0xff] %vm526, %v518
      %557 = vst.msk [vmem:[#allocation2 + $0x108] sm:$0xff] %vm526, %v521
      %558 = vst.msk [vmem:[#allocation2 + $0x110] sm:$0xff] %vm526, %v524
      %559 = vst.msk [vmem:[#allocation2] sm:$0xff] %vm526, 0.0
      %560 = vst.msk [vmem:[#allocation2 + $0x8] sm:$0xff] %vm526, 0.0
      %561 = vst.msk [vmem:[#allocation2 + $0x10] sm:$0xff] %vm526, 0.0
      %562 = vst.msk [vmem:[#allocation2 + $0x118] sm:$0xff] %vm526, 0.0
      %563 = vst.msk [vmem:[#allocation2 + $0x120] sm:$0xff] %vm526, 0.0
      %564 = vst.msk [vmem:[#allocation2 + $0x128] sm:$0xff] %vm526, 0.0
      %v565 = vlaneseq
      %v566 = vshrl.u32 %v565, 7
      %v567 = vadd.s32 %v566, 8
      %v568 = vadd.s32 %v566, 16
      %v569 = vadd.s32 %v566, 24
      %v570 = vadd.s32 %v566, 32
      %v571 = vadd.s32 %v566, 40
      %v572 = vadd.s32 %v566, 48
      %v573 = vadd.s32 %v566, 56
      %v574 = vadd.s32 %v566, 64
      %v575 = vadd.s32 %v566, 72
      %v576 = vadd.s32 %v566, 80
      %v577 = vadd.s32 %v566, 88
      %v578 = vadd.s32 %v566, 96
      %v579 = vadd.s32 %v566, 104
      %v580 = vadd.s32 %v566, 112
      %v581 = vadd.s32 %v566, 120
      %v582 = vadd.s32 %v566, 128
      %v583 = vadd.s32 %v566, 136
      %v584 = vadd.s32 %v566, 144
      %v585 = vadd.s32 %v566, 152
      %v586 = vadd.s32 %v566, 160
      %v587 = vadd.s32 %v566, 168
      %v588 = vadd.s32 %v566, 176
      %v589 = vadd.s32 %v566, 184
      %v590 = vadd.s32 %v566, 192
      %v591 = vadd.s32 %v566, 200
      %v592 = vadd.s32 %v566, 208
      %v593 = vadd.s32 %v566, 216
      %v594 = vadd.s32 %v566, 224
      %v595 = vadd.s32 %v566, 232
      %v596 = vadd.s32 %v566, 240
      %v597 = vadd.s32 %v566, 248
      %v598 = vand.u32 %v566, 15
      %v599 = vand.u32 %v567, 15
      %v600 = vand.u32 %v568, 15
      %v601 = vand.u32 %v569, 15
      %v602 = vand.u32 %v570, 15
      %v603 = vand.u32 %v571, 15
      %v604 = vand.u32 %v572, 15
      %v605 = vand.u32 %v573, 15
      %v606 = vand.u32 %v574, 15
      %v607 = vand.u32 %v575, 15
      %v608 = vand.u32 %v576, 15
      %v609 = vand.u32 %v577, 15
      %v610 = vand.u32 %v578, 15
      %v611 = vand.u32 %v579, 15
      %v612 = vand.u32 %v580, 15
      %v613 = vand.u32 %v581, 15
      %v614 = vand.u32 %v582, 15
      %v615 = vand.u32 %v583, 15
      %v616 = vand.u32 %v584, 15
      %v617 = vand.u32 %v585, 15
      %v618 = vand.u32 %v586, 15
      %v619 = vand.u32 %v587, 15
      %v620 = vand.u32 %v588, 15
      %v621 = vand.u32 %v589, 15
      %v622 = vand.u32 %v590, 15
      %v623 = vand.u32 %v591, 15
      %v624 = vand.u32 %v592, 15
      %v625 = vand.u32 %v593, 15
      %v626 = vand.u32 %v594, 15
      %v627 = vand.u32 %v595, 15
      %v628 = vand.u32 %v596, 15
      %v629 = vand.u32 %v597, 15
      %vm630 = vcmp.ge.s32.totalorder %v566, 16
      %vm631 = vcmp.ge.s32.totalorder %v567, 16
      %vm632 = vcmp.ge.s32.totalorder %v568, 16
      %vm633 = vcmp.ge.s32.totalorder %v569, 16
      %vm634 = vcmp.ge.s32.totalorder %v570, 16
      %vm635 = vcmp.ge.s32.totalorder %v571, 16
      %vm636 = vcmp.ge.s32.totalorder %v572, 16
      %vm637 = vcmp.ge.s32.totalorder %v573, 16
      %vm638 = vcmp.ge.s32.totalorder %v574, 16
      %vm639 = vcmp.ge.s32.totalorder %v575, 16
      %vm640 = vcmp.ge.s32.totalorder %v576, 16
      %vm641 = vcmp.ge.s32.totalorder %v577, 16
      %vm642 = vcmp.ge.s32.totalorder %v578, 16
      %vm643 = vcmp.ge.s32.totalorder %v579, 16
      %vm644 = vcmp.ge.s32.totalorder %v580, 16
      %vm645 = vcmp.ge.s32.totalorder %v581, 16
      %vm646 = vcmp.ge.s32.totalorder %v582, 16
      %vm647 = vcmp.ge.s32.totalorder %v583, 16
      %vm648 = vcmp.ge.s32.totalorder %v584, 16
      %vm649 = vcmp.ge.s32.totalorder %v585, 16
      %vm650 = vcmp.ge.s32.totalorder %v586, 16
      %vm651 = vcmp.ge.s32.totalorder %v587, 16
      %vm652 = vcmp.ge.s32.totalorder %v588, 16
      %vm653 = vcmp.ge.s32.totalorder %v589, 16
      %vm654 = vcmp.ge.s32.totalorder %v590, 16
      %vm655 = vcmp.ge.s32.totalorder %v591, 16
      %vm656 = vcmp.ge.s32.totalorder %v592, 16
      %vm657 = vcmp.ge.s32.totalorder %v593, 16
      %vm658 = vcmp.ge.s32.totalorder %v594, 16
      %vm659 = vcmp.ge.s32.totalorder %v595, 16
      %vm660 = vcmp.ge.s32.totalorder %v596, 16
      %vm661 = vcmp.ge.s32.totalorder %v597, 16
      %vm662 = vcmp.lt.s32.totalorder %v566, 240
      %vm663 = vcmp.lt.s32.totalorder %v567, 240
      %vm664 = vcmp.lt.s32.totalorder %v568, 240
      %vm665 = vcmp.lt.s32.totalorder %v569, 240
      %vm666 = vcmp.lt.s32.totalorder %v570, 240
      %vm667 = vcmp.lt.s32.totalorder %v571, 240
      %vm668 = vcmp.lt.s32.totalorder %v572, 240
      %vm669 = vcmp.lt.s32.totalorder %v573, 240
      %vm670 = vcmp.lt.s32.totalorder %v574, 240
      %vm671 = vcmp.lt.s32.totalorder %v575, 240
      %vm672 = vcmp.lt.s32.totalorder %v576, 240
      %vm673 = vcmp.lt.s32.totalorder %v577, 240
      %vm674 = vcmp.lt.s32.totalorder %v578, 240
      %vm675 = vcmp.lt.s32.totalorder %v579, 240
      %vm676 = vcmp.lt.s32.totalorder %v580, 240
      %vm677 = vcmp.lt.s32.totalorder %v581, 240
      %vm678 = vcmp.lt.s32.totalorder %v582, 240
      %vm679 = vcmp.lt.s32.totalorder %v583, 240
      %vm680 = vcmp.lt.s32.totalorder %v584, 240
      %vm681 = vcmp.lt.s32.totalorder %v585, 240
      %vm682 = vcmp.lt.s32.totalorder %v586, 240
      %vm683 = vcmp.lt.s32.totalorder %v587, 240
      %vm684 = vcmp.lt.s32.totalorder %v588, 240
      %vm685 = vcmp.lt.s32.totalorder %v589, 240
      %vm686 = vcmp.lt.s32.totalorder %v590, 240
      %vm687 = vcmp.lt.s32.totalorder %v591, 240
      %vm688 = vcmp.lt.s32.totalorder %v592, 240
      %vm689 = vcmp.lt.s32.totalorder %v593, 240
      %vm690 = vcmp.lt.s32.totalorder %v594, 240
      %vm691 = vcmp.lt.s32.totalorder %v595, 240
      %vm692 = vcmp.lt.s32.totalorder %v596, 240
      %vm693 = vcmp.lt.s32.totalorder %v597, 240
      %vm694 = vcmp.ge.s32.totalorder %v598, 1
      %vm695 = vcmp.ge.s32.totalorder %v599, 1
      %vm696 = vcmp.ge.s32.totalorder %v600, 1
      %vm697 = vcmp.ge.s32.totalorder %v601, 1
      %vm698 = vcmp.ge.s32.totalorder %v602, 1
      %vm699 = vcmp.ge.s32.totalorder %v603, 1
      %vm700 = vcmp.ge.s32.totalorder %v604, 1
      %vm701 = vcmp.ge.s32.totalorder %v605, 1
      %vm702 = vcmp.ge.s32.totalorder %v606, 1
      %vm703 = vcmp.ge.s32.totalorder %v607, 1
      %vm704 = vcmp.ge.s32.totalorder %v608, 1
      %vm705 = vcmp.ge.s32.totalorder %v609, 1
      %vm706 = vcmp.ge.s32.totalorder %v610, 1
      %vm707 = vcmp.ge.s32.totalorder %v611, 1
      %vm708 = vcmp.ge.s32.totalorder %v612, 1
      %vm709 = vcmp.ge.s32.totalorder %v613, 1
      %vm710 = vcmp.ge.s32.totalorder %v614, 1
      %vm711 = vcmp.ge.s32.totalorder %v615, 1
      %vm712 = vcmp.ge.s32.totalorder %v616, 1
      %vm713 = vcmp.ge.s32.totalorder %v617, 1
      %vm714 = vcmp.ge.s32.totalorder %v618, 1
      %vm715 = vcmp.ge.s32.totalorder %v619, 1
      %vm716 = vcmp.ge.s32.totalorder %v620, 1
      %vm717 = vcmp.ge.s32.totalorder %v621, 1
      %vm718 = vcmp.ge.s32.totalorder %v622, 1
      %vm719 = vcmp.ge.s32.totalorder %v623, 1
      %vm720 = vcmp.ge.s32.totalorder %v624, 1
      %vm721 = vcmp.ge.s32.totalorder %v625, 1
      %vm722 = vcmp.ge.s32.totalorder %v626, 1
      %vm723 = vcmp.ge.s32.totalorder %v627, 1
      %vm724 = vcmp.ge.s32.totalorder %v628, 1
      %vm725 = vcmp.ge.s32.totalorder %v629, 1
      %vm726 = vcmp.le.s32.totalorder %v598, 14
      %vm727 = vcmp.le.s32.totalorder %v599, 14
      %vm728 = vcmp.le.s32.totalorder %v600, 14
      %vm729 = vcmp.le.s32.totalorder %v601, 14
      %vm730 = vcmp.le.s32.totalorder %v602, 14
      %vm731 = vcmp.le.s32.totalorder %v603, 14
      %vm732 = vcmp.le.s32.totalorder %v604, 14
      %vm733 = vcmp.le.s32.totalorder %v605, 14
      %vm734 = vcmp.le.s32.totalorder %v606, 14
      %vm735 = vcmp.le.s32.totalorder %v607, 14
      %vm736 = vcmp.le.s32.totalorder %v608, 14
      %vm737 = vcmp.le.s32.totalorder %v609, 14
      %vm738 = vcmp.le.s32.totalorder %v610, 14
      %vm739 = vcmp.le.s32.totalorder %v611, 14
      %vm740 = vcmp.le.s32.totalorder %v612, 14
      %vm741 = vcmp.le.s32.totalorder %v613, 14
      %vm742 = vcmp.le.s32.totalorder %v614, 14
      %vm743 = vcmp.le.s32.totalorder %v615, 14
      %vm744 = vcmp.le.s32.totalorder %v616, 14
      %vm745 = vcmp.le.s32.totalorder %v617, 14
      %vm746 = vcmp.le.s32.totalorder %v618, 14
      %vm747 = vcmp.le.s32.totalorder %v619, 14
      %vm748 = vcmp.le.s32.totalorder %v620, 14
      %vm749 = vcmp.le.s32.totalorder %v621, 14
      %vm750 = vcmp.le.s32.totalorder %v622, 14
      %vm751 = vcmp.le.s32.totalorder %v623, 14
      %vm752 = vcmp.le.s32.totalorder %v624, 14
      %vm753 = vcmp.le.s32.totalorder %v625, 14
      %vm754 = vcmp.le.s32.totalorder %v626, 14
      %vm755 = vcmp.le.s32.totalorder %v627, 14
      %vm756 = vcmp.le.s32.totalorder %v628, 14
      %vm757 = vcmp.le.s32.totalorder %v629, 14
      %v758 = vld [vmem:[%s3] sm:$0x1]
      %v759 = vld [vmem:[#allocation2 + $0x7] sm:$0xff]
      %v760 = vld [vmem:[#allocation2 + $0xf] sm:$0xff]
      %v761 = vld [vmem:[#allocation2 + $0x17] sm:$0xff]
      %v762 = vld [vmem:[#allocation2 + $0x1f] sm:$0xff]
      %v763 = vld [vmem:[#allocation2 + $0x27] sm:$0xff]
      %v764 = vld [vmem:[#allocation2 + $0x2f] sm:$0xff]
      %v765 = vld [vmem:[#allocation2 + $0x37] sm:$0xff]
      %v766 = vld [vmem:[#allocation2 + $0x3f] sm:$0xff]
      %v767 = vld [vmem:[#allocation2 + $0x47] sm:$0xff]
      %v768 = vld [vmem:[#allocation2 + $0x4f] sm:$0xff]
      %v769 = vld [vmem:[#allocation2 + $0x57] sm:$0xff]
      %v770 = vld [vmem:[#allocation2 + $0x5f] sm:$0xff]
      %v771 = vld [vmem:[#allocation2 + $0x67] sm:$0xff]
      %v772 = vld [vmem:[#allocation2 + $0x6f] sm:$0xff]
      %v773 = vld [vmem:[#allocation2 + $0x77] sm:$0xff]
      %v774 = vld [vmem:[#allocation2 + $0x7f] sm:$0xff]
      %v775 = vld [vmem:[#allocation2 + $0x87] sm:$0xff]
      %v776 = vld [vmem:[#allocation2 + $0x8f] sm:$0xff]
      %v777 = vld [vmem:[#allocation2 + $0x97] sm:$0xff]
      %v778 = vld [vmem:[#allocation2 + $0x9f] sm:$0xff]
      %v779 = vld [vmem:[#allocation2 + $0xa7] sm:$0xff]
      %v780 = vld [vmem:[#allocation2 + $0xaf] sm:$0xff]
      %v781 = vld [vmem:[#allocation2 + $0xb7] sm:$0xff]
      %v782 = vld [vmem:[#allocation2 + $0xbf] sm:$0xff]
      %v783 = vld [vmem:[#allocation2 + $0xc7] sm:$0xff]
      %v784 = vld [vmem:[#allocation2 + $0xcf] sm:$0xff]
      %v785 = vld [vmem:[#allocation2 + $0xd7] sm:$0xff]
      %v786 = vld [vmem:[#allocation2 + $0xdf] sm:$0xff]
      %v787 = vld [vmem:[#allocation2 + $0xe7] sm:$0xff]
      %v788 = vld [vmem:[#allocation2 + $0xef] sm:$0xff]
      %v789 = vld [vmem:[#allocation2 + $0xf7] sm:$0xff]
      %v790 = vld [vmem:[#allocation2 + $0xff] sm:$0xff]
      %vm791 = vmand %vm630, %vm694
      %vm792 = vmand %vm631, %vm695
      %vm793 = vmand %vm632, %vm696
      %vm794 = vmand %vm633, %vm697
      %vm795 = vmand %vm634, %vm698
      %vm796 = vmand %vm635, %vm699
      %vm797 = vmand %vm636, %vm700
      %vm798 = vmand %vm637, %vm701
      %vm799 = vmand %vm638, %vm702
      %vm800 = vmand %vm639, %vm703
      %vm801 = vmand %vm640, %vm704
      %vm802 = vmand %vm641, %vm705
      %vm803 = vmand %vm642, %vm706
      %vm804 = vmand %vm643, %vm707
      %vm805 = vmand %vm644, %vm708
      %vm806 = vmand %vm645, %vm709
      %vm807 = vmand %vm646, %vm710
      %vm808 = vmand %vm647, %vm711
      %vm809 = vmand %vm648, %vm712
      %vm810 = vmand %vm649, %vm713
      %vm811 = vmand %vm650, %vm714
      %vm812 = vmand %vm651, %vm715
      %vm813 = vmand %vm652, %vm716
      %vm814 = vmand %vm653, %vm717
      %vm815 = vmand %vm654, %vm718
      %vm816 = vmand %vm655, %vm719
      %vm817 = vmand %vm656, %vm720
      %vm818 = vmand %vm657, %vm721
      %vm819 = vmand %vm658, %vm722
      %vm820 = vmand %vm659, %vm723
      %vm821 = vmand %vm660, %vm724
      %vm822 = vmand %vm661, %vm725
      %v823 = vsel %vm791, %v759, 0.0
      %v824 = vsel %vm792, %v760, 0.0
      %v825 = vsel %vm793, %v761, 0.0
      %v826 = vsel %vm794, %v762, 0.0
      %v827 = vsel %vm795, %v763, 0.0
      %v828 = vsel %vm796, %v764, 0.0
      %v829 = vsel %vm797, %v765, 0.0
      %v830 = vsel %vm798, %v766, 0.0
      %v831 = vsel %vm799, %v767, 0.0
      %v832 = vsel %vm800, %v768, 0.0
      %v833 = vsel %vm801, %v769, 0.0
      %v834 = vsel %vm802, %v770, 0.0
      %v835 = vsel %vm803, %v771, 0.0
      %v836 = vsel %vm804, %v772, 0.0
      %v837 = vsel %vm805, %v773, 0.0
      %v838 = vsel %vm806, %v774, 0.0
      %v839 = vsel %vm807, %v775, 0.0
      %v840 = vsel %vm808, %v776, 0.0
      %v841 = vsel %vm809, %v777, 0.0
      %v842 = vsel %vm810, %v778, 0.0
      %v843 = vsel %vm811, %v779, 0.0
      %v844 = vsel %vm812, %v780, 0.0
      %v845 = vsel %vm813, %v781, 0.0
      %v846 = vsel %vm814, %v782, 0.0
      %v847 = vsel %vm815, %v783, 0.0
      %v848 = vsel %vm816, %v784, 0.0
      %v849 = vsel %vm817, %v785, 0.0
      %v850 = vsel %vm818, %v786, 0.0
      %v851 = vsel %vm819, %v787, 0.0
      %v852 = vsel %vm820, %v788, 0.0
      %v853 = vsel %vm821, %v789, 0.0
      %v854 = vsel %vm822, %v790, 0.0
      %v855 = vperm.slane %v758, 0
      %v856 = vmul.f32 %v823, %v855
      %v857 = vmul.f32 %v824, %v855
      %v858 = vmul.f32 %v825, %v855
      %v859 = vmul.f32 %v826, %v855
      %v860 = vmul.f32 %v827, %v855
      %v861 = vmul.f32 %v828, %v855
      %v862 = vmul.f32 %v829, %v855
      %v863 = vmul.f32 %v830, %v855
      %v864 = vmul.f32 %v831, %v855
      %v865 = vmul.f32 %v832, %v855
      %v866 = vmul.f32 %v833, %v855
      %v867 = vmul.f32 %v834, %v855
      %v868 = vmul.f32 %v835, %v855
      %v869 = vmul.f32 %v836, %v855
      %v870 = vmul.f32 %v837, %v855
      %v871 = vmul.f32 %v838, %v855
      %v872 = vmul.f32 %v839, %v855
      %v873 = vmul.f32 %v840, %v855
      %v874 = vmul.f32 %v841, %v855
      %v875 = vmul.f32 %v842, %v855
      %v876 = vmul.f32 %v843, %v855
      %v877 = vmul.f32 %v844, %v855
      %v878 = vmul.f32 %v845, %v855
      %v879 = vmul.f32 %v846, %v855
      %v880 = vmul.f32 %v847, %v855
      %v881 = vmul.f32 %v848, %v855
      %v882 = vmul.f32 %v849, %v855
      %v883 = vmul.f32 %v850, %v855
      %v884 = vmul.f32 %v851, %v855
      %v885 = vmul.f32 %v852, %v855
      %v886 = vmul.f32 %v853, %v855
      %v887 = vmul.f32 %v854, %v855
      %v888 = vadd.f32 %v856, 0.0
      %v889 = vadd.f32 %v857, 0.0
      %v890 = vadd.f32 %v858, 0.0
      %v891 = vadd.f32 %v859, 0.0
      %v892 = vadd.f32 %v860, 0.0
      %v893 = vadd.f32 %v861, 0.0
      %v894 = vadd.f32 %v862, 0.0
      %v895 = vadd.f32 %v863, 0.0
      %v896 = vadd.f32 %v864, 0.0
      %v897 = vadd.f32 %v865, 0.0
      %v898 = vadd.f32 %v866, 0.0
      %v899 = vadd.f32 %v867, 0.0
      %v900 = vadd.f32 %v868, 0.0
      %v901 = vadd.f32 %v869, 0.0
      %v902 = vadd.f32 %v870, 0.0
      %v903 = vadd.f32 %v871, 0.0
      %v904 = vadd.f32 %v872, 0.0
      %v905 = vadd.f32 %v873, 0.0
      %v906 = vadd.f32 %v874, 0.0
      %v907 = vadd.f32 %v875, 0.0
      %v908 = vadd.f32 %v876, 0.0
      %v909 = vadd.f32 %v877, 0.0
      %v910 = vadd.f32 %v878, 0.0
      %v911 = vadd.f32 %v879, 0.0
      %v912 = vadd.f32 %v880, 0.0
      %v913 = vadd.f32 %v881, 0.0
      %v914 = vadd.f32 %v882, 0.0
      %v915 = vadd.f32 %v883, 0.0
      %v916 = vadd.f32 %v884, 0.0
      %v917 = vadd.f32 %v885, 0.0
      %v918 = vadd.f32 %v886, 0.0
      %v919 = vadd.f32 %v887, 0.0
      %v920 = vld [vmem:[%s3 + $0x1] sm:$0x1]
      %v921 = vld [vmem:[#allocation2 + $0x8] sm:$0xff]
      %v922 = vld [vmem:[#allocation2 + $0x10] sm:$0xff]
      %v923 = vld [vmem:[#allocation2 + $0x18] sm:$0xff]
      %v924 = vld [vmem:[#allocation2 + $0x20] sm:$0xff]
      %v925 = vld [vmem:[#allocation2 + $0x28] sm:$0xff]
      %v926 = vld [vmem:[#allocation2 + $0x30] sm:$0xff]
      %v927 = vld [vmem:[#allocation2 + $0x38] sm:$0xff]
      %v928 = vld [vmem:[#allocation2 + $0x40] sm:$0xff]
      %v929 = vld [vmem:[#allocation2 + $0x48] sm:$0xff]
      %v930 = vld [vmem:[#allocation2 + $0x50] sm:$0xff]
      %v931 = vld [vmem:[#allocation2 + $0x58] sm:$0xff]
      %v932 = vld [vmem:[#allocation2 + $0x60] sm:$0xff]
      %v933 = vld [vmem:[#allocation2 + $0x68] sm:$0xff]
      %v934 = vld [vmem:[#allocation2 + $0x70] sm:$0xff]
      %v935 = vld [vmem:[#allocation2 + $0x78] sm:$0xff]
      %v936 = vld [vmem:[#allocation2 + $0x80] sm:$0xff]
      %v937 = vld [vmem:[#allocation2 + $0x88] sm:$0xff]
      %v938 = vld [vmem:[#allocation2 + $0x90] sm:$0xff]
      %v939 = vld [vmem:[#allocation2 + $0x98] sm:$0xff]
      %v940 = vld [vmem:[#allocation2 + $0xa0] sm:$0xff]
      %v941 = vld [vmem:[#allocation2 + $0xa8] sm:$0xff]
      %v942 = vld [vmem:[#allocation2 + $0xb0] sm:$0xff]
      %v943 = vld [vmem:[#allocation2 + $0xb8] sm:$0xff]
      %v944 = vld [vmem:[#allocation2 + $0xc0] sm:$0xff]
      %v945 = vld [vmem:[#allocation2 + $0xc8] sm:$0xff]
      %v946 = vld [vmem:[#allocation2 + $0xd0] sm:$0xff]
      %v947 = vld [vmem:[#allocation2 + $0xd8] sm:$0xff]
      %v948 = vld [vmem:[#allocation2 + $0xe0] sm:$0xff]
      %v949 = vld [vmem:[#allocation2 + $0xe8] sm:$0xff]
      %v950 = vld [vmem:[#allocation2 + $0xf0] sm:$0xff]
      %v951 = vld [vmem:[#allocation2 + $0xf8] sm:$0xff]
      %v952 = vld [vmem:[#allocation2 + $0x100] sm:$0xff]
      %v953 = vsel %vm630, %v921, 0.0
      %v954 = vsel %vm631, %v922, 0.0
      %v955 = vsel %vm632, %v923, 0.0
      %v956 = vsel %vm633, %v924, 0.0
      %v957 = vsel %vm634, %v925, 0.0
      %v958 = vsel %vm635, %v926, 0.0
      %v959 = vsel %vm636, %v927, 0.0
      %v960 = vsel %vm637, %v928, 0.0
      %v961 = vsel %vm638, %v929, 0.0
      %v962 = vsel %vm639, %v930, 0.0
      %v963 = vsel %vm640, %v931, 0.0
      %v964 = vsel %vm641, %v932, 0.0
      %v965 = vsel %vm642, %v933, 0.0
      %v966 = vsel %vm643, %v934, 0.0
      %v967 = vsel %vm644, %v935, 0.0
      %v968 = vsel %vm645, %v936, 0.0
      %v969 = vsel %vm646, %v937, 0.0
      %v970 = vsel %vm647, %v938, 0.0
      %v971 = vsel %vm648, %v939, 0.0
      %v972 = vsel %vm649, %v940, 0.0
      %v973 = vsel %vm650, %v941, 0.0
      %v974 = vsel %vm651, %v942, 0.0
      %v975 = vsel %vm652, %v943, 0.0
      %v976 = vsel %vm653, %v944, 0.0
      %v977 = vsel %vm654, %v945, 0.0
      %v978 = vsel %vm655, %v946, 0.0
      %v979 = vsel %vm656, %v947, 0.0
      %v980 = vsel %vm657, %v948, 0.0
      %v981 = vsel %vm658, %v949, 0.0
      %v982 = vsel %vm659, %v950, 0.0
      %v983 = vsel %vm660, %v951, 0.0
      %v984 = vsel %vm661, %v952, 0.0
      %v985 = vperm.slane %v920, 0
      %v986 = vmul.f32 %v953, %v985
      %v987 = vmul.f32 %v954, %v985
      %v988 = vmul.f32 %v955, %v985
      %v989 = vmul.f32 %v956, %v985
      %v990 = vmul.f32 %v957, %v985
      %v991 = vmul.f32 %v958, %v985
      %v992 = vmul.f32 %v959, %v985
      %v993 = vmul.f32 %v960, %v985
      %v994 = vmul.f32 %v961, %v985
      %v995 = vmul.f32 %v962, %v985
      %v996 = vmul.f32 %v963, %v985
      %v997 = vmul.f32 %v964, %v985
      %v998 = vmul.f32 %v965, %v985
      %v999 = vmul.f32 %v966, %v985
      %v1000 = vmul.f32 %v967, %v985
      %v1001 = vmul.f32 %v968, %v985
      %v1002 = vmul.f32 %v969, %v985
      %v1003 = vmul.f32 %v970, %v985
      %v1004 = vmul.f32 %v971, %v985
      %v1005 = vmul.f32 %v972, %v985
      %v1006 = vmul.f32 %v973, %v985
      %v1007 = vmul.f32 %v974, %v985
      %v1008 = vmul.f32 %v975, %v985
      %v1009 = vmul.f32 %v976, %v985
      %v1010 = vmul.f32 %v977, %v985
      %v1011 = vmul.f32 %v978, %v985
      %v1012 = vmul.f32 %v979, %v985
      %v1013 = vmul.f32 %v980, %v985
      %v1014 = vmul.f32 %v981, %v985
      %v1015 = vmul.f32 %v982, %v985
      %v1016 = vmul.f32 %v983, %v985
      %v1017 = vmul.f32 %v984, %v985
      %v1018 = vadd.f32 %v888, %v986
      %v1019 = vadd.f32 %v889, %v987
      %v1020 = vadd.f32 %v890, %v988
      %v1021 = vadd.f32 %v891, %v989
      %v1022 = vadd.f32 %v892, %v990
      %v1023 = vadd.f32 %v893, %v991
      %v1024 = vadd.f32 %v894, %v992
      %v1025 = vadd.f32 %v895, %v993
      %v1026 = vadd.f32 %v896, %v994
      %v1027 = vadd.f32 %v897, %v995
      %v1028 = vadd.f32 %v898, %v996
      %v1029 = vadd.f32 %v899, %v997
      %v1030 = vadd.f32 %v900, %v998
      %v1031 = vadd.f32 %v901, %v999
      %v1032 = vadd.f32 %v902, %v1000
      %v1033 = vadd.f32 %v903, %v1001
      %v1034 = vadd.f32 %v904, %v1002
      %v1035 = vadd.f32 %v905, %v1003
      %v1036 = vadd.f32 %v906, %v1004
      %v1037 = vadd.f32 %v907, %v1005
      %v1038 = vadd.f32 %v908, %v1006
      %v1039 = vadd.f32 %v909, %v1007
      %v1040 = vadd.f32 %v910, %v1008
      %v1041 = vadd.f32 %v911, %v1009
      %v1042 = vadd.f32 %v912, %v1010
      %v1043 = vadd.f32 %v913, %v1011
      %v1044 = vadd.f32 %v914, %v1012
      %v1045 = vadd.f32 %v915, %v1013
      %v1046 = vadd.f32 %v916, %v1014
      %v1047 = vadd.f32 %v917, %v1015
      %v1048 = vadd.f32 %v918, %v1016
      %v1049 = vadd.f32 %v919, %v1017
      %v1050 = vld [vmem:[%s3 + $0x2] sm:$0x1]
      %v1051 = vld [vmem:[#allocation2 + $0x9] sm:$0xff]
      %v1052 = vld [vmem:[#allocation2 + $0x11] sm:$0xff]
      %v1053 = vld [vmem:[#allocation2 + $0x19] sm:$0xff]
      %v1054 = vld [vmem:[#allocation2 + $0x21] sm:$0xff]
      %v1055 = vld [vmem:[#allocation2 + $0x29] sm:$0xff]
      %v1056 = vld [vmem:[#allocation2 + $0x31] sm:$0xff]
      %v1057 = vld [vmem:[#allocation2 + $0x39] sm:$0xff]
      %v1058 = vld [vmem:[#allocation2 + $0x41] sm:$0xff]
      %v1059 = vld [vmem:[#allocation2 + $0x49] sm:$0xff]
      %v1060 = vld [vmem:[#allocation2 + $0x51] sm:$0xff]
      %v1061 = vld [vmem:[#allocation2 + $0x59] sm:$0xff]
      %v1062 = vld [vmem:[#allocation2 + $0x61] sm:$0xff]
      %v1063 = vld [vmem:[#allocation2 + $0x69] sm:$0xff]
      %v1064 = vld [vmem:[#allocation2 + $0x71] sm:$0xff]
      %v1065 = vld [vmem:[#allocation2 + $0x79] sm:$0xff]
      %v1066 = vld [vmem:[#allocation2 + $0x81] sm:$0xff]
      %v1067 = vld [vmem:[#allocation2 + $0x89] sm:$0xff]
      %v1068 = vld [vmem:[#allocation2 + $0x91] sm:$0xff]
      %v1069 = vld [vmem:[#allocation2 + $0x99] sm:$0xff]
      %v1070 = vld [vmem:[#allocation2 + $0xa1] sm:$0xff]
      %v1071 = vld [vmem:[#allocation2 + $0xa9] sm:$0xff]
      %v1072 = vld [vmem:[#allocation2 + $0xb1] sm:$0xff]
      %v1073 = vld [vmem:[#allocation2 + $0xb9] sm:$0xff]
      %v1074 = vld [vmem:[#allocation2 + $0xc1] sm:$0xff]
      %v1075 = vld [vmem:[#allocation2 + $0xc9] sm:$0xff]
      %v1076 = vld [vmem:[#allocation2 + $0xd1] sm:$0xff]
      %v1077 = vld [vmem:[#allocation2 + $0xd9] sm:$0xff]
      %v1078 = vld [vmem:[#allocation2 + $0xe1] sm:$0xff]
      %v1079 = vld [vmem:[#allocation2 + $0xe9] sm:$0xff]
      %v1080 = vld [vmem:[#allocation2 + $0xf1] sm:$0xff]
      %v1081 = vld [vmem:[#allocation2 + $0xf9] sm:$0xff]
      %v1082 = vld [vmem:[#allocation2 + $0x101] sm:$0xff]
      %vm1083 = vmand %vm630, %vm726
      %vm1084 = vmand %vm631, %vm727
      %vm1085 = vmand %vm632, %vm728
      %vm1086 = vmand %vm633, %vm729
      %vm1087 = vmand %vm634, %vm730
      %vm1088 = vmand %vm635, %vm731
      %vm1089 = vmand %vm636, %vm732
      %vm1090 = vmand %vm637, %vm733
      %vm1091 = vmand %vm638, %vm734
      %vm1092 = vmand %vm639, %vm735
      %vm1093 = vmand %vm640, %vm736
      %vm1094 = vmand %vm641, %vm737
      %vm1095 = vmand %vm642, %vm738
      %vm1096 = vmand %vm643, %vm739
      %vm1097 = vmand %vm644, %vm740
      %vm1098 = vmand %vm645, %vm741
      %vm1099 = vmand %vm646, %vm742
      %vm1100 = vmand %vm647, %vm743
      %vm1101 = vmand %vm648, %vm744
      %vm1102 = vmand %vm649, %vm745
      %vm1103 = vmand %vm650, %vm746
      %vm1104 = vmand %vm651, %vm747
      %vm1105 = vmand %vm652, %vm748
      %vm1106 = vmand %vm653, %vm749
      %vm1107 = vmand %vm654, %vm750
      %vm1108 = vmand %vm655, %vm751
      %vm1109 = vmand %vm656, %vm752
      %vm1110 = vmand %vm657, %vm753
      %vm1111 = vmand %vm658, %vm754
      %vm1112 = vmand %vm659, %vm755
      %vm1113 = vmand %vm660, %vm756
      %vm1114 = vmand %vm661, %vm757
      %v1115 = vsel %vm1083, %v1051, 0.0
      %v1116 = vsel %vm1084, %v1052, 0.0
      %v1117 = vsel %vm1085, %v1053, 0.0
      %v1118 = vsel %vm1086, %v1054, 0.0
      %v1119 = vsel %vm1087, %v1055, 0.0
      %v1120 = vsel %vm1088, %v1056, 0.0
      %v1121 = vsel %vm1089, %v1057, 0.0
      %v1122 = vsel %vm1090, %v1058, 0.0
      %v1123 = vsel %vm1091, %v1059, 0.0
      %v1124 = vsel %vm1092, %v1060, 0.0
      %v1125 = vsel %vm1093, %v1061, 0.0
      %v1126 = vsel %vm1094, %v1062, 0.0
      %v1127 = vsel %vm1095, %v1063, 0.0
      %v1128 = vsel %vm1096, %v1064, 0.0
      %v1129 = vsel %vm1097, %v1065, 0.0
      %v1130 = vsel %vm1098, %v1066, 0.0
      %v1131 = vsel %vm1099, %v1067, 0.0
      %v1132 = vsel %vm1100, %v1068, 0.0
      %v1133 = vsel %vm1101, %v1069, 0.0
      %v1134 = vsel %vm1102, %v1070, 0.0
      %v1135 = vsel %vm1103, %v1071, 0.0
      %v1136 = vsel %vm1104, %v1072, 0.0
      %v1137 = vsel %vm1105, %v1073, 0.0
      %v1138 = vsel %vm1106, %v1074, 0.0
      %v1139 = vsel %vm1107, %v1075, 0.0
      %v1140 = vsel %vm1108, %v1076, 0.0
      %v1141 = vsel %vm1109, %v1077, 0.0
      %v1142 = vsel %vm1110, %v1078, 0.0
      %v1143 = vsel %vm1111, %v1079, 0.0
      %v1144 = vsel %vm1112, %v1080, 0.0
      %v1145 = vsel %vm1113, %v1081, 0.0
      %v1146 = vsel %vm1114, %v1082, 0.0
      %v1147 = vperm.slane %v1050, 0
      %v1148 = vmul.f32 %v1115, %v1147
      %v1149 = vmul.f32 %v1116, %v1147
      %v1150 = vmul.f32 %v1117, %v1147
      %v1151 = vmul.f32 %v1118, %v1147
      %v1152 = vmul.f32 %v1119, %v1147
      %v1153 = vmul.f32 %v1120, %v1147
      %v1154 = vmul.f32 %v1121, %v1147
      %v1155 = vmul.f32 %v1122, %v1147
      %v1156 = vmul.f32 %v1123, %v1147
      %v1157 = vmul.f32 %v1124, %v1147
      %v1158 = vmul.f32 %v1125, %v1147
      %v1159 = vmul.f32 %v1126, %v1147
      %v1160 = vmul.f32 %v1127, %v1147
      %v1161 = vmul.f32 %v1128, %v1147
      %v1162 = vmul.f32 %v1129, %v1147
      %v1163 = vmul.f32 %v1130, %v1147
      %v1164 = vmul.f32 %v1131, %v1147
      %v1165 = vmul.f32 %v1132, %v1147
      %v1166 = vmul.f32 %v1133, %v1147
      %v1167 = vmul.f32 %v1134, %v1147
      %v1168 = vmul.f32 %v1135, %v1147
      %v1169 = vmul.f32 %v1136, %v1147
      %v1170 = vmul.f32 %v1137, %v1147
      %v1171 = vmul.f32 %v1138, %v1147
      %v1172 = vmul.f32 %v1139, %v1147
      %v1173 = vmul.f32 %v1140, %v1147
      %v1174 = vmul.f32 %v1141, %v1147
      %v1175 = vmul.f32 %v1142, %v1147
      %v1176 = vmul.f32 %v1143, %v1147
      %v1177 = vmul.f32 %v1144, %v1147
      %v1178 = vmul.f32 %v1145, %v1147
      %v1179 = vmul.f32 %v1146, %v1147
      %v1180 = vadd.f32 %v1018, %v1148
      %v1181 = vadd.f32 %v1019, %v1149
      %v1182 = vadd.f32 %v1020, %v1150
      %v1183 = vadd.f32 %v1021, %v1151
      %v1184 = vadd.f32 %v1022, %v1152
      %v1185 = vadd.f32 %v1023, %v1153
      %v1186 = vadd.f32 %v1024, %v1154
      %v1187 = vadd.f32 %v1025, %v1155
      %v1188 = vadd.f32 %v1026, %v1156
      %v1189 = vadd.f32 %v1027, %v1157
      %v1190 = vadd.f32 %v1028, %v1158
      %v1191 = vadd.f32 %v1029, %v1159
      %v1192 = vadd.f32 %v1030, %v1160
      %v1193 = vadd.f32 %v1031, %v1161
      %v1194 = vadd.f32 %v1032, %v1162
      %v1195 = vadd.f32 %v1033, %v1163
      %v1196 = vadd.f32 %v1034, %v1164
      %v1197 = vadd.f32 %v1035, %v1165
      %v1198 = vadd.f32 %v1036, %v1166
      %v1199 = vadd.f32 %v1037, %v1167
      %v1200 = vadd.f32 %v1038, %v1168
      %v1201 = vadd.f32 %v1039, %v1169
      %v1202 = vadd.f32 %v1040, %v1170
      %v1203 = vadd.f32 %v1041, %v1171
      %v1204 = vadd.f32 %v1042, %v1172
      %v1205 = vadd.f32 %v1043, %v1173
      %v1206 = vadd.f32 %v1044, %v1174
      %v1207 = vadd.f32 %v1045, %v1175
      %v1208 = vadd.f32 %v1046, %v1176
      %v1209 = vadd.f32 %v1047, %v1177
      %v1210 = vadd.f32 %v1048, %v1178
      %v1211 = vadd.f32 %v1049, %v1179
      %v1212 = vld [vmem:[%s3 + $0x3] sm:$0x1]
      %v1213 = vld [vmem:[#allocation2 + $0x107] sm:$0xff]
      %v1214 = vld [vmem:[#allocation2 + $0x10f] sm:$0xff]
      %v1215 = vsel %vm694, %v761, 0.0
      %v1216 = vsel %vm695, %v762, 0.0
      %v1217 = vsel %vm696, %v763, 0.0
      %v1218 = vsel %vm697, %v764, 0.0
      %v1219 = vsel %vm698, %v765, 0.0
      %v1220 = vsel %vm699, %v766, 0.0
      %v1221 = vsel %vm700, %v767, 0.0
      %v1222 = vsel %vm701, %v768, 0.0
      %v1223 = vsel %vm702, %v769, 0.0
      %v1224 = vsel %vm703, %v770, 0.0
      %v1225 = vsel %vm704, %v771, 0.0
      %v1226 = vsel %vm705, %v772, 0.0
      %v1227 = vsel %vm706, %v773, 0.0
      %v1228 = vsel %vm707, %v774, 0.0
      %v1229 = vsel %vm708, %v775, 0.0
      %v1230 = vsel %vm709, %v776, 0.0
      %v1231 = vsel %vm710, %v777, 0.0
      %v1232 = vsel %vm711, %v778, 0.0
      %v1233 = vsel %vm712, %v779, 0.0
      %v1234 = vsel %vm713, %v780, 0.0
      %v1235 = vsel %vm714, %v781, 0.0
      %v1236 = vsel %vm715, %v782, 0.0
      %v1237 = vsel %vm716, %v783, 0.0
      %v1238 = vsel %vm717, %v784, 0.0
      %v1239 = vsel %vm718, %v785, 0.0
      %v1240 = vsel %vm719, %v786, 0.0
      %v1241 = vsel %vm720, %v787, 0.0
      %v1242 = vsel %vm721, %v788, 0.0
      %v1243 = vsel %vm722, %v789, 0.0
      %v1244 = vsel %vm723, %v790, 0.0
      %v1245 = vsel %vm724, %v1213, 0.0
      %v1246 = vsel %vm725, %v1214, 0.0
      %v1247 = vperm.slane %v1212, 0
      %v1248 = vmul.f32 %v1215, %v1247
      %v1249 = vmul.f32 %v1216, %v1247
      %v1250 = vmul.f32 %v1217, %v1247
      %v1251 = vmul.f32 %v1218, %v1247
      %v1252 = vmul.f32 %v1219, %v1247
      %v1253 = vmul.f32 %v1220, %v1247
      %v1254 = vmul.f32 %v1221, %v1247
      %v1255 = vmul.f32 %v1222, %v1247
      %v1256 = vmul.f32 %v1223, %v1247
      %v1257 = vmul.f32 %v1224, %v1247
      %v1258 = vmul.f32 %v1225, %v1247
      %v1259 = vmul.f32 %v1226, %v1247
      %v1260 = vmul.f32 %v1227, %v1247
      %v1261 = vmul.f32 %v1228, %v1247
      %v1262 = vmul.f32 %v1229, %v1247
      %v1263 = vmul.f32 %v1230, %v1247
      %v1264 = vmul.f32 %v1231, %v1247
      %v1265 = vmul.f32 %v1232, %v1247
      %v1266 = vmul.f32 %v1233, %v1247
      %v1267 = vmul.f32 %v1234, %v1247
      %v1268 = vmul.f32 %v1235, %v1247
      %v1269 = vmul.f32 %v1236, %v1247
      %v1270 = vmul.f32 %v1237, %v1247
      %v1271 = vmul.f32 %v1238, %v1247
      %v1272 = vmul.f32 %v1239, %v1247
      %v1273 = vmul.f32 %v1240, %v1247
      %v1274 = vmul.f32 %v1241, %v1247
      %v1275 = vmul.f32 %v1242, %v1247
      %v1276 = vmul.f32 %v1243, %v1247
      %v1277 = vmul.f32 %v1244, %v1247
      %v1278 = vmul.f32 %v1245, %v1247
      %v1279 = vmul.f32 %v1246, %v1247
      %v1280 = vadd.f32 %v1180, %v1248
      %v1281 = vadd.f32 %v1181, %v1249
      %v1282 = vadd.f32 %v1182, %v1250
      %v1283 = vadd.f32 %v1183, %v1251
      %v1284 = vadd.f32 %v1184, %v1252
      %v1285 = vadd.f32 %v1185, %v1253
      %v1286 = vadd.f32 %v1186, %v1254
      %v1287 = vadd.f32 %v1187, %v1255
      %v1288 = vadd.f32 %v1188, %v1256
      %v1289 = vadd.f32 %v1189, %v1257
      %v1290 = vadd.f32 %v1190, %v1258
      %v1291 = vadd.f32 %v1191, %v1259
      %v1292 = vadd.f32 %v1192, %v1260
      %v1293 = vadd.f32 %v1193, %v1261
      %v1294 = vadd.f32 %v1194, %v1262
      %v1295 = vadd.f32 %v1195, %v1263
      %v1296 = vadd.f32 %v1196, %v1264
      %v1297 = vadd.f32 %v1197, %v1265
      %v1298 = vadd.f32 %v1198, %v1266
      %v1299 = vadd.f32 %v1199, %v1267
      %v1300 = vadd.f32 %v1200, %v1268
      %v1301 = vadd.f32 %v1201, %v1269
      %v1302 = vadd.f32 %v1202, %v1270
      %v1303 = vadd.f32 %v1203, %v1271
      %v1304 = vadd.f32 %v1204, %v1272
      %v1305 = vadd.f32 %v1205, %v1273
      %v1306 = vadd.f32 %v1206, %v1274
      %v1307 = vadd.f32 %v1207, %v1275
      %v1308 = vadd.f32 %v1208, %v1276
      %v1309 = vadd.f32 %v1209, %v1277
      %v1310 = vadd.f32 %v1210, %v1278
      %v1311 = vadd.f32 %v1211, %v1279
      %v1312 = vld [vmem:[%s3 + $0x4] sm:$0x1]
      %v1313 = vperm.slane %v1312, 0
      %v1314 = vmul.f32 %v431, %v1313
      %v1315 = vmul.f32 %v434, %v1313
      %v1316 = vmul.f32 %v437, %v1313
      %v1317 = vmul.f32 %v440, %v1313
      %v1318 = vmul.f32 %v443, %v1313
      %v1319 = vmul.f32 %v446, %v1313
      %v1320 = vmul.f32 %v449, %v1313
      %v1321 = vmul.f32 %v452, %v1313
      %v1322 = vmul.f32 %v455, %v1313
      %v1323 = vmul.f32 %v458, %v1313
      %v1324 = vmul.f32 %v461, %v1313
      %v1325 = vmul.f32 %v464, %v1313
      %v1326 = vmul.f32 %v467, %v1313
      %v1327 = vmul.f32 %v470, %v1313
      %v1328 = vmul.f32 %v473, %v1313
      %v1329 = vmul.f32 %v476, %v1313
      %v1330 = vmul.f32 %v479, %v1313
      %v1331 = vmul.f32 %v482, %v1313
      %v1332 = vmul.f32 %v485, %v1313
      %v1333 = vmul.f32 %v488, %v1313
      %v1334 = vmul.f32 %v491, %v1313
      %v1335 = vmul.f32 %v494, %v1313
      %v1336 = vmul.f32 %v497, %v1313
      %v1337 = vmul.f32 %v500, %v1313
      %v1338 = vmul.f32 %v503, %v1313
      %v1339 = vmul.f32 %v506, %v1313
      %v1340 = vmul.f32 %v509, %v1313
      %v1341 = vmul.f32 %v512, %v1313
      %v1342 = vmul.f32 %v515, %v1313
      %v1343 = vmul.f32 %v518, %v1313
      %v1344 = vmul.f32 %v521, %v1313
      %v1345 = vmul.f32 %v524, %v1313
      %v1346 = vadd.f32 %v1280, %v1314
      %v1347 = vadd.f32 %v1281, %v1315
      %v1348 = vadd.f32 %v1282, %v1316
      %v1349 = vadd.f32 %v1283, %v1317
      %v1350 = vadd.f32 %v1284, %v1318
      %v1351 = vadd.f32 %v1285, %v1319
      %v1352 = vadd.f32 %v1286, %v1320
      %v1353 = vadd.f32 %v1287, %v1321
      %v1354 = vadd.f32 %v1288, %v1322
      %v1355 = vadd.f32 %v1289, %v1323
      %v1356 = vadd.f32 %v1290, %v1324
      %v1357 = vadd.f32 %v1291, %v1325
      %v1358 = vadd.f32 %v1292, %v1326
      %v1359 = vadd.f32 %v1293, %v1327
      %v1360 = vadd.f32 %v1294, %v1328
      %v1361 = vadd.f32 %v1295, %v1329
      %v1362 = vadd.f32 %v1296, %v1330
      %v1363 = vadd.f32 %v1297, %v1331
      %v1364 = vadd.f32 %v1298, %v1332
      %v1365 = vadd.f32 %v1299, %v1333
      %v1366 = vadd.f32 %v1300, %v1334
      %v1367 = vadd.f32 %v1301, %v1335
      %v1368 = vadd.f32 %v1302, %v1336
      %v1369 = vadd.f32 %v1303, %v1337
      %v1370 = vadd.f32 %v1304, %v1338
      %v1371 = vadd.f32 %v1305, %v1339
      %v1372 = vadd.f32 %v1306, %v1340
      %v1373 = vadd.f32 %v1307, %v1341
      %v1374 = vadd.f32 %v1308, %v1342
      %v1375 = vadd.f32 %v1309, %v1343
      %v1376 = vadd.f32 %v1310, %v1344
      %v1377 = vadd.f32 %v1311, %v1345
      %v1378 = vld [vmem:[%s3 + $0x5] sm:$0x1]
      %v1379 = vld [vmem:[#allocation2 + $0x109] sm:$0xff]
      %v1380 = vld [vmem:[#allocation2 + $0x111] sm:$0xff]
      %v1381 = vsel %vm726, %v1053, 0.0
      %v1382 = vsel %vm727, %v1054, 0.0
      %v1383 = vsel %vm728, %v1055, 0.0
      %v1384 = vsel %vm729, %v1056, 0.0
      %v1385 = vsel %vm730, %v1057, 0.0
      %v1386 = vsel %vm731, %v1058, 0.0
      %v1387 = vsel %vm732, %v1059, 0.0
      %v1388 = vsel %vm733, %v1060, 0.0
      %v1389 = vsel %vm734, %v1061, 0.0
      %v1390 = vsel %vm735, %v1062, 0.0
      %v1391 = vsel %vm736, %v1063, 0.0
      %v1392 = vsel %vm737, %v1064, 0.0
      %v1393 = vsel %vm738, %v1065, 0.0
      %v1394 = vsel %vm739, %v1066, 0.0
      %v1395 = vsel %vm740, %v1067, 0.0
      %v1396 = vsel %vm741, %v1068, 0.0
      %v1397 = vsel %vm742, %v1069, 0.0
      %v1398 = vsel %vm743, %v1070, 0.0
      %v1399 = vsel %vm744, %v1071, 0.0
      %v1400 = vsel %vm745, %v1072, 0.0
      %v1401 = vsel %vm746, %v1073, 0.0
      %v1402 = vsel %vm747, %v1074, 0.0
      %v1403 = vsel %vm748, %v1075, 0.0
      %v1404 = vsel %vm749, %v1076, 0.0
      %v1405 = vsel %vm750, %v1077, 0.0
      %v1406 = vsel %vm751, %v1078, 0.0
      %v1407 = vsel %vm752, %v1079, 0.0
      %v1408 = vsel %vm753, %v1080, 0.0
      %v1409 = vsel %vm754, %v1081, 0.0
      %v1410 = vsel %vm755, %v1082, 0.0
      %v1411 = vsel %vm756, %v1379, 0.0
      %v1412 = vsel %vm757, %v1380, 0.0
      %v1413 = vperm.slane %v1378, 0
      %v1414 = vmul.f32 %v1381, %v1413
      %v1415 = vmul.f32 %v1382, %v1413
      %v1416 = vmul.f32 %v1383, %v1413
      %v1417 = vmul.f32 %v1384, %v1413
      %v1418 = vmul.f32 %v1385, %v1413
      %v1419 = vmul.f32 %v1386, %v1413
      %v1420 = vmul.f32 %v1387, %v1413
      %v1421 = vmul.f32 %v1388, %v1413
      %v1422 = vmul.f32 %v1389, %v1413
      %v1423 = vmul.f32 %v1390, %v1413
      %v1424 = vmul.f32 %v1391, %v1413
      %v1425 = vmul.f32 %v1392, %v1413
      %v1426 = vmul.f32 %v1393, %v1413
      %v1427 = vmul.f32 %v1394, %v1413
      %v1428 = vmul.f32 %v1395, %v1413
      %v1429 = vmul.f32 %v1396, %v1413
      %v1430 = vmul.f32 %v1397, %v1413
      %v1431 = vmul.f32 %v1398, %v1413
      %v1432 = vmul.f32 %v1399, %v1413
      %v1433 = vmul.f32 %v1400, %v1413
      %v1434 = vmul.f32 %v1401, %v1413
      %v1435 = vmul.f32 %v1402, %v1413
      %v1436 = vmul.f32 %v1403, %v1413
      %v1437 = vmul.f32 %v1404, %v1413
      %v1438 = vmul.f32 %v1405, %v1413
      %v1439 = vmul.f32 %v1406, %v1413
      %v1440 = vmul.f32 %v1407, %v1413
      %v1441 = vmul.f32 %v1408, %v1413
      %v1442 = vmul.f32 %v1409, %v1413
      %v1443 = vmul.f32 %v1410, %v1413
      %v1444 = vmul.f32 %v1411, %v1413
      %v1445 = vmul.f32 %v1412, %v1413
      %v1446 = vadd.f32 %v1346, %v1414
      %v1447 = vadd.f32 %v1347, %v1415
      %v1448 = vadd.f32 %v1348, %v1416
      %v1449 = vadd.f32 %v1349, %v1417
      %v1450 = vadd.f32 %v1350, %v1418
      %v1451 = vadd.f32 %v1351, %v1419
      %v1452 = vadd.f32 %v1352, %v1420
      %v1453 = vadd.f32 %v1353, %v1421
      %v1454 = vadd.f32 %v1354, %v1422
      %v1455 = vadd.f32 %v1355, %v1423
      %v1456 = vadd.f32 %v1356, %v1424
      %v1457 = vadd.f32 %v1357, %v1425
      %v1458 = vadd.f32 %v1358, %v1426
      %v1459 = vadd.f32 %v1359, %v1427
      %v1460 = vadd.f32 %v1360, %v1428
      %v1461 = vadd.f32 %v1361, %v1429
      %v1462 = vadd.f32 %v1362, %v1430
      %v1463 = vadd.f32 %v1363, %v1431
      %v1464 = vadd.f32 %v1364, %v1432
      %v1465 = vadd.f32 %v1365, %v1433
      %v1466 = vadd.f32 %v1366, %v1434
      %v1467 = vadd.f32 %v1367, %v1435
      %v1468 = vadd.f32 %v1368, %v1436
      %v1469 = vadd.f32 %v1369, %v1437
      %v1470 = vadd.f32 %v1370, %v1438
      %v1471 = vadd.f32 %v1371, %v1439
      %v1472 = vadd.f32 %v1372, %v1440
      %v1473 = vadd.f32 %v1373, %v1441
      %v1474 = vadd.f32 %v1374, %v1442
      %v1475 = vadd.f32 %v1375, %v1443
      %v1476 = vadd.f32 %v1376, %v1444
      %v1477 = vadd.f32 %v1377, %v1445
      %v1478 = vld [vmem:[%s3 + $0x6] sm:$0x1]
      %v1479 = vld [vmem:[#allocation2 + $0x117] sm:$0xff]
      %v1480 = vld [vmem:[#allocation2 + $0x11f] sm:$0xff]
      %vm1481 = vmand %vm662, %vm694
      %vm1482 = vmand %vm663, %vm695
      %vm1483 = vmand %vm664, %vm696
      %vm1484 = vmand %vm665, %vm697
      %vm1485 = vmand %vm666, %vm698
      %vm1486 = vmand %vm667, %vm699
      %vm1487 = vmand %vm668, %vm700
      %vm1488 = vmand %vm669, %vm701
      %vm1489 = vmand %vm670, %vm702
      %vm1490 = vmand %vm671, %vm703
      %vm1491 = vmand %vm672, %vm704
      %vm1492 = vmand %vm673, %vm705
      %vm1493 = vmand %vm674, %vm706
      %vm1494 = vmand %vm675, %vm707
      %vm1495 = vmand %vm676, %vm708
      %vm1496 = vmand %vm677, %vm709
      %vm1497 = vmand %vm678, %vm710
      %vm1498 = vmand %vm679, %vm711
      %vm1499 = vmand %vm680, %vm712
      %vm1500 = vmand %vm681, %vm713
      %vm1501 = vmand %vm682, %vm714
      %vm1502 = vmand %vm683, %vm715
      %vm1503 = vmand %vm684, %vm716
      %vm1504 = vmand %vm685, %vm717
      %vm1505 = vmand %vm686, %vm718
      %vm1506 = vmand %vm687, %vm719
      %vm1507 = vmand %vm688, %vm720
      %vm1508 = vmand %vm689, %vm721
      %vm1509 = vmand %vm690, %vm722
      %vm1510 = vmand %vm691, %vm723
      %vm1511 = vmand %vm692, %vm724
      %vm1512 = vmand %vm693, %vm725
      %v1513 = vsel %vm1481, %v763, 0.0
      %v1514 = vsel %vm1482, %v764, 0.0
      %v1515 = vsel %vm1483, %v765, 0.0
      %v1516 = vsel %vm1484, %v766, 0.0
      %v1517 = vsel %vm1485, %v767, 0.0
      %v1518 = vsel %vm1486, %v768, 0.0
      %v1519 = vsel %vm1487, %v769, 0.0
      %v1520 = vsel %vm1488, %v770, 0.0
      %v1521 = vsel %vm1489, %v771, 0.0
      %v1522 = vsel %vm1490, %v772, 0.0
      %v1523 = vsel %vm1491, %v773, 0.0
      %v1524 = vsel %vm1492, %v774, 0.0
      %v1525 = vsel %vm1493, %v775, 0.0
      %v1526 = vsel %vm1494, %v776, 0.0
      %v1527 = vsel %vm1495, %v777, 0.0
      %v1528 = vsel %vm1496, %v778, 0.0
      %v1529 = vsel %vm1497, %v779, 0.0
      %v1530 = vsel %vm1498, %v780, 0.0
      %v1531 = vsel %vm1499, %v781, 0.0
      %v1532 = vsel %vm1500, %v782, 0.0
      %v1533 = vsel %vm1501, %v783, 0.0
      %v1534 = vsel %vm1502, %v784, 0.0
      %v1535 = vsel %vm1503, %v785, 0.0
      %v1536 = vsel %vm1504, %v786, 0.0
      %v1537 = vsel %vm1505, %v787, 0.0
      %v1538 = vsel %vm1506, %v788, 0.0
      %v1539 = vsel %vm1507, %v789, 0.0
      %v1540 = vsel %vm1508, %v790, 0.0
      %v1541 = vsel %vm1509, %v1213, 0.0
      %v1542 = vsel %vm1510, %v1214, 0.0
      %v1543 = vsel %vm1511, %v1479, 0.0
      %v1544 = vsel %vm1512, %v1480, 0.0
      %v1545 = vperm.slane %v1478, 0
      %v1546 = vmul.f32 %v1513, %v1545
      %v1547 = vmul.f32 %v1514, %v1545
      %v1548 = vmul.f32 %v1515, %v1545
      %v1549 = vmul.f32 %v1516, %v1545
      %v1550 = vmul.f32 %v1517, %v1545
      %v1551 = vmul.f32 %v1518, %v1545
      %v1552 = vmul.f32 %v1519, %v1545
      %v1553 = vmul.f32 %v1520, %v1545
      %v1554 = vmul.f32 %v1521, %v1545
      %v1555 = vmul.f32 %v1522, %v1545
      %v1556 = vmul.f32 %v1523, %v1545
      %v1557 = vmul.f32 %v1524, %v1545
      %v1558 = vmul.f32 %v1525, %v1545
      %v1559 = vmul.f32 %v1526, %v1545
      %v1560 = vmul.f32 %v1527, %v1545
      %v1561 = vmul.f32 %v1528, %v1545
      %v1562 = vmul.f32 %v1529, %v1545
      %v1563 = vmul.f32 %v1530, %v1545
      %v1564 = vmul.f32 %v1531, %v1545
      %v1565 = vmul.f32 %v1532, %v1545
      %v1566 = vmul.f32 %v1533, %v1545
      %v1567 = vmul.f32 %v1534, %v1545
      %v1568 = vmul.f32 %v1535, %v1545
      %v1569 = vmul.f32 %v1536, %v1545
      %v1570 = vmul.f32 %v1537, %v1545
      %v1571 = vmul.f32 %v1538, %v1545
      %v1572 = vmul.f32 %v1539, %v1545
      %v1573 = vmul.f32 %v1540, %v1545
      %v1574 = vmul.f32 %v1541, %v1545
      %v1575 = vmul.f32 %v1542, %v1545
      %v1576 = vmul.f32 %v1543, %v1545
      %v1577 = vmul.f32 %v1544, %v1545
      %v1578 = vadd.f32 %v1446, %v1546
      %v1579 = vadd.f32 %v1447, %v1547
      %v1580 = vadd.f32 %v1448, %v1548
      %v1581 = vadd.f32 %v1449, %v1549
      %v1582 = vadd.f32 %v1450, %v1550
      %v1583 = vadd.f32 %v1451, %v1551
      %v1584 = vadd.f32 %v1452, %v1552
      %v1585 = vadd.f32 %v1453, %v1553
      %v1586 = vadd.f32 %v1454, %v1554
      %v1587 = vadd.f32 %v1455, %v1555
      %v1588 = vadd.f32 %v1456, %v1556
      %v1589 = vadd.f32 %v1457, %v1557
      %v1590 = vadd.f32 %v1458, %v1558
      %v1591 = vadd.f32 %v1459, %v1559
      %v1592 = vadd.f32 %v1460, %v1560
      %v1593 = vadd.f32 %v1461, %v1561
      %v1594 = vadd.f32 %v1462, %v1562
      %v1595 = vadd.f32 %v1463, %v1563
      %v1596 = vadd.f32 %v1464, %v1564
      %v1597 = vadd.f32 %v1465, %v1565
      %v1598 = vadd.f32 %v1466, %v1566
      %v1599 = vadd.f32 %v1467, %v1567
      %v1600 = vadd.f32 %v1468, %v1568
      %v1601 = vadd.f32 %v1469, %v1569
      %v1602 = vadd.f32 %v1470, %v1570
      %v1603 = vadd.f32 %v1471, %v1571
      %v1604 = vadd.f32 %v1472, %v1572
      %v1605 = vadd.f32 %v1473, %v1573
      %v1606 = vadd.f32 %v1474, %v1574
      %v1607 = vadd.f32 %v1475, %v1575
      %v1608 = vadd.f32 %v1476, %v1576
      %v1609 = vadd.f32 %v1477, %v1577
      %v1610 = vld [vmem:[%s3 + $0x7] sm:$0x1]
      %v1611 = vld [vmem:[#allocation2 + $0x108] sm:$0xff]
      %v1612 = vld [vmem:[#allocation2 + $0x110] sm:$0xff]
      %v1613 = vld [vmem:[#allocation2 + $0x118] sm:$0xff]
      %v1614 = vld [vmem:[#allocation2 + $0x120] sm:$0xff]
      %v1615 = vsel %vm662, %v925, 0.0
      %v1616 = vsel %vm663, %v926, 0.0
      %v1617 = vsel %vm664, %v927, 0.0
      %v1618 = vsel %vm665, %v928, 0.0
      %v1619 = vsel %vm666, %v929, 0.0
      %v1620 = vsel %vm667, %v930, 0.0
      %v1621 = vsel %vm668, %v931, 0.0
      %v1622 = vsel %vm669, %v932, 0.0
      %v1623 = vsel %vm670, %v933, 0.0
      %v1624 = vsel %vm671, %v934, 0.0
      %v1625 = vsel %vm672, %v935, 0.0
      %v1626 = vsel %vm673, %v936, 0.0
      %v1627 = vsel %vm674, %v937, 0.0
      %v1628 = vsel %vm675, %v938, 0.0
      %v1629 = vsel %vm676, %v939, 0.0
      %v1630 = vsel %vm677, %v940, 0.0
      %v1631 = vsel %vm678, %v941, 0.0
      %v1632 = vsel %vm679, %v942, 0.0
      %v1633 = vsel %vm680, %v943, 0.0
      %v1634 = vsel %vm681, %v944, 0.0
      %v1635 = vsel %vm682, %v945, 0.0
      %v1636 = vsel %vm683, %v946, 0.0
      %v1637 = vsel %vm684, %v947, 0.0
      %v1638 = vsel %vm685, %v948, 0.0
      %v1639 = vsel %vm686, %v949, 0.0
      %v1640 = vsel %vm687, %v950, 0.0
      %v1641 = vsel %vm688, %v951, 0.0
      %v1642 = vsel %vm689, %v952, 0.0
      %v1643 = vsel %vm690, %v1611, 0.0
      %v1644 = vsel %vm691, %v1612, 0.0
      %v1645 = vsel %vm692, %v1613, 0.0
      %v1646 = vsel %vm693, %v1614, 0.0
      %v1647 = vperm.slane %v1610, 0
      %v1648 = vmul.f32 %v1615, %v1647
      %v1649 = vmul.f32 %v1616, %v1647
      %v1650 = vmul.f32 %v1617, %v1647
      %v1651 = vmul.f32 %v1618, %v1647
      %v1652 = vmul.f32 %v1619, %v1647
      %v1653 = vmul.f32 %v1620, %v1647
      %v1654 = vmul.f32 %v1621, %v1647
      %v1655 = vmul.f32 %v1622, %v1647
      %v1656 = vmul.f32 %v1623, %v1647
      %v1657 = vmul.f32 %v1624, %v1647
      %v1658 = vmul.f32 %v1625, %v1647
      %v1659 = vmul.f32 %v1626, %v1647
      %v1660 = vmul.f32 %v1627, %v1647
      %v1661 = vmul.f32 %v1628, %v1647
      %v1662 = vmul.f32 %v1629, %v1647
      %v1663 = vmul.f32 %v1630, %v1647
      %v1664 = vmul.f32 %v1631, %v1647
      %v1665 = vmul.f32 %v1632, %v1647
      %v1666 = vmul.f32 %v1633, %v1647
      %v1667 = vmul.f32 %v1634, %v1647
      %v1668 = vmul.f32 %v1635, %v1647
      %v1669 = vmul.f32 %v1636, %v1647
      %v1670 = vmul.f32 %v1637, %v1647
      %v1671 = vmul.f32 %v1638, %v1647
      %v1672 = vmul.f32 %v1639, %v1647
      %v1673 = vmul.f32 %v1640, %v1647
      %v1674 = vmul.f32 %v1641, %v1647
      %v1675 = vmul.f32 %v1642, %v1647
      %v1676 = vmul.f32 %v1643, %v1647
      %v1677 = vmul.f32 %v1644, %v1647
      %v1678 = vmul.f32 %v1645, %v1647
      %v1679 = vmul.f32 %v1646, %v1647
      %v1680 = vadd.f32 %v1578, %v1648
      %v1681 = vadd.f32 %v1579, %v1649
      %v1682 = vadd.f32 %v1580, %v1650
      %v1683 = vadd.f32 %v1581, %v1651
      %v1684 = vadd.f32 %v1582, %v1652
      %v1685 = vadd.f32 %v1583, %v1653
      %v1686 = vadd.f32 %v1584, %v1654
      %v1687 = vadd.f32 %v1585, %v1655
      %v1688 = vadd.f32 %v1586, %v1656
      %v1689 = vadd.f32 %v1587, %v1657
      %v1690 = vadd.f32 %v1588, %v1658
      %v1691 = vadd.f32 %v1589, %v1659
      %v1692 = vadd.f32 %v1590, %v1660
      %v1693 = vadd.f32 %v1591, %v1661
      %v1694 = vadd.f32 %v1592, %v1662
      %v1695 = vadd.f32 %v1593, %v1663
      %v1696 = vadd.f32 %v1594, %v1664
      %v1697 = vadd.f32 %v1595, %v1665
      %v1698 = vadd.f32 %v1596, %v1666
      %v1699 = vadd.f32 %v1597, %v1667
      %v1700 = vadd.f32 %v1598, %v1668
      %v1701 = vadd.f32 %v1599, %v1669
      %v1702 = vadd.f32 %v1600, %v1670
      %v1703 = vadd.f32 %v1601, %v1671
      %v1704 = vadd.f32 %v1602, %v1672
      %v1705 = vadd.f32 %v1603, %v1673
      %v1706 = vadd.f32 %v1604, %v1674
      %v1707 = vadd.f32 %v1605, %v1675
      %v1708 = vadd.f32 %v1606, %v1676
      %v1709 = vadd.f32 %v1607, %v1677
      %v1710 = vadd.f32 %v1608, %v1678
      %v1711 = vadd.f32 %v1609, %v1679
      %v1712 = vld [vmem:[%s3 + $0x8] sm:$0x1]
      %v1713 = vld [vmem:[#allocation2 + $0x119] sm:$0xff]
      %v1714 = vld [vmem:[#allocation2 + $0x121] sm:$0xff]
      %vm1715 = vmand %vm662, %vm726
      %vm1716 = vmand %vm663, %vm727
      %vm1717 = vmand %vm664, %vm728
      %vm1718 = vmand %vm665, %vm729
      %vm1719 = vmand %vm666, %vm730
      %vm1720 = vmand %vm667, %vm731
      %vm1721 = vmand %vm668, %vm732
      %vm1722 = vmand %vm669, %vm733
      %vm1723 = vmand %vm670, %vm734
      %vm1724 = vmand %vm671, %vm735
      %vm1725 = vmand %vm672, %vm736
      %vm1726 = vmand %vm673, %vm737
      %vm1727 = vmand %vm674, %vm738
      %vm1728 = vmand %vm675, %vm739
      %vm1729 = vmand %vm676, %vm740
      %vm1730 = vmand %vm677, %vm741
      %vm1731 = vmand %vm678, %vm742
      %vm1732 = vmand %vm679, %vm743
      %vm1733 = vmand %vm680, %vm744
      %vm1734 = vmand %vm681, %vm745
      %vm1735 = vmand %vm682, %vm746
      %vm1736 = vmand %vm683, %vm747
      %vm1737 = vmand %vm684, %vm748
      %vm1738 = vmand %vm685, %vm749
      %vm1739 = vmand %vm686, %vm750
      %vm1740 = vmand %vm687, %vm751
      %vm1741 = vmand %vm688, %vm752
      %vm1742 = vmand %vm689, %vm753
      %vm1743 = vmand %vm690, %vm754
      %vm1744 = vmand %vm691, %vm755
      %vm1745 = vmand %vm692, %vm756
      %vm1746 = vmand %vm693, %vm757
      %v1747 = vsel %vm1715, %v1055, 0.0
      %v1748 = vsel %vm1716, %v1056, 0.0
      %v1749 = vsel %vm1717, %v1057, 0.0
      %v1750 = vsel %vm1718, %v1058, 0.0
      %v1751 = vsel %vm1719, %v1059, 0.0
      %v1752 = vsel %vm1720, %v1060, 0.0
      %v1753 = vsel %vm1721, %v1061, 0.0
      %v1754 = vsel %vm1722, %v1062, 0.0
      %v1755 = vsel %vm1723, %v1063, 0.0
      %v1756 = vsel %vm1724, %v1064, 0.0
      %v1757 = vsel %vm1725, %v1065, 0.0
      %v1758 = vsel %vm1726, %v1066, 0.0
      %v1759 = vsel %vm1727, %v1067, 0.0
      %v1760 = vsel %vm1728, %v1068, 0.0
      %v1761 = vsel %vm1729, %v1069, 0.0
      %v1762 = vsel %vm1730, %v1070, 0.0
      %v1763 = vsel %vm1731, %v1071, 0.0
      %v1764 = vsel %vm1732, %v1072, 0.0
      %v1765 = vsel %vm1733, %v1073, 0.0
      %v1766 = vsel %vm1734, %v1074, 0.0
      %v1767 = vsel %vm1735, %v1075, 0.0
      %v1768 = vsel %vm1736, %v1076, 0.0
      %v1769 = vsel %vm1737, %v1077, 0.0
      %v1770 = vsel %vm1738, %v1078, 0.0
      %v1771 = vsel %vm1739, %v1079, 0.0
      %v1772 = vsel %vm1740, %v1080, 0.0
      %v1773 = vsel %vm1741, %v1081, 0.0
      %v1774 = vsel %vm1742, %v1082, 0.0
      %v1775 = vsel %vm1743, %v1379, 0.0
      %v1776 = vsel %vm1744, %v1380, 0.0
      %v1777 = vsel %vm1745, %v1713, 0.0
      %v1778 = vsel %vm1746, %v1714, 0.0
      %v1779 = vperm.slane %v1712, 0
      %v1780 = vmul.f32 %v1747, %v1779
      %v1781 = vmul.f32 %v1748, %v1779
      %v1782 = vmul.f32 %v1749, %v1779
      %v1783 = vmul.f32 %v1750, %v1779
      %v1784 = vmul.f32 %v1751, %v1779
      %v1785 = vmul.f32 %v1752, %v1779
      %v1786 = vmul.f32 %v1753, %v1779
      %v1787 = vmul.f32 %v1754, %v1779
      %v1788 = vmul.f32 %v1755, %v1779
      %v1789 = vmul.f32 %v1756, %v1779
      %v1790 = vmul.f32 %v1757, %v1779
      %v1791 = vmul.f32 %v1758, %v1779
      %v1792 = vmul.f32 %v1759, %v1779
      %v1793 = vmul.f32 %v1760, %v1779
      %v1794 = vmul.f32 %v1761, %v1779
      %v1795 = vmul.f32 %v1762, %v1779
      %v1796 = vmul.f32 %v1763, %v1779
      %v1797 = vmul.f32 %v1764, %v1779
      %v1798 = vmul.f32 %v1765, %v1779
      %v1799 = vmul.f32 %v1766, %v1779
      %v1800 = vmul.f32 %v1767, %v1779
      %v1801 = vmul.f32 %v1768, %v1779
      %v1802 = vmul.f32 %v1769, %v1779
      %v1803 = vmul.f32 %v1770, %v1779
      %v1804 = vmul.f32 %v1771, %v1779
      %v1805 = vmul.f32 %v1772, %v1779
      %v1806 = vmul.f32 %v1773, %v1779
      %v1807 = vmul.f32 %v1774, %v1779
      %v1808 = vmul.f32 %v1775, %v1779
      %v1809 = vmul.f32 %v1776, %v1779
      %v1810 = vmul.f32 %v1777, %v1779
      %v1811 = vmul.f32 %v1778, %v1779
      %v1812 = vadd.f32 %v1680, %v1780
      %v1813 = vadd.f32 %v1681, %v1781
      %v1814 = vadd.f32 %v1682, %v1782
      %v1815 = vadd.f32 %v1683, %v1783
      %v1816 = vadd.f32 %v1684, %v1784
      %v1817 = vadd.f32 %v1685, %v1785
      %v1818 = vadd.f32 %v1686, %v1786
      %v1819 = vadd.f32 %v1687, %v1787
      %v1820 = vadd.f32 %v1688, %v1788
      %v1821 = vadd.f32 %v1689, %v1789
      %v1822 = vadd.f32 %v1690, %v1790
      %v1823 = vadd.f32 %v1691, %v1791
      %v1824 = vadd.f32 %v1692, %v1792
      %v1825 = vadd.f32 %v1693, %v1793
      %v1826 = vadd.f32 %v1694, %v1794
      %v1827 = vadd.f32 %v1695, %v1795
      %v1828 = vadd.f32 %v1696, %v1796
      %v1829 = vadd.f32 %v1697, %v1797
      %v1830 = vadd.f32 %v1698, %v1798
      %v1831 = vadd.f32 %v1699, %v1799
      %v1832 = vadd.f32 %v1700, %v1800
      %v1833 = vadd.f32 %v1701, %v1801
      %v1834 = vadd.f32 %v1702, %v1802
      %v1835 = vadd.f32 %v1703, %v1803
      %v1836 = vadd.f32 %v1704, %v1804
      %v1837 = vadd.f32 %v1705, %v1805
      %v1838 = vadd.f32 %v1706, %v1806
      %v1839 = vadd.f32 %v1707, %v1807
      %v1840 = vadd.f32 %v1708, %v1808
      %v1841 = vadd.f32 %v1709, %v1809
      %v1842 = vadd.f32 %v1710, %v1810
      %v1843 = vadd.f32 %v1711, %v1811
      %v1844 = vld [vmem:[%s4] sm:$0x1]
      %v1846 = vperm.slane %v1844, 0
      %v1848 = vadd.f32 %v1812, %v1846
      %v1849 = vadd.f32 %v1813, %v1846
      %v1850 = vadd.f32 %v1814, %v1846
      %v1851 = vadd.f32 %v1815, %v1846
      %v1852 = vadd.f32 %v1816, %v1846
      %v1853 = vadd.f32 %v1817, %v1846
      %v1854 = vadd.f32 %v1818, %v1846
      %v1855 = vadd.f32 %v1819, %v1846
      %v1856 = vadd.f32 %v1820, %v1846
      %v1857 = vadd.f32 %v1821, %v1846
      %v1858 = vadd.f32 %v1822, %v1846
      %v1859 = vadd.f32 %v1823, %v1846
      %v1860 = vadd.f32 %v1824, %v1846
      %v1861 = vadd.f32 %v1825, %v1846
      %v1862 = vadd.f32 %v1826, %v1846
      %v1863 = vadd.f32 %v1827, %v1846
      %v1864 = vadd.f32 %v1828, %v1846
      %v1865 = vadd.f32 %v1829, %v1846
      %v1866 = vadd.f32 %v1830, %v1846
      %v1867 = vadd.f32 %v1831, %v1846
      %v1868 = vadd.f32 %v1832, %v1846
      %v1869 = vadd.f32 %v1833, %v1846
      %v1870 = vadd.f32 %v1834, %v1846
      %v1871 = vadd.f32 %v1835, %v1846
      %v1872 = vadd.f32 %v1836, %v1846
      %v1873 = vadd.f32 %v1837, %v1846
      %v1874 = vadd.f32 %v1838, %v1846
      %v1875 = vadd.f32 %v1839, %v1846
      %v1876 = vadd.f32 %v1840, %v1846
      %v1877 = vadd.f32 %v1841, %v1846
      %v1878 = vadd.f32 %v1842, %v1846
      %v1879 = vadd.f32 %v1843, %v1846
      %v1880 = vmul.f32 %v1848, 0.5
      %v1881 = vmul.f32 %v1849, 0.5
      %v1882 = vmul.f32 %v1850, 0.5
      %v1883 = vmul.f32 %v1851, 0.5
      %v1884 = vmul.f32 %v1852, 0.5
      %v1885 = vmul.f32 %v1853, 0.5
      %v1886 = vmul.f32 %v1854, 0.5
      %v1887 = vmul.f32 %v1855, 0.5
      %v1888 = vmul.f32 %v1856, 0.5
      %v1889 = vmul.f32 %v1857, 0.5
      %v1890 = vmul.f32 %v1858, 0.5
      %v1891 = vmul.f32 %v1859, 0.5
      %v1892 = vmul.f32 %v1860, 0.5
      %v1893 = vmul.f32 %v1861, 0.5
      %v1894 = vmul.f32 %v1862, 0.5
      %v1895 = vmul.f32 %v1863, 0.5
      %v1896 = vmul.f32 %v1864, 0.5
      %v1897 = vmul.f32 %v1865, 0.5
      %v1898 = vmul.f32 %v1866, 0.5
      %v1899 = vmul.f32 %v1867, 0.5
      %v1900 = vmul.f32 %v1868, 0.5
      %v1901 = vmul.f32 %v1869, 0.5
      %v1902 = vmul.f32 %v1870, 0.5
      %v1903 = vmul.f32 %v1871, 0.5
      %v1904 = vmul.f32 %v1872, 0.5
      %v1905 = vmul.f32 %v1873, 0.5
      %v1906 = vmul.f32 %v1874, 0.5
      %v1907 = vmul.f32 %v1875, 0.5
      %v1908 = vmul.f32 %v1876, 0.5
      %v1909 = vmul.f32 %v1877, 0.5
      %v1910 = vmul.f32 %v1878, 0.5
      %v1911 = vmul.f32 %v1879, 0.5
      %v1912 = vmul.f32 %v1848, 0.70710677
      %v1913 = vmul.f32 %v1849, 0.70710677
      %v1914 = vmul.f32 %v1850, 0.70710677
      %v1915 = vmul.f32 %v1851, 0.70710677
      %v1916 = vmul.f32 %v1852, 0.70710677
      %v1917 = vmul.f32 %v1853, 0.70710677
      %v1918 = vmul.f32 %v1854, 0.70710677
      %v1919 = vmul.f32 %v1855, 0.70710677
      %v1920 = vmul.f32 %v1856, 0.70710677
      %v1921 = vmul.f32 %v1857, 0.70710677
      %v1922 = vmul.f32 %v1858, 0.70710677
      %v1923 = vmul.f32 %v1859, 0.70710677
      %v1924 = vmul.f32 %v1860, 0.70710677
      %v1925 = vmul.f32 %v1861, 0.70710677
      %v1926 = vmul.f32 %v1862, 0.70710677
      %v1927 = vmul.f32 %v1863, 0.70710677
      %v1928 = vmul.f32 %v1864, 0.70710677
      %v1929 = vmul.f32 %v1865, 0.70710677
      %v1930 = vmul.f32 %v1866, 0.70710677
      %v1931 = vmul.f32 %v1867, 0.70710677
      %v1932 = vmul.f32 %v1868, 0.70710677
      %v1933 = vmul.f32 %v1869, 0.70710677
      %v1934 = vmul.f32 %v1870, 0.70710677
      %v1935 = vmul.f32 %v1871, 0.70710677
      %v1936 = vmul.f32 %v1872, 0.70710677
      %v1937 = vmul.f32 %v1873, 0.70710677
      %v1938 = vmul.f32 %v1874, 0.70710677
      %v1939 = vmul.f32 %v1875, 0.70710677
      %v1940 = vmul.f32 %v1876, 0.70710677
      %v1941 = vmul.f32 %v1877, 0.70710677
      %v1942 = vmul.f32 %v1878, 0.70710677
      %v1943 = vmul.f32 %v1879, 0.70710677
      %v1944 = vmul.f32 %v1912, %v1912
      %v1945 = vmin.f32 16.0, %v1944
      %v1946 = vmul.f32 %v1945, 2.1237322e-06
      %v1947 = vadd.f32 %v1946, 0.00028619796
      %v1948 = vmul.f32 %v1945, %v1947
      %v1949 = vadd.f32 %v1948, 0.0036580483
      %v1950 = vmul.f32 %v1945, %v1949
      %v1951 = vadd.f32 %v1950, 0.05243302
      %v1952 = vmul.f32 %v1945, %v1951
      %v1953 = vadd.f32 %v1952, 0.18741608
      %v1954 = vmul.f32 %v1945, %v1953
      %v1955 = vadd.f32 %v1954, 1.1283791
      %v1956 = vmul.f32 %v1912, %v1955
      %v1957 = vmul.f32 %v1945, 3.8918573e-05
      %v1958 = vadd.f32 %v1957, 0.001143296
      %v1959 = vmul.f32 %v1945, %v1958
      %v1960 = vadd.f32 %v1959, 0.014752088
      %v1961 = vmul.f32 %v1945, %v1960
      %v1962 = vadd.f32 %v1961, 0.112945676
      %v1963 = vmul.f32 %v1945, %v1962
      %v1964 = vadd.f32 %v1963, 0.4994258
      %v1965 = vmul.f32 %v1945, %v1964
      %v1966 = vadd.f32 %v1965, 1.0
      %v1967 = vrcp.pop %v1966
      %v1968 = vmul.f32 %v1966, %v1967
      %v1969 = vsub.f32 1.0, %v1968
      %v1970 = vmul.f32 %v1967, %v1969
      %v1971 = vadd.f32 %v1967, %v1970
      %vm1972 = vweird.f32 %v1966
      %vm1973 = vweird.f32 %v1967
      %vm1974 = vmor %vm1972, %vm1973
      %v1975 = vsel %vm1974, %v1967, %v1971
      %v1976 = vand.u32 2147483647, %v1966
      %vm1977 = vcmp.eq.f32.partialorder %v1976, 8.507059e+37
      %v1978 = vand.u32 %v1966, 2147483648
      %v1979 = vor.u32 1.1754944e-38, %v1978
      %v1980 = vsel %vm1977, %v1979, %v1975
      %v1981 = vmul.f32 %v1956, %v1980
      %v1982 = vmin.f32 %v1981, 1.0
      %v1983 = vmax.f32 %v1982, -1.0
      %v1984 = vmul.f32 %v1913, %v1913
      %v1985 = vmin.f32 16.0, %v1984
      %v1986 = vmul.f32 %v1985, 2.1237322e-06
      %v1987 = vadd.f32 %v1986, 0.00028619796
      %v1988 = vmul.f32 %v1985, %v1987
      %v1989 = vadd.f32 %v1988, 0.0036580483
      %v1990 = vmul.f32 %v1985, %v1989
      %v1991 = vadd.f32 %v1990, 0.05243302
      %v1992 = vmul.f32 %v1985, %v1991
      %v1993 = vadd.f32 %v1992, 0.18741608
      %v1994 = vmul.f32 %v1985, %v1993
      %v1995 = vadd.f32 %v1994, 1.1283791
      %v1996 = vmul.f32 %v1913, %v1995
      %v1997 = vmul.f32 %v1985, 3.8918573e-05
      %v1998 = vadd.f32 %v1997, 0.001143296
      %v1999 = vmul.f32 %v1985, %v1998
      %v2000 = vadd.f32 %v1999, 0.014752088
      %v2001 = vmul.f32 %v1985, %v2000
      %v2002 = vadd.f32 %v2001, 0.112945676
      %v2003 = vmul.f32 %v1985, %v2002
      %v2004 = vadd.f32 %v2003, 0.4994258
      %v2005 = vmul.f32 %v1985, %v2004
      %v2006 = vadd.f32 %v2005, 1.0
      %v2007 = vrcp.pop %v2006
      %v2008 = vmul.f32 %v2006, %v2007
      %v2009 = vsub.f32 1.0, %v2008
      %v2010 = vmul.f32 %v2007, %v2009
      %v2011 = vadd.f32 %v2007, %v2010
      %vm2012 = vweird.f32 %v2006
      %vm2013 = vweird.f32 %v2007
      %vm2014 = vmor %vm2012, %vm2013
      %v2015 = vsel %vm2014, %v2007, %v2011
      %v2016 = vand.u32 2147483647, %v2006
      %vm2017 = vcmp.eq.f32.partialorder %v2016, 8.507059e+37
      %v2018 = vand.u32 %v2006, 2147483648
      %v2019 = vor.u32 1.1754944e-38, %v2018
      %v2020 = vsel %vm2017, %v2019, %v2015
      %v2021 = vmul.f32 %v1996, %v2020
      %v2022 = vmin.f32 %v2021, 1.0
      %v2023 = vmax.f32 %v2022, -1.0
      %v2024 = vmul.f32 %v1914, %v1914
      %v2025 = vmin.f32 16.0, %v2024
      %v2026 = vmul.f32 %v2025, 2.1237322e-06
      %v2027 = vadd.f32 %v2026, 0.00028619796
      %v2028 = vmul.f32 %v2025, %v2027
      %v2029 = vadd.f32 %v2028, 0.0036580483
      %v2030 = vmul.f32 %v2025, %v2029
      %v2031 = vadd.f32 %v2030, 0.05243302
      %v2032 = vmul.f32 %v2025, %v2031
      %v2033 = vadd.f32 %v2032, 0.18741608
      %v2034 = vmul.f32 %v2025, %v2033
      %v2035 = vadd.f32 %v2034, 1.1283791
      %v2036 = vmul.f32 %v1914, %v2035
      %v2037 = vmul.f32 %v2025, 3.8918573e-05
      %v2038 = vadd.f32 %v2037, 0.001143296
      %v2039 = vmul.f32 %v2025, %v2038
      %v2040 = vadd.f32 %v2039, 0.014752088
      %v2041 = vmul.f32 %v2025, %v2040
      %v2042 = vadd.f32 %v2041, 0.112945676
      %v2043 = vmul.f32 %v2025, %v2042
      %v2044 = vadd.f32 %v2043, 0.4994258
      %v2045 = vmul.f32 %v2025, %v2044
      %v2046 = vadd.f32 %v2045, 1.0
      %v2047 = vrcp.pop %v2046
      %v2048 = vmul.f32 %v2046, %v2047
      %v2049 = vsub.f32 1.0, %v2048
      %v2050 = vmul.f32 %v2047, %v2049
      %v2051 = vadd.f32 %v2047, %v2050
      %vm2052 = vweird.f32 %v2046
      %vm2053 = vweird.f32 %v2047
      %vm2054 = vmor %vm2052, %vm2053
      %v2055 = vsel %vm2054, %v2047, %v2051
      %v2056 = vand.u32 2147483647, %v2046
      %vm2057 = vcmp.eq.f32.partialorder %v2056, 8.507059e+37
      %v2058 = vand.u32 %v2046, 2147483648
      %v2059 = vor.u32 1.1754944e-38, %v2058
      %v2060 = vsel %vm2057, %v2059, %v2055
      %v2061 = vmul.f32 %v2036, %v2060
      %v2062 = vmin.f32 %v2061, 1.0
      %v2063 = vmax.f32 %v2062, -1.0
      %v2064 = vmul.f32 %v1915, %v1915
      %v2065 = vmin.f32 16.0, %v2064
      %v2066 = vmul.f32 %v2065, 2.1237322e-06
      %v2067 = vadd.f32 %v2066, 0.00028619796
      %v2068 = vmul.f32 %v2065, %v2067
      %v2069 = vadd.f32 %v2068, 0.0036580483
      %v2070 = vmul.f32 %v2065, %v2069
      %v2071 = vadd.f32 %v2070, 0.05243302
      %v2072 = vmul.f32 %v2065, %v2071
      %v2073 = vadd.f32 %v2072, 0.18741608
      %v2074 = vmul.f32 %v2065, %v2073
      %v2075 = vadd.f32 %v2074, 1.1283791
      %v2076 = vmul.f32 %v1915, %v2075
      %v2077 = vmul.f32 %v2065, 3.8918573e-05
      %v2078 = vadd.f32 %v2077, 0.001143296
      %v2079 = vmul.f32 %v2065, %v2078
      %v2080 = vadd.f32 %v2079, 0.014752088
      %v2081 = vmul.f32 %v2065, %v2080
      %v2082 = vadd.f32 %v2081, 0.112945676
      %v2083 = vmul.f32 %v2065, %v2082
      %v2084 = vadd.f32 %v2083, 0.4994258
      %v2085 = vmul.f32 %v2065, %v2084
      %v2086 = vadd.f32 %v2085, 1.0
      %v2087 = vrcp.pop %v2086
      %v2088 = vmul.f32 %v2086, %v2087
      %v2089 = vsub.f32 1.0, %v2088
      %v2090 = vmul.f32 %v2087, %v2089
      %v2091 = vadd.f32 %v2087, %v2090
      %vm2092 = vweird.f32 %v2086
      %vm2093 = vweird.f32 %v2087
      %vm2094 = vmor %vm2092, %vm2093
      %v2095 = vsel %vm2094, %v2087, %v2091
      %v2096 = vand.u32 2147483647, %v2086
      %vm2097 = vcmp.eq.f32.partialorder %v2096, 8.507059e+37
      %v2098 = vand.u32 %v2086, 2147483648
      %v2099 = vor.u32 1.1754944e-38, %v2098
      %v2100 = vsel %vm2097, %v2099, %v2095
      %v2101 = vmul.f32 %v2076, %v2100
      %v2102 = vmin.f32 %v2101, 1.0
      %v2103 = vmax.f32 %v2102, -1.0
      %v2104 = vmul.f32 %v1916, %v1916
      %v2105 = vmin.f32 16.0, %v2104
      %v2106 = vmul.f32 %v2105, 2.1237322e-06
      %v2107 = vadd.f32 %v2106, 0.00028619796
      %v2108 = vmul.f32 %v2105, %v2107
      %v2109 = vadd.f32 %v2108, 0.0036580483
      %v2110 = vmul.f32 %v2105, %v2109
      %v2111 = vadd.f32 %v2110, 0.05243302
      %v2112 = vmul.f32 %v2105, %v2111
      %v2113 = vadd.f32 %v2112, 0.18741608
      %v2114 = vmul.f32 %v2105, %v2113
      %v2115 = vadd.f32 %v2114, 1.1283791
      %v2116 = vmul.f32 %v1916, %v2115
      %v2117 = vmul.f32 %v2105, 3.8918573e-05
      %v2118 = vadd.f32 %v2117, 0.001143296
      %v2119 = vmul.f32 %v2105, %v2118
      %v2120 = vadd.f32 %v2119, 0.014752088
      %v2121 = vmul.f32 %v2105, %v2120
      %v2122 = vadd.f32 %v2121, 0.112945676
      %v2123 = vmul.f32 %v2105, %v2122
      %v2124 = vadd.f32 %v2123, 0.4994258
      %v2125 = vmul.f32 %v2105, %v2124
      %v2126 = vadd.f32 %v2125, 1.0
      %v2127 = vrcp.pop %v2126
      %v2128 = vmul.f32 %v2126, %v2127
      %v2129 = vsub.f32 1.0, %v2128
      %v2130 = vmul.f32 %v2127, %v2129
      %v2131 = vadd.f32 %v2127, %v2130
      %vm2132 = vweird.f32 %v2126
      %vm2133 = vweird.f32 %v2127
      %vm2134 = vmor %vm2132, %vm2133
      %v2135 = vsel %vm2134, %v2127, %v2131
      %v2136 = vand.u32 2147483647, %v2126
      %vm2137 = vcmp.eq.f32.partialorder %v2136, 8.507059e+37
      %v2138 = vand.u32 %v2126, 2147483648
      %v2139 = vor.u32 1.1754944e-38, %v2138
      %v2140 = vsel %vm2137, %v2139, %v2135
      %v2141 = vmul.f32 %v2116, %v2140
      %v2142 = vmin.f32 %v2141, 1.0
      %v2143 = vmax.f32 %v2142, -1.0
      %v2144 = vmul.f32 %v1917, %v1917
      %v2145 = vmin.f32 16.0, %v2144
      %v2146 = vmul.f32 %v2145, 2.1237322e-06
      %v2147 = vadd.f32 %v2146, 0.00028619796
      %v2148 = vmul.f32 %v2145, %v2147
      %v2149 = vadd.f32 %v2148, 0.0036580483
      %v2150 = vmul.f32 %v2145, %v2149
      %v2151 = vadd.f32 %v2150, 0.05243302
      %v2152 = vmul.f32 %v2145, %v2151
      %v2153 = vadd.f32 %v2152, 0.18741608
      %v2154 = vmul.f32 %v2145, %v2153
      %v2155 = vadd.f32 %v2154, 1.1283791
      %v2156 = vmul.f32 %v1917, %v2155
      %v2157 = vmul.f32 %v2145, 3.8918573e-05
      %v2158 = vadd.f32 %v2157, 0.001143296
      %v2159 = vmul.f32 %v2145, %v2158
      %v2160 = vadd.f32 %v2159, 0.014752088
      %v2161 = vmul.f32 %v2145, %v2160
      %v2162 = vadd.f32 %v2161, 0.112945676
      %v2163 = vmul.f32 %v2145, %v2162
      %v2164 = vadd.f32 %v2163, 0.4994258
      %v2165 = vmul.f32 %v2145, %v2164
      %v2166 = vadd.f32 %v2165, 1.0
      %v2167 = vrcp.pop %v2166
      %v2168 = vmul.f32 %v2166, %v2167
      %v2169 = vsub.f32 1.0, %v2168
      %v2170 = vmul.f32 %v2167, %v2169
      %v2171 = vadd.f32 %v2167, %v2170
      %vm2172 = vweird.f32 %v2166
      %vm2173 = vweird.f32 %v2167
      %vm2174 = vmor %vm2172, %vm2173
      %v2175 = vsel %vm2174, %v2167, %v2171
      %v2176 = vand.u32 2147483647, %v2166
      %vm2177 = vcmp.eq.f32.partialorder %v2176, 8.507059e+37
      %v2178 = vand.u32 %v2166, 2147483648
      %v2179 = vor.u32 1.1754944e-38, %v2178
      %v2180 = vsel %vm2177, %v2179, %v2175
      %v2181 = vmul.f32 %v2156, %v2180
      %v2182 = vmin.f32 %v2181, 1.0
      %v2183 = vmax.f32 %v2182, -1.0
      %v2184 = vmul.f32 %v1918, %v1918
      %v2185 = vmin.f32 16.0, %v2184
      %v2186 = vmul.f32 %v2185, 2.1237322e-06
      %v2187 = vadd.f32 %v2186, 0.00028619796
      %v2188 = vmul.f32 %v2185, %v2187
      %v2189 = vadd.f32 %v2188, 0.0036580483
      %v2190 = vmul.f32 %v2185, %v2189
      %v2191 = vadd.f32 %v2190, 0.05243302
      %v2192 = vmul.f32 %v2185, %v2191
      %v2193 = vadd.f32 %v2192, 0.18741608
      %v2194 = vmul.f32 %v2185, %v2193
      %v2195 = vadd.f32 %v2194, 1.1283791
      %v2196 = vmul.f32 %v1918, %v2195
      %v2197 = vmul.f32 %v2185, 3.8918573e-05
      %v2198 = vadd.f32 %v2197, 0.001143296
      %v2199 = vmul.f32 %v2185, %v2198
      %v2200 = vadd.f32 %v2199, 0.014752088
      %v2201 = vmul.f32 %v2185, %v2200
      %v2202 = vadd.f32 %v2201, 0.112945676
      %v2203 = vmul.f32 %v2185, %v2202
      %v2204 = vadd.f32 %v2203, 0.4994258
      %v2205 = vmul.f32 %v2185, %v2204
      %v2206 = vadd.f32 %v2205, 1.0
      %v2207 = vrcp.pop %v2206
      %v2208 = vmul.f32 %v2206, %v2207
      %v2209 = vsub.f32 1.0, %v2208
      %v2210 = vmul.f32 %v2207, %v2209
      %v2211 = vadd.f32 %v2207, %v2210
      %vm2212 = vweird.f32 %v2206
      %vm2213 = vweird.f32 %v2207
      %vm2214 = vmor %vm2212, %vm2213
      %v2215 = vsel %vm2214, %v2207, %v2211
      %v2216 = vand.u32 2147483647, %v2206
      %vm2217 = vcmp.eq.f32.partialorder %v2216, 8.507059e+37
      %v2218 = vand.u32 %v2206, 2147483648
      %v2219 = vor.u32 1.1754944e-38, %v2218
      %v2220 = vsel %vm2217, %v2219, %v2215
      %v2221 = vmul.f32 %v2196, %v2220
      %v2222 = vmin.f32 %v2221, 1.0
      %v2223 = vmax.f32 %v2222, -1.0
      %v2224 = vmul.f32 %v1919, %v1919
      %v2225 = vmin.f32 16.0, %v2224
      %v2226 = vmul.f32 %v2225, 2.1237322e-06
      %v2227 = vadd.f32 %v2226, 0.00028619796
      %v2228 = vmul.f32 %v2225, %v2227
      %v2229 = vadd.f32 %v2228, 0.0036580483
      %v2230 = vmul.f32 %v2225, %v2229
      %v2231 = vadd.f32 %v2230, 0.05243302
      %v2232 = vmul.f32 %v2225, %v2231
      %v2233 = vadd.f32 %v2232, 0.18741608
      %v2234 = vmul.f32 %v2225, %v2233
      %v2235 = vadd.f32 %v2234, 1.1283791
      %v2236 = vmul.f32 %v1919, %v2235
      %v2237 = vmul.f32 %v2225, 3.8918573e-05
      %v2238 = vadd.f32 %v2237, 0.001143296
      %v2239 = vmul.f32 %v2225, %v2238
      %v2240 = vadd.f32 %v2239, 0.014752088
      %v2241 = vmul.f32 %v2225, %v2240
      %v2242 = vadd.f32 %v2241, 0.112945676
      %v2243 = vmul.f32 %v2225, %v2242
      %v2244 = vadd.f32 %v2243, 0.4994258
      %v2245 = vmul.f32 %v2225, %v2244
      %v2246 = vadd.f32 %v2245, 1.0
      %v2247 = vrcp.pop %v2246
      %v2248 = vmul.f32 %v2246, %v2247
      %v2249 = vsub.f32 1.0, %v2248
      %v2250 = vmul.f32 %v2247, %v2249
      %v2251 = vadd.f32 %v2247, %v2250
      %vm2252 = vweird.f32 %v2246
      %vm2253 = vweird.f32 %v2247
      %vm2254 = vmor %vm2252, %vm2253
      %v2255 = vsel %vm2254, %v2247, %v2251
      %v2256 = vand.u32 2147483647, %v2246
      %vm2257 = vcmp.eq.f32.partialorder %v2256, 8.507059e+37
      %v2258 = vand.u32 %v2246, 2147483648
      %v2259 = vor.u32 1.1754944e-38, %v2258
      %v2260 = vsel %vm2257, %v2259, %v2255
      %v2261 = vmul.f32 %v2236, %v2260
      %v2262 = vmin.f32 %v2261, 1.0
      %v2263 = vmax.f32 %v2262, -1.0
      %v2264 = vmul.f32 %v1920, %v1920
      %v2265 = vmin.f32 16.0, %v2264
      %v2266 = vmul.f32 %v2265, 2.1237322e-06
      %v2267 = vadd.f32 %v2266, 0.00028619796
      %v2268 = vmul.f32 %v2265, %v2267
      %v2269 = vadd.f32 %v2268, 0.0036580483
      %v2270 = vmul.f32 %v2265, %v2269
      %v2271 = vadd.f32 %v2270, 0.05243302
      %v2272 = vmul.f32 %v2265, %v2271
      %v2273 = vadd.f32 %v2272, 0.18741608
      %v2274 = vmul.f32 %v2265, %v2273
      %v2275 = vadd.f32 %v2274, 1.1283791
      %v2276 = vmul.f32 %v1920, %v2275
      %v2277 = vmul.f32 %v2265, 3.8918573e-05
      %v2278 = vadd.f32 %v2277, 0.001143296
      %v2279 = vmul.f32 %v2265, %v2278
      %v2280 = vadd.f32 %v2279, 0.014752088
      %v2281 = vmul.f32 %v2265, %v2280
      %v2282 = vadd.f32 %v2281, 0.112945676
      %v2283 = vmul.f32 %v2265, %v2282
      %v2284 = vadd.f32 %v2283, 0.4994258
      %v2285 = vmul.f32 %v2265, %v2284
      %v2286 = vadd.f32 %v2285, 1.0
      %v2287 = vrcp.pop %v2286
      %v2288 = vmul.f32 %v2286, %v2287
      %v2289 = vsub.f32 1.0, %v2288
      %v2290 = vmul.f32 %v2287, %v2289
      %v2291 = vadd.f32 %v2287, %v2290
      %vm2292 = vweird.f32 %v2286
      %vm2293 = vweird.f32 %v2287
      %vm2294 = vmor %vm2292, %vm2293
      %v2295 = vsel %vm2294, %v2287, %v2291
      %v2296 = vand.u32 2147483647, %v2286
      %vm2297 = vcmp.eq.f32.partialorder %v2296, 8.507059e+37
      %v2298 = vand.u32 %v2286, 2147483648
      %v2299 = vor.u32 1.1754944e-38, %v2298
      %v2300 = vsel %vm2297, %v2299, %v2295
      %v2301 = vmul.f32 %v2276, %v2300
      %v2302 = vmin.f32 %v2301, 1.0
      %v2303 = vmax.f32 %v2302, -1.0
      %v2304 = vmul.f32 %v1921, %v1921
      %v2305 = vmin.f32 16.0, %v2304
      %v2306 = vmul.f32 %v2305, 2.1237322e-06
      %v2307 = vadd.f32 %v2306, 0.00028619796
      %v2308 = vmul.f32 %v2305, %v2307
      %v2309 = vadd.f32 %v2308, 0.0036580483
      %v2310 = vmul.f32 %v2305, %v2309
      %v2311 = vadd.f32 %v2310, 0.05243302
      %v2312 = vmul.f32 %v2305, %v2311
      %v2313 = vadd.f32 %v2312, 0.18741608
      %v2314 = vmul.f32 %v2305, %v2313
      %v2315 = vadd.f32 %v2314, 1.1283791
      %v2316 = vmul.f32 %v1921, %v2315
      %v2317 = vmul.f32 %v2305, 3.8918573e-05
      %v2318 = vadd.f32 %v2317, 0.001143296
      %v2319 = vmul.f32 %v2305, %v2318
      %v2320 = vadd.f32 %v2319, 0.014752088
      %v2321 = vmul.f32 %v2305, %v2320
      %v2322 = vadd.f32 %v2321, 0.112945676
      %v2323 = vmul.f32 %v2305, %v2322
      %v2324 = vadd.f32 %v2323, 0.4994258
      %v2325 = vmul.f32 %v2305, %v2324
      %v2326 = vadd.f32 %v2325, 1.0
      %v2327 = vrcp.pop %v2326
      %v2328 = vmul.f32 %v2326, %v2327
      %v2329 = vsub.f32 1.0, %v2328
      %v2330 = vmul.f32 %v2327, %v2329
      %v2331 = vadd.f32 %v2327, %v2330
      %vm2332 = vweird.f32 %v2326
      %vm2333 = vweird.f32 %v2327
      %vm2334 = vmor %vm2332, %vm2333
      %v2335 = vsel %vm2334, %v2327, %v2331
      %v2336 = vand.u32 2147483647, %v2326
      %vm2337 = vcmp.eq.f32.partialorder %v2336, 8.507059e+37
      %v2338 = vand.u32 %v2326, 2147483648
      %v2339 = vor.u32 1.1754944e-38, %v2338
      %v2340 = vsel %vm2337, %v2339, %v2335
      %v2341 = vmul.f32 %v2316, %v2340
      %v2342 = vmin.f32 %v2341, 1.0
      %v2343 = vmax.f32 %v2342, -1.0
      %v2344 = vmul.f32 %v1922, %v1922
      %v2345 = vmin.f32 16.0, %v2344
      %v2346 = vmul.f32 %v2345, 2.1237322e-06
      %v2347 = vadd.f32 %v2346, 0.00028619796
      %v2348 = vmul.f32 %v2345, %v2347
      %v2349 = vadd.f32 %v2348, 0.0036580483
      %v2350 = vmul.f32 %v2345, %v2349
      %v2351 = vadd.f32 %v2350, 0.05243302
      %v2352 = vmul.f32 %v2345, %v2351
      %v2353 = vadd.f32 %v2352, 0.18741608
      %v2354 = vmul.f32 %v2345, %v2353
      %v2355 = vadd.f32 %v2354, 1.1283791
      %v2356 = vmul.f32 %v1922, %v2355
      %v2357 = vmul.f32 %v2345, 3.8918573e-05
      %v2358 = vadd.f32 %v2357, 0.001143296
      %v2359 = vmul.f32 %v2345, %v2358
      %v2360 = vadd.f32 %v2359, 0.014752088
      %v2361 = vmul.f32 %v2345, %v2360
      %v2362 = vadd.f32 %v2361, 0.112945676
      %v2363 = vmul.f32 %v2345, %v2362
      %v2364 = vadd.f32 %v2363, 0.4994258
      %v2365 = vmul.f32 %v2345, %v2364
      %v2366 = vadd.f32 %v2365, 1.0
      %v2367 = vrcp.pop %v2366
      %v2368 = vmul.f32 %v2366, %v2367
      %v2369 = vsub.f32 1.0, %v2368
      %v2370 = vmul.f32 %v2367, %v2369
      %v2371 = vadd.f32 %v2367, %v2370
      %vm2372 = vweird.f32 %v2366
      %vm2373 = vweird.f32 %v2367
      %vm2374 = vmor %vm2372, %vm2373
      %v2375 = vsel %vm2374, %v2367, %v2371
      %v2376 = vand.u32 2147483647, %v2366
      %vm2377 = vcmp.eq.f32.partialorder %v2376, 8.507059e+37
      %v2378 = vand.u32 %v2366, 2147483648
      %v2379 = vor.u32 1.1754944e-38, %v2378
      %v2380 = vsel %vm2377, %v2379, %v2375
      %v2381 = vmul.f32 %v2356, %v2380
      %v2382 = vmin.f32 %v2381, 1.0
      %v2383 = vmax.f32 %v2382, -1.0
      %v2384 = vmul.f32 %v1923, %v1923
      %v2385 = vmin.f32 16.0, %v2384
      %v2386 = vmul.f32 %v2385, 2.1237322e-06
      %v2387 = vadd.f32 %v2386, 0.00028619796
      %v2388 = vmul.f32 %v2385, %v2387
      %v2389 = vadd.f32 %v2388, 0.0036580483
      %v2390 = vmul.f32 %v2385, %v2389
      %v2391 = vadd.f32 %v2390, 0.05243302
      %v2392 = vmul.f32 %v2385, %v2391
      %v2393 = vadd.f32 %v2392, 0.18741608
      %v2394 = vmul.f32 %v2385, %v2393
      %v2395 = vadd.f32 %v2394, 1.1283791
      %v2396 = vmul.f32 %v1923, %v2395
      %v2397 = vmul.f32 %v2385, 3.8918573e-05
      %v2398 = vadd.f32 %v2397, 0.001143296
      %v2399 = vmul.f32 %v2385, %v2398
      %v2400 = vadd.f32 %v2399, 0.014752088
      %v2401 = vmul.f32 %v2385, %v2400
      %v2402 = vadd.f32 %v2401, 0.112945676
      %v2403 = vmul.f32 %v2385, %v2402
      %v2404 = vadd.f32 %v2403, 0.4994258
      %v2405 = vmul.f32 %v2385, %v2404
      %v2406 = vadd.f32 %v2405, 1.0
      %v2407 = vrcp.pop %v2406
      %v2408 = vmul.f32 %v2406, %v2407
      %v2409 = vsub.f32 1.0, %v2408
      %v2410 = vmul.f32 %v2407, %v2409
      %v2411 = vadd.f32 %v2407, %v2410
      %vm2412 = vweird.f32 %v2406
      %vm2413 = vweird.f32 %v2407
      %vm2414 = vmor %vm2412, %vm2413
      %v2415 = vsel %vm2414, %v2407, %v2411
      %v2416 = vand.u32 2147483647, %v2406
      %vm2417 = vcmp.eq.f32.partialorder %v2416, 8.507059e+37
      %v2418 = vand.u32 %v2406, 2147483648
      %v2419 = vor.u32 1.1754944e-38, %v2418
      %v2420 = vsel %vm2417, %v2419, %v2415
      %v2421 = vmul.f32 %v2396, %v2420
      %v2422 = vmin.f32 %v2421, 1.0
      %v2423 = vmax.f32 %v2422, -1.0
      %v2424 = vmul.f32 %v1924, %v1924
      %v2425 = vmin.f32 16.0, %v2424
      %v2426 = vmul.f32 %v2425, 2.1237322e-06
      %v2427 = vadd.f32 %v2426, 0.00028619796
      %v2428 = vmul.f32 %v2425, %v2427
      %v2429 = vadd.f32 %v2428, 0.0036580483
      %v2430 = vmul.f32 %v2425, %v2429
      %v2431 = vadd.f32 %v2430, 0.05243302
      %v2432 = vmul.f32 %v2425, %v2431
      %v2433 = vadd.f32 %v2432, 0.18741608
      %v2434 = vmul.f32 %v2425, %v2433
      %v2435 = vadd.f32 %v2434, 1.1283791
      %v2436 = vmul.f32 %v1924, %v2435
      %v2437 = vmul.f32 %v2425, 3.8918573e-05
      %v2438 = vadd.f32 %v2437, 0.001143296
      %v2439 = vmul.f32 %v2425, %v2438
      %v2440 = vadd.f32 %v2439, 0.014752088
      %v2441 = vmul.f32 %v2425, %v2440
      %v2442 = vadd.f32 %v2441, 0.112945676
      %v2443 = vmul.f32 %v2425, %v2442
      %v2444 = vadd.f32 %v2443, 0.4994258
      %v2445 = vmul.f32 %v2425, %v2444
      %v2446 = vadd.f32 %v2445, 1.0
      %v2447 = vrcp.pop %v2446
      %v2448 = vmul.f32 %v2446, %v2447
      %v2449 = vsub.f32 1.0, %v2448
      %v2450 = vmul.f32 %v2447, %v2449
      %v2451 = vadd.f32 %v2447, %v2450
      %vm2452 = vweird.f32 %v2446
      %vm2453 = vweird.f32 %v2447
      %vm2454 = vmor %vm2452, %vm2453
      %v2455 = vsel %vm2454, %v2447, %v2451
      %v2456 = vand.u32 2147483647, %v2446
      %vm2457 = vcmp.eq.f32.partialorder %v2456, 8.507059e+37
      %v2458 = vand.u32 %v2446, 2147483648
      %v2459 = vor.u32 1.1754944e-38, %v2458
      %v2460 = vsel %vm2457, %v2459, %v2455
      %v2461 = vmul.f32 %v2436, %v2460
      %v2462 = vmin.f32 %v2461, 1.0
      %v2463 = vmax.f32 %v2462, -1.0
      %v2464 = vmul.f32 %v1925, %v1925
      %v2465 = vmin.f32 16.0, %v2464
      %v2466 = vmul.f32 %v2465, 2.1237322e-06
      %v2467 = vadd.f32 %v2466, 0.00028619796
      %v2468 = vmul.f32 %v2465, %v2467
      %v2469 = vadd.f32 %v2468, 0.0036580483
      %v2470 = vmul.f32 %v2465, %v2469
      %v2471 = vadd.f32 %v2470, 0.05243302
      %v2472 = vmul.f32 %v2465, %v2471
      %v2473 = vadd.f32 %v2472, 0.18741608
      %v2474 = vmul.f32 %v2465, %v2473
      %v2475 = vadd.f32 %v2474, 1.1283791
      %v2476 = vmul.f32 %v1925, %v2475
      %v2477 = vmul.f32 %v2465, 3.8918573e-05
      %v2478 = vadd.f32 %v2477, 0.001143296
      %v2479 = vmul.f32 %v2465, %v2478
      %v2480 = vadd.f32 %v2479, 0.014752088
      %v2481 = vmul.f32 %v2465, %v2480
      %v2482 = vadd.f32 %v2481, 0.112945676
      %v2483 = vmul.f32 %v2465, %v2482
      %v2484 = vadd.f32 %v2483, 0.4994258
      %v2485 = vmul.f32 %v2465, %v2484
      %v2486 = vadd.f32 %v2485, 1.0
      %v2487 = vrcp.pop %v2486
      %v2488 = vmul.f32 %v2486, %v2487
      %v2489 = vsub.f32 1.0, %v2488
      %v2490 = vmul.f32 %v2487, %v2489
      %v2491 = vadd.f32 %v2487, %v2490
      %vm2492 = vweird.f32 %v2486
      %vm2493 = vweird.f32 %v2487
      %vm2494 = vmor %vm2492, %vm2493
      %v2495 = vsel %vm2494, %v2487, %v2491
      %v2496 = vand.u32 2147483647, %v2486
      %vm2497 = vcmp.eq.f32.partialorder %v2496, 8.507059e+37
      %v2498 = vand.u32 %v2486, 2147483648
      %v2499 = vor.u32 1.1754944e-38, %v2498
      %v2500 = vsel %vm2497, %v2499, %v2495
      %v2501 = vmul.f32 %v2476, %v2500
      %v2502 = vmin.f32 %v2501, 1.0
      %v2503 = vmax.f32 %v2502, -1.0
      %v2504 = vmul.f32 %v1926, %v1926
      %v2505 = vmin.f32 16.0, %v2504
      %v2506 = vmul.f32 %v2505, 2.1237322e-06
      %v2507 = vadd.f32 %v2506, 0.00028619796
      %v2508 = vmul.f32 %v2505, %v2507
      %v2509 = vadd.f32 %v2508, 0.0036580483
      %v2510 = vmul.f32 %v2505, %v2509
      %v2511 = vadd.f32 %v2510, 0.05243302
      %v2512 = vmul.f32 %v2505, %v2511
      %v2513 = vadd.f32 %v2512, 0.18741608
      %v2514 = vmul.f32 %v2505, %v2513
      %v2515 = vadd.f32 %v2514, 1.1283791
      %v2516 = vmul.f32 %v1926, %v2515
      %v2517 = vmul.f32 %v2505, 3.8918573e-05
      %v2518 = vadd.f32 %v2517, 0.001143296
      %v2519 = vmul.f32 %v2505, %v2518
      %v2520 = vadd.f32 %v2519, 0.014752088
      %v2521 = vmul.f32 %v2505, %v2520
      %v2522 = vadd.f32 %v2521, 0.112945676
      %v2523 = vmul.f32 %v2505, %v2522
      %v2524 = vadd.f32 %v2523, 0.4994258
      %v2525 = vmul.f32 %v2505, %v2524
      %v2526 = vadd.f32 %v2525, 1.0
      %v2527 = vrcp.pop %v2526
      %v2528 = vmul.f32 %v2526, %v2527
      %v2529 = vsub.f32 1.0, %v2528
      %v2530 = vmul.f32 %v2527, %v2529
      %v2531 = vadd.f32 %v2527, %v2530
      %vm2532 = vweird.f32 %v2526
      %vm2533 = vweird.f32 %v2527
      %vm2534 = vmor %vm2532, %vm2533
      %v2535 = vsel %vm2534, %v2527, %v2531
      %v2536 = vand.u32 2147483647, %v2526
      %vm2537 = vcmp.eq.f32.partialorder %v2536, 8.507059e+37
      %v2538 = vand.u32 %v2526, 2147483648
      %v2539 = vor.u32 1.1754944e-38, %v2538
      %v2540 = vsel %vm2537, %v2539, %v2535
      %v2541 = vmul.f32 %v2516, %v2540
      %v2542 = vmin.f32 %v2541, 1.0
      %v2543 = vmax.f32 %v2542, -1.0
      %v2544 = vmul.f32 %v1927, %v1927
      %v2545 = vmin.f32 16.0, %v2544
      %v2546 = vmul.f32 %v2545, 2.1237322e-06
      %v2547 = vadd.f32 %v2546, 0.00028619796
      %v2548 = vmul.f32 %v2545, %v2547
      %v2549 = vadd.f32 %v2548, 0.0036580483
      %v2550 = vmul.f32 %v2545, %v2549
      %v2551 = vadd.f32 %v2550, 0.05243302
      %v2552 = vmul.f32 %v2545, %v2551
      %v2553 = vadd.f32 %v2552, 0.18741608
      %v2554 = vmul.f32 %v2545, %v2553
      %v2555 = vadd.f32 %v2554, 1.1283791
      %v2556 = vmul.f32 %v1927, %v2555
      %v2557 = vmul.f32 %v2545, 3.8918573e-05
      %v2558 = vadd.f32 %v2557, 0.001143296
      %v2559 = vmul.f32 %v2545, %v2558
      %v2560 = vadd.f32 %v2559, 0.014752088
      %v2561 = vmul.f32 %v2545, %v2560
      %v2562 = vadd.f32 %v2561, 0.112945676
      %v2563 = vmul.f32 %v2545, %v2562
      %v2564 = vadd.f32 %v2563, 0.4994258
      %v2565 = vmul.f32 %v2545, %v2564
      %v2566 = vadd.f32 %v2565, 1.0
      %v2567 = vrcp.pop %v2566
      %v2568 = vmul.f32 %v2566, %v2567
      %v2569 = vsub.f32 1.0, %v2568
      %v2570 = vmul.f32 %v2567, %v2569
      %v2571 = vadd.f32 %v2567, %v2570
      %vm2572 = vweird.f32 %v2566
      %vm2573 = vweird.f32 %v2567
      %vm2574 = vmor %vm2572, %vm2573
      %v2575 = vsel %vm2574, %v2567, %v2571
      %v2576 = vand.u32 2147483647, %v2566
      %vm2577 = vcmp.eq.f32.partialorder %v2576, 8.507059e+37
      %v2578 = vand.u32 %v2566, 2147483648
      %v2579 = vor.u32 1.1754944e-38, %v2578
      %v2580 = vsel %vm2577, %v2579, %v2575
      %v2581 = vmul.f32 %v2556, %v2580
      %v2582 = vmin.f32 %v2581, 1.0
      %v2583 = vmax.f32 %v2582, -1.0
      %v2584 = vmul.f32 %v1928, %v1928
      %v2585 = vmin.f32 16.0, %v2584
      %v2586 = vmul.f32 %v2585, 2.1237322e-06
      %v2587 = vadd.f32 %v2586, 0.00028619796
      %v2588 = vmul.f32 %v2585, %v2587
      %v2589 = vadd.f32 %v2588, 0.0036580483
      %v2590 = vmul.f32 %v2585, %v2589
      %v2591 = vadd.f32 %v2590, 0.05243302
      %v2592 = vmul.f32 %v2585, %v2591
      %v2593 = vadd.f32 %v2592, 0.18741608
      %v2594 = vmul.f32 %v2585, %v2593
      %v2595 = vadd.f32 %v2594, 1.1283791
      %v2596 = vmul.f32 %v1928, %v2595
      %v2597 = vmul.f32 %v2585, 3.8918573e-05
      %v2598 = vadd.f32 %v2597, 0.001143296
      %v2599 = vmul.f32 %v2585, %v2598
      %v2600 = vadd.f32 %v2599, 0.014752088
      %v2601 = vmul.f32 %v2585, %v2600
      %v2602 = vadd.f32 %v2601, 0.112945676
      %v2603 = vmul.f32 %v2585, %v2602
      %v2604 = vadd.f32 %v2603, 0.4994258
      %v2605 = vmul.f32 %v2585, %v2604
      %v2606 = vadd.f32 %v2605, 1.0
      %v2607 = vrcp.pop %v2606
      %v2608 = vmul.f32 %v2606, %v2607
      %v2609 = vsub.f32 1.0, %v2608
      %v2610 = vmul.f32 %v2607, %v2609
      %v2611 = vadd.f32 %v2607, %v2610
      %vm2612 = vweird.f32 %v2606
      %vm2613 = vweird.f32 %v2607
      %vm2614 = vmor %vm2612, %vm2613
      %v2615 = vsel %vm2614, %v2607, %v2611
      %v2616 = vand.u32 2147483647, %v2606
      %vm2617 = vcmp.eq.f32.partialorder %v2616, 8.507059e+37
      %v2618 = vand.u32 %v2606, 2147483648
      %v2619 = vor.u32 1.1754944e-38, %v2618
      %v2620 = vsel %vm2617, %v2619, %v2615
      %v2621 = vmul.f32 %v2596, %v2620
      %v2622 = vmin.f32 %v2621, 1.0
      %v2623 = vmax.f32 %v2622, -1.0
      %v2624 = vmul.f32 %v1929, %v1929
      %v2625 = vmin.f32 16.0, %v2624
      %v2626 = vmul.f32 %v2625, 2.1237322e-06
      %v2627 = vadd.f32 %v2626, 0.00028619796
      %v2628 = vmul.f32 %v2625, %v2627
      %v2629 = vadd.f32 %v2628, 0.0036580483
      %v2630 = vmul.f32 %v2625, %v2629
      %v2631 = vadd.f32 %v2630, 0.05243302
      %v2632 = vmul.f32 %v2625, %v2631
      %v2633 = vadd.f32 %v2632, 0.18741608
      %v2634 = vmul.f32 %v2625, %v2633
      %v2635 = vadd.f32 %v2634, 1.1283791
      %v2636 = vmul.f32 %v1929, %v2635
      %v2637 = vmul.f32 %v2625, 3.8918573e-05
      %v2638 = vadd.f32 %v2637, 0.001143296
      %v2639 = vmul.f32 %v2625, %v2638
      %v2640 = vadd.f32 %v2639, 0.014752088
      %v2641 = vmul.f32 %v2625, %v2640
      %v2642 = vadd.f32 %v2641, 0.112945676
      %v2643 = vmul.f32 %v2625, %v2642
      %v2644 = vadd.f32 %v2643, 0.4994258
      %v2645 = vmul.f32 %v2625, %v2644
      %v2646 = vadd.f32 %v2645, 1.0
      %v2647 = vrcp.pop %v2646
      %v2648 = vmul.f32 %v2646, %v2647
      %v2649 = vsub.f32 1.0, %v2648
      %v2650 = vmul.f32 %v2647, %v2649
      %v2651 = vadd.f32 %v2647, %v2650
      %vm2652 = vweird.f32 %v2646
      %vm2653 = vweird.f32 %v2647
      %vm2654 = vmor %vm2652, %vm2653
      %v2655 = vsel %vm2654, %v2647, %v2651
      %v2656 = vand.u32 2147483647, %v2646
      %vm2657 = vcmp.eq.f32.partialorder %v2656, 8.507059e+37
      %v2658 = vand.u32 %v2646, 2147483648
      %v2659 = vor.u32 1.1754944e-38, %v2658
      %v2660 = vsel %vm2657, %v2659, %v2655
      %v2661 = vmul.f32 %v2636, %v2660
      %v2662 = vmin.f32 %v2661, 1.0
      %v2663 = vmax.f32 %v2662, -1.0
      %v2664 = vmul.f32 %v1930, %v1930
      %v2665 = vmin.f32 16.0, %v2664
      %v2666 = vmul.f32 %v2665, 2.1237322e-06
      %v2667 = vadd.f32 %v2666, 0.00028619796
      %v2668 = vmul.f32 %v2665, %v2667
      %v2669 = vadd.f32 %v2668, 0.0036580483
      %v2670 = vmul.f32 %v2665, %v2669
      %v2671 = vadd.f32 %v2670, 0.05243302
      %v2672 = vmul.f32 %v2665, %v2671
      %v2673 = vadd.f32 %v2672, 0.18741608
      %v2674 = vmul.f32 %v2665, %v2673
      %v2675 = vadd.f32 %v2674, 1.1283791
      %v2676 = vmul.f32 %v1930, %v2675
      %v2677 = vmul.f32 %v2665, 3.8918573e-05
      %v2678 = vadd.f32 %v2677, 0.001143296
      %v2679 = vmul.f32 %v2665, %v2678
      %v2680 = vadd.f32 %v2679, 0.014752088
      %v2681 = vmul.f32 %v2665, %v2680
      %v2682 = vadd.f32 %v2681, 0.112945676
      %v2683 = vmul.f32 %v2665, %v2682
      %v2684 = vadd.f32 %v2683, 0.4994258
      %v2685 = vmul.f32 %v2665, %v2684
      %v2686 = vadd.f32 %v2685, 1.0
      %v2687 = vrcp.pop %v2686
      %v2688 = vmul.f32 %v2686, %v2687
      %v2689 = vsub.f32 1.0, %v2688
      %v2690 = vmul.f32 %v2687, %v2689
      %v2691 = vadd.f32 %v2687, %v2690
      %vm2692 = vweird.f32 %v2686
      %vm2693 = vweird.f32 %v2687
      %vm2694 = vmor %vm2692, %vm2693
      %v2695 = vsel %vm2694, %v2687, %v2691
      %v2696 = vand.u32 2147483647, %v2686
      %vm2697 = vcmp.eq.f32.partialorder %v2696, 8.507059e+37
      %v2698 = vand.u32 %v2686, 2147483648
      %v2699 = vor.u32 1.1754944e-38, %v2698
      %v2700 = vsel %vm2697, %v2699, %v2695
      %v2701 = vmul.f32 %v2676, %v2700
      %v2702 = vmin.f32 %v2701, 1.0
      %v2703 = vmax.f32 %v2702, -1.0
      %v2704 = vmul.f32 %v1931, %v1931
      %v2705 = vmin.f32 16.0, %v2704
      %v2706 = vmul.f32 %v2705, 2.1237322e-06
      %v2707 = vadd.f32 %v2706, 0.00028619796
      %v2708 = vmul.f32 %v2705, %v2707
      %v2709 = vadd.f32 %v2708, 0.0036580483
      %v2710 = vmul.f32 %v2705, %v2709
      %v2711 = vadd.f32 %v2710, 0.05243302
      %v2712 = vmul.f32 %v2705, %v2711
      %v2713 = vadd.f32 %v2712, 0.18741608
      %v2714 = vmul.f32 %v2705, %v2713
      %v2715 = vadd.f32 %v2714, 1.1283791
      %v2716 = vmul.f32 %v1931, %v2715
      %v2717 = vmul.f32 %v2705, 3.8918573e-05
      %v2718 = vadd.f32 %v2717, 0.001143296
      %v2719 = vmul.f32 %v2705, %v2718
      %v2720 = vadd.f32 %v2719, 0.014752088
      %v2721 = vmul.f32 %v2705, %v2720
      %v2722 = vadd.f32 %v2721, 0.112945676
      %v2723 = vmul.f32 %v2705, %v2722
      %v2724 = vadd.f32 %v2723, 0.4994258
      %v2725 = vmul.f32 %v2705, %v2724
      %v2726 = vadd.f32 %v2725, 1.0
      %v2727 = vrcp.pop %v2726
      %v2728 = vmul.f32 %v2726, %v2727
      %v2729 = vsub.f32 1.0, %v2728
      %v2730 = vmul.f32 %v2727, %v2729
      %v2731 = vadd.f32 %v2727, %v2730
      %vm2732 = vweird.f32 %v2726
      %vm2733 = vweird.f32 %v2727
      %vm2734 = vmor %vm2732, %vm2733
      %v2735 = vsel %vm2734, %v2727, %v2731
      %v2736 = vand.u32 2147483647, %v2726
      %vm2737 = vcmp.eq.f32.partialorder %v2736, 8.507059e+37
      %v2738 = vand.u32 %v2726, 2147483648
      %v2739 = vor.u32 1.1754944e-38, %v2738
      %v2740 = vsel %vm2737, %v2739, %v2735
      %v2741 = vmul.f32 %v2716, %v2740
      %v2742 = vmin.f32 %v2741, 1.0
      %v2743 = vmax.f32 %v2742, -1.0
      %v2744 = vmul.f32 %v1932, %v1932
      %v2745 = vmin.f32 16.0, %v2744
      %v2746 = vmul.f32 %v2745, 2.1237322e-06
      %v2747 = vadd.f32 %v2746, 0.00028619796
      %v2748 = vmul.f32 %v2745, %v2747
      %v2749 = vadd.f32 %v2748, 0.0036580483
      %v2750 = vmul.f32 %v2745, %v2749
      %v2751 = vadd.f32 %v2750, 0.05243302
      %v2752 = vmul.f32 %v2745, %v2751
      %v2753 = vadd.f32 %v2752, 0.18741608
      %v2754 = vmul.f32 %v2745, %v2753
      %v2755 = vadd.f32 %v2754, 1.1283791
      %v2756 = vmul.f32 %v1932, %v2755
      %v2757 = vmul.f32 %v2745, 3.8918573e-05
      %v2758 = vadd.f32 %v2757, 0.001143296
      %v2759 = vmul.f32 %v2745, %v2758
      %v2760 = vadd.f32 %v2759, 0.014752088
      %v2761 = vmul.f32 %v2745, %v2760
      %v2762 = vadd.f32 %v2761, 0.112945676
      %v2763 = vmul.f32 %v2745, %v2762
      %v2764 = vadd.f32 %v2763, 0.4994258
      %v2765 = vmul.f32 %v2745, %v2764
      %v2766 = vadd.f32 %v2765, 1.0
      %v2767 = vrcp.pop %v2766
      %v2768 = vmul.f32 %v2766, %v2767
      %v2769 = vsub.f32 1.0, %v2768
      %v2770 = vmul.f32 %v2767, %v2769
      %v2771 = vadd.f32 %v2767, %v2770
      %vm2772 = vweird.f32 %v2766
      %vm2773 = vweird.f32 %v2767
      %vm2774 = vmor %vm2772, %vm2773
      %v2775 = vsel %vm2774, %v2767, %v2771
      %v2776 = vand.u32 2147483647, %v2766
      %vm2777 = vcmp.eq.f32.partialorder %v2776, 8.507059e+37
      %v2778 = vand.u32 %v2766, 2147483648
      %v2779 = vor.u32 1.1754944e-38, %v2778
      %v2780 = vsel %vm2777, %v2779, %v2775
      %v2781 = vmul.f32 %v2756, %v2780
      %v2782 = vmin.f32 %v2781, 1.0
      %v2783 = vmax.f32 %v2782, -1.0
      %v2784 = vmul.f32 %v1933, %v1933
      %v2785 = vmin.f32 16.0, %v2784
      %v2786 = vmul.f32 %v2785, 2.1237322e-06
      %v2787 = vadd.f32 %v2786, 0.00028619796
      %v2788 = vmul.f32 %v2785, %v2787
      %v2789 = vadd.f32 %v2788, 0.0036580483
      %v2790 = vmul.f32 %v2785, %v2789
      %v2791 = vadd.f32 %v2790, 0.05243302
      %v2792 = vmul.f32 %v2785, %v2791
      %v2793 = vadd.f32 %v2792, 0.18741608
      %v2794 = vmul.f32 %v2785, %v2793
      %v2795 = vadd.f32 %v2794, 1.1283791
      %v2796 = vmul.f32 %v1933, %v2795
      %v2797 = vmul.f32 %v2785, 3.8918573e-05
      %v2798 = vadd.f32 %v2797, 0.001143296
      %v2799 = vmul.f32 %v2785, %v2798
      %v2800 = vadd.f32 %v2799, 0.014752088
      %v2801 = vmul.f32 %v2785, %v2800
      %v2802 = vadd.f32 %v2801, 0.112945676
      %v2803 = vmul.f32 %v2785, %v2802
      %v2804 = vadd.f32 %v2803, 0.4994258
      %v2805 = vmul.f32 %v2785, %v2804
      %v2806 = vadd.f32 %v2805, 1.0
      %v2807 = vrcp.pop %v2806
      %v2808 = vmul.f32 %v2806, %v2807
      %v2809 = vsub.f32 1.0, %v2808
      %v2810 = vmul.f32 %v2807, %v2809
      %v2811 = vadd.f32 %v2807, %v2810
      %vm2812 = vweird.f32 %v2806
      %vm2813 = vweird.f32 %v2807
      %vm2814 = vmor %vm2812, %vm2813
      %v2815 = vsel %vm2814, %v2807, %v2811
      %v2816 = vand.u32 2147483647, %v2806
      %vm2817 = vcmp.eq.f32.partialorder %v2816, 8.507059e+37
      %v2818 = vand.u32 %v2806, 2147483648
      %v2819 = vor.u32 1.1754944e-38, %v2818
      %v2820 = vsel %vm2817, %v2819, %v2815
      %v2821 = vmul.f32 %v2796, %v2820
      %v2822 = vmin.f32 %v2821, 1.0
      %v2823 = vmax.f32 %v2822, -1.0
      %v2824 = vmul.f32 %v1934, %v1934
      %v2825 = vmin.f32 16.0, %v2824
      %v2826 = vmul.f32 %v2825, 2.1237322e-06
      %v2827 = vadd.f32 %v2826, 0.00028619796
      %v2828 = vmul.f32 %v2825, %v2827
      %v2829 = vadd.f32 %v2828, 0.0036580483
      %v2830 = vmul.f32 %v2825, %v2829
      %v2831 = vadd.f32 %v2830, 0.05243302
      %v2832 = vmul.f32 %v2825, %v2831
      %v2833 = vadd.f32 %v2832, 0.18741608
      %v2834 = vmul.f32 %v2825, %v2833
      %v2835 = vadd.f32 %v2834, 1.1283791
      %v2836 = vmul.f32 %v1934, %v2835
      %v2837 = vmul.f32 %v2825, 3.8918573e-05
      %v2838 = vadd.f32 %v2837, 0.001143296
      %v2839 = vmul.f32 %v2825, %v2838
      %v2840 = vadd.f32 %v2839, 0.014752088
      %v2841 = vmul.f32 %v2825, %v2840
      %v2842 = vadd.f32 %v2841, 0.112945676
      %v2843 = vmul.f32 %v2825, %v2842
      %v2844 = vadd.f32 %v2843, 0.4994258
      %v2845 = vmul.f32 %v2825, %v2844
      %v2846 = vadd.f32 %v2845, 1.0
      %v2847 = vrcp.pop %v2846
      %v2848 = vmul.f32 %v2846, %v2847
      %v2849 = vsub.f32 1.0, %v2848
      %v2850 = vmul.f32 %v2847, %v2849
      %v2851 = vadd.f32 %v2847, %v2850
      %vm2852 = vweird.f32 %v2846
      %vm2853 = vweird.f32 %v2847
      %vm2854 = vmor %vm2852, %vm2853
      %v2855 = vsel %vm2854, %v2847, %v2851
      %v2856 = vand.u32 2147483647, %v2846
      %vm2857 = vcmp.eq.f32.partialorder %v2856, 8.507059e+37
      %v2858 = vand.u32 %v2846, 2147483648
      %v2859 = vor.u32 1.1754944e-38, %v2858
      %v2860 = vsel %vm2857, %v2859, %v2855
      %v2861 = vmul.f32 %v2836, %v2860
      %v2862 = vmin.f32 %v2861, 1.0
      %v2863 = vmax.f32 %v2862, -1.0
      %v2864 = vmul.f32 %v1935, %v1935
      %v2865 = vmin.f32 16.0, %v2864
      %v2866 = vmul.f32 %v2865, 2.1237322e-06
      %v2867 = vadd.f32 %v2866, 0.00028619796
      %v2868 = vmul.f32 %v2865, %v2867
      %v2869 = vadd.f32 %v2868, 0.0036580483
      %v2870 = vmul.f32 %v2865, %v2869
      %v2871 = vadd.f32 %v2870, 0.05243302
      %v2872 = vmul.f32 %v2865, %v2871
      %v2873 = vadd.f32 %v2872, 0.18741608
      %v2874 = vmul.f32 %v2865, %v2873
      %v2875 = vadd.f32 %v2874, 1.1283791
      %v2876 = vmul.f32 %v1935, %v2875
      %v2877 = vmul.f32 %v2865, 3.8918573e-05
      %v2878 = vadd.f32 %v2877, 0.001143296
      %v2879 = vmul.f32 %v2865, %v2878
      %v2880 = vadd.f32 %v2879, 0.014752088
      %v2881 = vmul.f32 %v2865, %v2880
      %v2882 = vadd.f32 %v2881, 0.112945676
      %v2883 = vmul.f32 %v2865, %v2882
      %v2884 = vadd.f32 %v2883, 0.4994258
      %v2885 = vmul.f32 %v2865, %v2884
      %v2886 = vadd.f32 %v2885, 1.0
      %v2887 = vrcp.pop %v2886
      %v2888 = vmul.f32 %v2886, %v2887
      %v2889 = vsub.f32 1.0, %v2888
      %v2890 = vmul.f32 %v2887, %v2889
      %v2891 = vadd.f32 %v2887, %v2890
      %vm2892 = vweird.f32 %v2886
      %vm2893 = vweird.f32 %v2887
      %vm2894 = vmor %vm2892, %vm2893
      %v2895 = vsel %vm2894, %v2887, %v2891
      %v2896 = vand.u32 2147483647, %v2886
      %vm2897 = vcmp.eq.f32.partialorder %v2896, 8.507059e+37
      %v2898 = vand.u32 %v2886, 2147483648
      %v2899 = vor.u32 1.1754944e-38, %v2898
      %v2900 = vsel %vm2897, %v2899, %v2895
      %v2901 = vmul.f32 %v2876, %v2900
      %v2902 = vmin.f32 %v2901, 1.0
      %v2903 = vmax.f32 %v2902, -1.0
      %v2904 = vmul.f32 %v1936, %v1936
      %v2905 = vmin.f32 16.0, %v2904
      %v2906 = vmul.f32 %v2905, 2.1237322e-06
      %v2907 = vadd.f32 %v2906, 0.00028619796
      %v2908 = vmul.f32 %v2905, %v2907
      %v2909 = vadd.f32 %v2908, 0.0036580483
      %v2910 = vmul.f32 %v2905, %v2909
      %v2911 = vadd.f32 %v2910, 0.05243302
      %v2912 = vmul.f32 %v2905, %v2911
      %v2913 = vadd.f32 %v2912, 0.18741608
      %v2914 = vmul.f32 %v2905, %v2913
      %v2915 = vadd.f32 %v2914, 1.1283791
      %v2916 = vmul.f32 %v1936, %v2915
      %v2917 = vmul.f32 %v2905, 3.8918573e-05
      %v2918 = vadd.f32 %v2917, 0.001143296
      %v2919 = vmul.f32 %v2905, %v2918
      %v2920 = vadd.f32 %v2919, 0.014752088
      %v2921 = vmul.f32 %v2905, %v2920
      %v2922 = vadd.f32 %v2921, 0.112945676
      %v2923 = vmul.f32 %v2905, %v2922
      %v2924 = vadd.f32 %v2923, 0.4994258
      %v2925 = vmul.f32 %v2905, %v2924
      %v2926 = vadd.f32 %v2925, 1.0
      %v2927 = vrcp.pop %v2926
      %v2928 = vmul.f32 %v2926, %v2927
      %v2929 = vsub.f32 1.0, %v2928
      %v2930 = vmul.f32 %v2927, %v2929
      %v2931 = vadd.f32 %v2927, %v2930
      %vm2932 = vweird.f32 %v2926
      %vm2933 = vweird.f32 %v2927
      %vm2934 = vmor %vm2932, %vm2933
      %v2935 = vsel %vm2934, %v2927, %v2931
      %v2936 = vand.u32 2147483647, %v2926
      %vm2937 = vcmp.eq.f32.partialorder %v2936, 8.507059e+37
      %v2938 = vand.u32 %v2926, 2147483648
      %v2939 = vor.u32 1.1754944e-38, %v2938
      %v2940 = vsel %vm2937, %v2939, %v2935
      %v2941 = vmul.f32 %v2916, %v2940
      %v2942 = vmin.f32 %v2941, 1.0
      %v2943 = vmax.f32 %v2942, -1.0
      %v2944 = vmul.f32 %v1937, %v1937
      %v2945 = vmin.f32 16.0, %v2944
      %v2946 = vmul.f32 %v2945, 2.1237322e-06
      %v2947 = vadd.f32 %v2946, 0.00028619796
      %v2948 = vmul.f32 %v2945, %v2947
      %v2949 = vadd.f32 %v2948, 0.0036580483
      %v2950 = vmul.f32 %v2945, %v2949
      %v2951 = vadd.f32 %v2950, 0.05243302
      %v2952 = vmul.f32 %v2945, %v2951
      %v2953 = vadd.f32 %v2952, 0.18741608
      %v2954 = vmul.f32 %v2945, %v2953
      %v2955 = vadd.f32 %v2954, 1.1283791
      %v2956 = vmul.f32 %v1937, %v2955
      %v2957 = vmul.f32 %v2945, 3.8918573e-05
      %v2958 = vadd.f32 %v2957, 0.001143296
      %v2959 = vmul.f32 %v2945, %v2958
      %v2960 = vadd.f32 %v2959, 0.014752088
      %v2961 = vmul.f32 %v2945, %v2960
      %v2962 = vadd.f32 %v2961, 0.112945676
      %v2963 = vmul.f32 %v2945, %v2962
      %v2964 = vadd.f32 %v2963, 0.4994258
      %v2965 = vmul.f32 %v2945, %v2964
      %v2966 = vadd.f32 %v2965, 1.0
      %v2967 = vrcp.pop %v2966
      %v2968 = vmul.f32 %v2966, %v2967
      %v2969 = vsub.f32 1.0, %v2968
      %v2970 = vmul.f32 %v2967, %v2969
      %v2971 = vadd.f32 %v2967, %v2970
      %vm2972 = vweird.f32 %v2966
      %vm2973 = vweird.f32 %v2967
      %vm2974 = vmor %vm2972, %vm2973
      %v2975 = vsel %vm2974, %v2967, %v2971
      %v2976 = vand.u32 2147483647, %v2966
      %vm2977 = vcmp.eq.f32.partialorder %v2976, 8.507059e+37
      %v2978 = vand.u32 %v2966, 2147483648
      %v2979 = vor.u32 1.1754944e-38, %v2978
      %v2980 = vsel %vm2977, %v2979, %v2975
      %v2981 = vmul.f32 %v2956, %v2980
      %v2982 = vmin.f32 %v2981, 1.0
      %v2983 = vmax.f32 %v2982, -1.0
      %v2984 = vmul.f32 %v1938, %v1938
      %v2985 = vmin.f32 16.0, %v2984
      %v2986 = vmul.f32 %v2985, 2.1237322e-06
      %v2987 = vadd.f32 %v2986, 0.00028619796
      %v2988 = vmul.f32 %v2985, %v2987
      %v2989 = vadd.f32 %v2988, 0.0036580483
      %v2990 = vmul.f32 %v2985, %v2989
      %v2991 = vadd.f32 %v2990, 0.05243302
      %v2992 = vmul.f32 %v2985, %v2991
      %v2993 = vadd.f32 %v2992, 0.18741608
      %v2994 = vmul.f32 %v2985, %v2993
      %v2995 = vadd.f32 %v2994, 1.1283791
      %v2996 = vmul.f32 %v1938, %v2995
      %v2997 = vmul.f32 %v2985, 3.8918573e-05
      %v2998 = vadd.f32 %v2997, 0.001143296
      %v2999 = vmul.f32 %v2985, %v2998
      %v3000 = vadd.f32 %v2999, 0.014752088
      %v3001 = vmul.f32 %v2985, %v3000
      %v3002 = vadd.f32 %v3001, 0.112945676
      %v3003 = vmul.f32 %v2985, %v3002
      %v3004 = vadd.f32 %v3003, 0.4994258
      %v3005 = vmul.f32 %v2985, %v3004
      %v3006 = vadd.f32 %v3005, 1.0
      %v3007 = vrcp.pop %v3006
      %v3008 = vmul.f32 %v3006, %v3007
      %v3009 = vsub.f32 1.0, %v3008
      %v3010 = vmul.f32 %v3007, %v3009
      %v3011 = vadd.f32 %v3007, %v3010
      %vm3012 = vweird.f32 %v3006
      %vm3013 = vweird.f32 %v3007
      %vm3014 = vmor %vm3012, %vm3013
      %v3015 = vsel %vm3014, %v3007, %v3011
      %v3016 = vand.u32 2147483647, %v3006
      %vm3017 = vcmp.eq.f32.partialorder %v3016, 8.507059e+37
      %v3018 = vand.u32 %v3006, 2147483648
      %v3019 = vor.u32 1.1754944e-38, %v3018
      %v3020 = vsel %vm3017, %v3019, %v3015
      %v3021 = vmul.f32 %v2996, %v3020
      %v3022 = vmin.f32 %v3021, 1.0
      %v3023 = vmax.f32 %v3022, -1.0
      %v3024 = vmul.f32 %v1939, %v1939
      %v3025 = vmin.f32 16.0, %v3024
      %v3026 = vmul.f32 %v3025, 2.1237322e-06
      %v3027 = vadd.f32 %v3026, 0.00028619796
      %v3028 = vmul.f32 %v3025, %v3027
      %v3029 = vadd.f32 %v3028, 0.0036580483
      %v3030 = vmul.f32 %v3025, %v3029
      %v3031 = vadd.f32 %v3030, 0.05243302
      %v3032 = vmul.f32 %v3025, %v3031
      %v3033 = vadd.f32 %v3032, 0.18741608
      %v3034 = vmul.f32 %v3025, %v3033
      %v3035 = vadd.f32 %v3034, 1.1283791
      %v3036 = vmul.f32 %v1939, %v3035
      %v3037 = vmul.f32 %v3025, 3.8918573e-05
      %v3038 = vadd.f32 %v3037, 0.001143296
      %v3039 = vmul.f32 %v3025, %v3038
      %v3040 = vadd.f32 %v3039, 0.014752088
      %v3041 = vmul.f32 %v3025, %v3040
      %v3042 = vadd.f32 %v3041, 0.112945676
      %v3043 = vmul.f32 %v3025, %v3042
      %v3044 = vadd.f32 %v3043, 0.4994258
      %v3045 = vmul.f32 %v3025, %v3044
      %v3046 = vadd.f32 %v3045, 1.0
      %v3047 = vrcp.pop %v3046
      %v3048 = vmul.f32 %v3046, %v3047
      %v3049 = vsub.f32 1.0, %v3048
      %v3050 = vmul.f32 %v3047, %v3049
      %v3051 = vadd.f32 %v3047, %v3050
      %vm3052 = vweird.f32 %v3046
      %vm3053 = vweird.f32 %v3047
      %vm3054 = vmor %vm3052, %vm3053
      %v3055 = vsel %vm3054, %v3047, %v3051
      %v3056 = vand.u32 2147483647, %v3046
      %vm3057 = vcmp.eq.f32.partialorder %v3056, 8.507059e+37
      %v3058 = vand.u32 %v3046, 2147483648
      %v3059 = vor.u32 1.1754944e-38, %v3058
      %v3060 = vsel %vm3057, %v3059, %v3055
      %v3061 = vmul.f32 %v3036, %v3060
      %v3062 = vmin.f32 %v3061, 1.0
      %v3063 = vmax.f32 %v3062, -1.0
      %v3064 = vmul.f32 %v1940, %v1940
      %v3065 = vmin.f32 16.0, %v3064
      %v3066 = vmul.f32 %v3065, 2.1237322e-06
      %v3067 = vadd.f32 %v3066, 0.00028619796
      %v3068 = vmul.f32 %v3065, %v3067
      %v3069 = vadd.f32 %v3068, 0.0036580483
      %v3070 = vmul.f32 %v3065, %v3069
      %v3071 = vadd.f32 %v3070, 0.05243302
      %v3072 = vmul.f32 %v3065, %v3071
      %v3073 = vadd.f32 %v3072, 0.18741608
      %v3074 = vmul.f32 %v3065, %v3073
      %v3075 = vadd.f32 %v3074, 1.1283791
      %v3076 = vmul.f32 %v1940, %v3075
      %v3077 = vmul.f32 %v3065, 3.8918573e-05
      %v3078 = vadd.f32 %v3077, 0.001143296
      %v3079 = vmul.f32 %v3065, %v3078
      %v3080 = vadd.f32 %v3079, 0.014752088
      %v3081 = vmul.f32 %v3065, %v3080
      %v3082 = vadd.f32 %v3081, 0.112945676
      %v3083 = vmul.f32 %v3065, %v3082
      %v3084 = vadd.f32 %v3083, 0.4994258
      %v3085 = vmul.f32 %v3065, %v3084
      %v3086 = vadd.f32 %v3085, 1.0
      %v3087 = vrcp.pop %v3086
      %v3088 = vmul.f32 %v3086, %v3087
      %v3089 = vsub.f32 1.0, %v3088
      %v3090 = vmul.f32 %v3087, %v3089
      %v3091 = vadd.f32 %v3087, %v3090
      %vm3092 = vweird.f32 %v3086
      %vm3093 = vweird.f32 %v3087
      %vm3094 = vmor %vm3092, %vm3093
      %v3095 = vsel %vm3094, %v3087, %v3091
      %v3096 = vand.u32 2147483647, %v3086
      %vm3097 = vcmp.eq.f32.partialorder %v3096, 8.507059e+37
      %v3098 = vand.u32 %v3086, 2147483648
      %v3099 = vor.u32 1.1754944e-38, %v3098
      %v3100 = vsel %vm3097, %v3099, %v3095
      %v3101 = vmul.f32 %v3076, %v3100
      %v3102 = vmin.f32 %v3101, 1.0
      %v3103 = vmax.f32 %v3102, -1.0
      %v3104 = vmul.f32 %v1941, %v1941
      %v3105 = vmin.f32 16.0, %v3104
      %v3106 = vmul.f32 %v3105, 2.1237322e-06
      %v3107 = vadd.f32 %v3106, 0.00028619796
      %v3108 = vmul.f32 %v3105, %v3107
      %v3109 = vadd.f32 %v3108, 0.0036580483
      %v3110 = vmul.f32 %v3105, %v3109
      %v3111 = vadd.f32 %v3110, 0.05243302
      %v3112 = vmul.f32 %v3105, %v3111
      %v3113 = vadd.f32 %v3112, 0.18741608
      %v3114 = vmul.f32 %v3105, %v3113
      %v3115 = vadd.f32 %v3114, 1.1283791
      %v3116 = vmul.f32 %v1941, %v3115
      %v3117 = vmul.f32 %v3105, 3.8918573e-05
      %v3118 = vadd.f32 %v3117, 0.001143296
      %v3119 = vmul.f32 %v3105, %v3118
      %v3120 = vadd.f32 %v3119, 0.014752088
      %v3121 = vmul.f32 %v3105, %v3120
      %v3122 = vadd.f32 %v3121, 0.112945676
      %v3123 = vmul.f32 %v3105, %v3122
      %v3124 = vadd.f32 %v3123, 0.4994258
      %v3125 = vmul.f32 %v3105, %v3124
      %v3126 = vadd.f32 %v3125, 1.0
      %v3127 = vrcp.pop %v3126
      %v3128 = vmul.f32 %v3126, %v3127
      %v3129 = vsub.f32 1.0, %v3128
      %v3130 = vmul.f32 %v3127, %v3129
      %v3131 = vadd.f32 %v3127, %v3130
      %vm3132 = vweird.f32 %v3126
      %vm3133 = vweird.f32 %v3127
      %vm3134 = vmor %vm3132, %vm3133
      %v3135 = vsel %vm3134, %v3127, %v3131
      %v3136 = vand.u32 2147483647, %v3126
      %vm3137 = vcmp.eq.f32.partialorder %v3136, 8.507059e+37
      %v3138 = vand.u32 %v3126, 2147483648
      %v3139 = vor.u32 1.1754944e-38, %v3138
      %v3140 = vsel %vm3137, %v3139, %v3135
      %v3141 = vmul.f32 %v3116, %v3140
      %v3142 = vmin.f32 %v3141, 1.0
      %v3143 = vmax.f32 %v3142, -1.0
      %v3144 = vmul.f32 %v1942, %v1942
      %v3145 = vmin.f32 16.0, %v3144
      %v3146 = vmul.f32 %v3145, 2.1237322e-06
      %v3147 = vadd.f32 %v3146, 0.00028619796
      %v3148 = vmul.f32 %v3145, %v3147
      %v3149 = vadd.f32 %v3148, 0.0036580483
      %v3150 = vmul.f32 %v3145, %v3149
      %v3151 = vadd.f32 %v3150, 0.05243302
      %v3152 = vmul.f32 %v3145, %v3151
      %v3153 = vadd.f32 %v3152, 0.18741608
      %v3154 = vmul.f32 %v3145, %v3153
      %v3155 = vadd.f32 %v3154, 1.1283791
      %v3156 = vmul.f32 %v1942, %v3155
      %v3157 = vmul.f32 %v3145, 3.8918573e-05
      %v3158 = vadd.f32 %v3157, 0.001143296
      %v3159 = vmul.f32 %v3145, %v3158
      %v3160 = vadd.f32 %v3159, 0.014752088
      %v3161 = vmul.f32 %v3145, %v3160
      %v3162 = vadd.f32 %v3161, 0.112945676
      %v3163 = vmul.f32 %v3145, %v3162
      %v3164 = vadd.f32 %v3163, 0.4994258
      %v3165 = vmul.f32 %v3145, %v3164
      %v3166 = vadd.f32 %v3165, 1.0
      %v3167 = vrcp.pop %v3166
      %v3168 = vmul.f32 %v3166, %v3167
      %v3169 = vsub.f32 1.0, %v3168
      %v3170 = vmul.f32 %v3167, %v3169
      %v3171 = vadd.f32 %v3167, %v3170
      %vm3172 = vweird.f32 %v3166
      %vm3173 = vweird.f32 %v3167
      %vm3174 = vmor %vm3172, %vm3173
      %v3175 = vsel %vm3174, %v3167, %v3171
      %v3176 = vand.u32 2147483647, %v3166
      %vm3177 = vcmp.eq.f32.partialorder %v3176, 8.507059e+37
      %v3178 = vand.u32 %v3166, 2147483648
      %v3179 = vor.u32 1.1754944e-38, %v3178
      %v3180 = vsel %vm3177, %v3179, %v3175
      %v3181 = vmul.f32 %v3156, %v3180
      %v3182 = vmin.f32 %v3181, 1.0
      %v3183 = vmax.f32 %v3182, -1.0
      %v3184 = vmul.f32 %v1943, %v1943
      %v3185 = vmin.f32 16.0, %v3184
      %v3186 = vmul.f32 %v3185, 2.1237322e-06
      %v3187 = vadd.f32 %v3186, 0.00028619796
      %v3188 = vmul.f32 %v3185, %v3187
      %v3189 = vadd.f32 %v3188, 0.0036580483
      %v3190 = vmul.f32 %v3185, %v3189
      %v3191 = vadd.f32 %v3190, 0.05243302
      %v3192 = vmul.f32 %v3185, %v3191
      %v3193 = vadd.f32 %v3192, 0.18741608
      %v3194 = vmul.f32 %v3185, %v3193
      %v3195 = vadd.f32 %v3194, 1.1283791
      %v3196 = vmul.f32 %v1943, %v3195
      %v3197 = vmul.f32 %v3185, 3.8918573e-05
      %v3198 = vadd.f32 %v3197, 0.001143296
      %v3199 = vmul.f32 %v3185, %v3198
      %v3200 = vadd.f32 %v3199, 0.014752088
      %v3201 = vmul.f32 %v3185, %v3200
      %v3202 = vadd.f32 %v3201, 0.112945676
      %v3203 = vmul.f32 %v3185, %v3202
      %v3204 = vadd.f32 %v3203, 0.4994258
      %v3205 = vmul.f32 %v3185, %v3204
      %v3206 = vadd.f32 %v3205, 1.0
      %v3207 = vrcp.pop %v3206
      %v3208 = vmul.f32 %v3206, %v3207
      %v3209 = vsub.f32 1.0, %v3208
      %v3210 = vmul.f32 %v3207, %v3209
      %v3211 = vadd.f32 %v3207, %v3210
      %vm3212 = vweird.f32 %v3206
      %vm3213 = vweird.f32 %v3207
      %vm3214 = vmor %vm3212, %vm3213
      %v3215 = vsel %vm3214, %v3207, %v3211
      %v3216 = vand.u32 2147483647, %v3206
      %vm3217 = vcmp.eq.f32.partialorder %v3216, 8.507059e+37
      %v3218 = vand.u32 %v3206, 2147483648
      %v3219 = vor.u32 1.1754944e-38, %v3218
      %v3220 = vsel %vm3217, %v3219, %v3215
      %v3221 = vmul.f32 %v3196, %v3220
      %v3222 = vmin.f32 %v3221, 1.0
      %v3223 = vmax.f32 %v3222, -1.0
      %v3224 = vadd.f32 %v1983, 1.0
      %v3225 = vadd.f32 %v2023, 1.0
      %v3226 = vadd.f32 %v2063, 1.0
      %v3227 = vadd.f32 %v2103, 1.0
      %v3228 = vadd.f32 %v2143, 1.0
      %v3229 = vadd.f32 %v2183, 1.0
      %v3230 = vadd.f32 %v2223, 1.0
      %v3231 = vadd.f32 %v2263, 1.0
      %v3232 = vadd.f32 %v2303, 1.0
      %v3233 = vadd.f32 %v2343, 1.0
      %v3234 = vadd.f32 %v2383, 1.0
      %v3235 = vadd.f32 %v2423, 1.0
      %v3236 = vadd.f32 %v2463, 1.0
      %v3237 = vadd.f32 %v2503, 1.0
      %v3238 = vadd.f32 %v2543, 1.0
      %v3239 = vadd.f32 %v2583, 1.0
      %v3240 = vadd.f32 %v2623, 1.0
      %v3241 = vadd.f32 %v2663, 1.0
      %v3242 = vadd.f32 %v2703, 1.0
      %v3243 = vadd.f32 %v2743, 1.0
      %v3244 = vadd.f32 %v2783, 1.0
      %v3245 = vadd.f32 %v2823, 1.0
      %v3246 = vadd.f32 %v2863, 1.0
      %v3247 = vadd.f32 %v2903, 1.0
      %v3248 = vadd.f32 %v2943, 1.0
      %v3249 = vadd.f32 %v2983, 1.0
      %v3250 = vadd.f32 %v3023, 1.0
      %v3251 = vadd.f32 %v3063, 1.0
      %v3252 = vadd.f32 %v3103, 1.0
      %v3253 = vadd.f32 %v3143, 1.0
      %v3254 = vadd.f32 %v3183, 1.0
      %v3255 = vadd.f32 %v3223, 1.0
      %v3256 = vmul.f32 %v1880, %v3224
      %v3257 = vmul.f32 %v1881, %v3225
      %v3258 = vmul.f32 %v1882, %v3226
      %v3259 = vmul.f32 %v1883, %v3227
      %v3260 = vmul.f32 %v1884, %v3228
      %v3261 = vmul.f32 %v1885, %v3229
      %v3262 = vmul.f32 %v1886, %v3230
      %v3263 = vmul.f32 %v1887, %v3231
      %v3264 = vmul.f32 %v1888, %v3232
      %v3265 = vmul.f32 %v1889, %v3233
      %v3266 = vmul.f32 %v1890, %v3234
      %v3267 = vmul.f32 %v1891, %v3235
      %v3268 = vmul.f32 %v1892, %v3236
      %v3269 = vmul.f32 %v1893, %v3237
      %v3270 = vmul.f32 %v1894, %v3238
      %v3271 = vmul.f32 %v1895, %v3239
      %v3272 = vmul.f32 %v1896, %v3240
      %v3273 = vmul.f32 %v1897, %v3241
      %v3274 = vmul.f32 %v1898, %v3242
      %v3275 = vmul.f32 %v1899, %v3243
      %v3276 = vmul.f32 %v1900, %v3244
      %v3277 = vmul.f32 %v1901, %v3245
      %v3278 = vmul.f32 %v1902, %v3246
      %v3279 = vmul.f32 %v1903, %v3247
      %v3280 = vmul.f32 %v1904, %v3248
      %v3281 = vmul.f32 %v1905, %v3249
      %v3282 = vmul.f32 %v1906, %v3250
      %v3283 = vmul.f32 %v1907, %v3251
      %v3284 = vmul.f32 %v1908, %v3252
      %v3285 = vmul.f32 %v1909, %v3253
      %v3286 = vmul.f32 %v1910, %v3254
      %v3287 = vmul.f32 %v1911, %v3255
      %v3288 = vld [vmem:[%s5] sm:$0xff]
      %v3289 = vld [vmem:[%s5 + $0x8] sm:$0xff]
      %v3290 = vld [vmem:[%s5 + $0x10] sm:$0xff]
      %v3291 = vld [vmem:[%s5 + $0x18] sm:$0xff]
      %v3292 = vld [vmem:[%s6] sm:$0x1]
      %v3294 = vperm.slane %v3292, 0
      %v3297 = vsel %vm526, %v3256, 0
      %v3300 = vsel %vm526, %v3257, 0
      %v3303 = vsel %vm526, %v3258, 0
      %v3306 = vsel %vm526, %v3259, 0
      %v3309 = vsel %vm526, %v3260, 0
      %v3312 = vsel %vm526, %v3261, 0
      %v3315 = vsel %vm526, %v3262, 0
      %v3318 = vsel %vm526, %v3263, 0
      %v3321 = vsel %vm526, %v3264, 0
      %v3324 = vsel %vm526, %v3265, 0
      %v3327 = vsel %vm526, %v3266, 0
      %v3330 = vsel %vm526, %v3267, 0
      %v3333 = vsel %vm526, %v3268, 0
      %v3336 = vsel %vm526, %v3269, 0
      %v3339 = vsel %vm526, %v3270, 0
      %v3342 = vsel %vm526, %v3271, 0
      %v3345 = vsel %vm526, %v3272, 0
      %v3348 = vsel %vm526, %v3273, 0
      %v3351 = vsel %vm526, %v3274, 0
      %v3354 = vsel %vm526, %v3275, 0
      %v3357 = vsel %vm526, %v3276, 0
      %v3360 = vsel %vm526, %v3277, 0
      %v3363 = vsel %vm526, %v3278, 0
      %v3366 = vsel %vm526, %v3279, 0
      %v3369 = vsel %vm526, %v3280, 0
      %v3372 = vsel %vm526, %v3281, 0
      %v3375 = vsel %vm526, %v3282, 0
      %v3378 = vsel %vm526, %v3283, 0
      %v3381 = vsel %vm526, %v3284, 0
      %v3384 = vsel %vm526, %v3285, 0
      %v3387 = vsel %vm526, %v3286, 0
      %v3390 = vsel %vm526, %v3287, 0
      %3392 = vmatpush.msra.mxu0 0.0
      %3393 = vmatpush.msra.mxu0 0.0
      %3394 = vmatpush.msra.mxu0 0.0
      %3395 = vmatpush.msra.mxu0 0.0
      %3396 = vmatpush.msra.mxu0 0.0
      %3397 = vmatpush.msra.mxu0 0.0
      %3398 = vmatpush.msra.mxu0 0.0
      %3399 = vmatpush.msra.mxu0 0.0
      %3400 = vmatpush.msra.mxu0 0.0
      %3401 = vmatpush.msra.mxu0 0.0
      %3402 = vmatpush.msra.mxu0 0.0
      %3403 = vmatpush.msra.mxu0 0.0
      %3404 = vmatpush.msra.mxu0 %v3291
      %3405 = vmatpush.msra.mxu0 %v3290
      %3406 = vmatpush.msra.mxu0 %v3289
      %3407 = vmatpush.msra.mxu0 %v3288
      %3408 = vmatmul.f32.gmra.mxu0 %v3297
      %v3409 = vpop.f32.mrf.mxu0
      %v3410 = vadd.f32 %v3294, %v3409
      %3411 = vmatmul.f32.gmra.mxu0 %v3300
      %v3412 = vpop.f32.mrf.mxu0
      %v3413 = vadd.f32 %v3294, %v3412
      %3414 = vmatmul.f32.gmra.mxu0 %v3303
      %v3415 = vpop.f32.mrf.mxu0
      %v3416 = vadd.f32 %v3294, %v3415
      %3417 = vmatmul.f32.gmra.mxu0 %v3306
      %v3418 = vpop.f32.mrf.mxu0
      %v3419 = vadd.f32 %v3294, %v3418
      %3420 = vmatmul.f32.gmra.mxu0 %v3309
      %v3421 = vpop.f32.mrf.mxu0
      %v3422 = vadd.f32 %v3294, %v3421
      %3423 = vmatmul.f32.gmra.mxu0 %v3312
      %v3424 = vpop.f32.mrf.mxu0
      %v3425 = vadd.f32 %v3294, %v3424
      %3426 = vmatmul.f32.gmra.mxu0 %v3315
      %v3427 = vpop.f32.mrf.mxu0
      %v3428 = vadd.f32 %v3294, %v3427
      %3429 = vmatmul.f32.gmra.mxu0 %v3318
      %v3430 = vpop.f32.mrf.mxu0
      %v3431 = vadd.f32 %v3294, %v3430
      %3432 = vmatmul.f32.gmra.mxu0 %v3321
      %v3433 = vpop.f32.mrf.mxu0
      %v3434 = vadd.f32 %v3294, %v3433
      %3435 = vmatmul.f32.gmra.mxu0 %v3324
      %v3436 = vpop.f32.mrf.mxu0
      %v3437 = vadd.f32 %v3294, %v3436
      %3438 = vmatmul.f32.gmra.mxu0 %v3327
      %v3439 = vpop.f32.mrf.mxu0
      %v3440 = vadd.f32 %v3294, %v3439
      %3441 = vmatmul.f32.gmra.mxu0 %v3330
      %v3442 = vpop.f32.mrf.mxu0
      %v3443 = vadd.f32 %v3294, %v3442
      %3444 = vmatmul.f32.gmra.mxu0 %v3333
      %v3445 = vpop.f32.mrf.mxu0
      %v3446 = vadd.f32 %v3294, %v3445
      %3447 = vmatmul.f32.gmra.mxu0 %v3336
      %v3448 = vpop.f32.mrf.mxu0
      %v3449 = vadd.f32 %v3294, %v3448
      %3450 = vmatmul.f32.gmra.mxu0 %v3339
      %v3451 = vpop.f32.mrf.mxu0
      %v3452 = vadd.f32 %v3294, %v3451
      %3453 = vmatmul.f32.gmra.mxu0 %v3342
      %v3454 = vpop.f32.mrf.mxu0
      %v3455 = vadd.f32 %v3294, %v3454
      %3456 = vmatmul.f32.gmra.mxu0 %v3345
      %v3457 = vpop.f32.mrf.mxu0
      %v3458 = vadd.f32 %v3294, %v3457
      %3459 = vmatmul.f32.gmra.mxu0 %v3348
      %v3460 = vpop.f32.mrf.mxu0
      %v3461 = vadd.f32 %v3294, %v3460
      %3462 = vmatmul.f32.gmra.mxu0 %v3351
      %v3463 = vpop.f32.mrf.mxu0
      %v3464 = vadd.f32 %v3294, %v3463
      %3465 = vmatmul.f32.gmra.mxu0 %v3354
      %v3466 = vpop.f32.mrf.mxu0
      %v3467 = vadd.f32 %v3294, %v3466
      %3468 = vmatmul.f32.gmra.mxu0 %v3357
      %v3469 = vpop.f32.mrf.mxu0
      %v3470 = vadd.f32 %v3294, %v3469
      %3471 = vmatmul.f32.gmra.mxu0 %v3360
      %v3472 = vpop.f32.mrf.mxu0
      %v3473 = vadd.f32 %v3294, %v3472
      %3474 = vmatmul.f32.gmra.mxu0 %v3363
      %v3475 = vpop.f32.mrf.mxu0
      %v3476 = vadd.f32 %v3294, %v3475
      %3477 = vmatmul.f32.gmra.mxu0 %v3366
      %v3478 = vpop.f32.mrf.mxu0
      %v3479 = vadd.f32 %v3294, %v3478
      %3480 = vmatmul.f32.gmra.mxu0 %v3369
      %v3481 = vpop.f32.mrf.mxu0
      %v3482 = vadd.f32 %v3294, %v3481
      %3483 = vmatmul.f32.gmra.mxu0 %v3372
      %v3484 = vpop.f32.mrf.mxu0
      %v3485 = vadd.f32 %v3294, %v3484
      %3486 = vmatmul.f32.gmra.mxu0 %v3375
      %v3487 = vpop.f32.mrf.mxu0
      %v3488 = vadd.f32 %v3294, %v3487
      %3489 = vmatmul.f32.gmra.mxu0 %v3378
      %v3490 = vpop.f32.mrf.mxu0
      %v3491 = vadd.f32 %v3294, %v3490
      %3492 = vmatmul.f32.gmra.mxu0 %v3381
      %v3493 = vpop.f32.mrf.mxu0
      %v3494 = vadd.f32 %v3294, %v3493
      %3495 = vmatmul.f32.gmra.mxu0 %v3384
      %v3496 = vpop.f32.mrf.mxu0
      %v3497 = vadd.f32 %v3294, %v3496
      %3498 = vmatmul.f32.gmra.mxu0 %v3387
      %v3499 = vpop.f32.mrf.mxu0
      %v3500 = vadd.f32 %v3294, %v3499
      %3501 = vmatmul.f32.gmra.mxu0 %v3390
      %v3502 = vpop.f32.mrf.mxu0
      %v3503 = vadd.f32 %v3294, %v3502
      %3504 = vdwg.mxu0
      %3505 = vst.msk [vmem:[%s278] sm:$0xff] %vm316, %v3410
      %3506 = vst.msk [vmem:[%s278 + $0x8] sm:$0xff] %vm316, %v3413
      %3507 = vst.msk [vmem:[%s278 + $0x10] sm:$0xff] %vm316, %v3416
      %3508 = vst.msk [vmem:[%s278 + $0x18] sm:$0xff] %vm316, %v3419
      %3509 = vst.msk [vmem:[%s278 + $0x20] sm:$0xff] %vm316, %v3422
      %3510 = vst.msk [vmem:[%s278 + $0x28] sm:$0xff] %vm316, %v3425
      %3511 = vst.msk [vmem:[%s278 + $0x30] sm:$0xff] %vm316, %v3428
      %3512 = vst.msk [vmem:[%s278 + $0x38] sm:$0xff] %vm316, %v3431
      %3513 = vst.msk [vmem:[%s278 + $0x40] sm:$0xff] %vm316, %v3434
      %3514 = vst.msk [vmem:[%s278 + $0x48] sm:$0xff] %vm316, %v3437
      %3515 = vst.msk [vmem:[%s278 + $0x50] sm:$0xff] %vm316, %v3440
      %3516 = vst.msk [vmem:[%s278 + $0x58] sm:$0xff] %vm316, %v3443
      %3517 = vst.msk [vmem:[%s278 + $0x60] sm:$0xff] %vm316, %v3446
      %3518 = vst.msk [vmem:[%s278 + $0x68] sm:$0xff] %vm316, %v3449
      %3519 = vst.msk [vmem:[%s278 + $0x70] sm:$0xff] %vm316, %v3452
      %3520 = vst.msk [vmem:[%s278 + $0x78] sm:$0xff] %vm316, %v3455
      %3521 = vst.msk [vmem:[%s278 + $0x80] sm:$0xff] %vm316, %v3458
      %3522 = vst.msk [vmem:[%s278 + $0x88] sm:$0xff] %vm316, %v3461
      %3523 = vst.msk [vmem:[%s278 + $0x90] sm:$0xff] %vm316, %v3464
      %3524 = vst.msk [vmem:[%s278 + $0x98] sm:$0xff] %vm316, %v3467
      %3525 = vst.msk [vmem:[%s278 + $0xa0] sm:$0xff] %vm316, %v3470
      %3526 = vst.msk [vmem:[%s278 + $0xa8] sm:$0xff] %vm316, %v3473
      %3527 = vst.msk [vmem:[%s278 + $0xb0] sm:$0xff] %vm316, %v3476
      %3528 = vst.msk [vmem:[%s278 + $0xb8] sm:$0xff] %vm316, %v3479
      %3529 = vst.msk [vmem:[%s278 + $0xc0] sm:$0xff] %vm316, %v3482
      %3530 = vst.msk [vmem:[%s278 + $0xc8] sm:$0xff] %vm316, %v3485
      %3531 = vst.msk [vmem:[%s278 + $0xd0] sm:$0xff] %vm316, %v3488
      %3532 = vst.msk [vmem:[%s278 + $0xd8] sm:$0xff] %vm316, %v3491
      %3533 = vst.msk [vmem:[%s278 + $0xe0] sm:$0xff] %vm316, %v3494
      %3534 = vst.msk [vmem:[%s278 + $0xe8] sm:$0xff] %vm316, %v3497
      %3535 = vst.msk [vmem:[%s278 + $0xf0] sm:$0xff] %vm316, %v3500
      %3536 = vst.msk [vmem:[%s278 + $0xf8] sm:$0xff] %vm316, %v3503
      %p3537 = scmp.lt.s32.totalorder %s18, 1
      %s3538 = scalar_select %p3537, %s18, 1
      %s3539 = smul.addr %s3538, 32
      %s3540 = smul.addr %s3539, 8
      %s3541 = scalar_lea.vmem %s7, %s3540
      // Predicated region
      $region49: #{tpu_custom_call.1} parent=47 // pred_check
        %p3542 = pneg %p188
      $region50: #{tpu_custom_call.1} parent=47 // pred_check_branch
        %3544 = sbr.rel (%p3542) target = $region52
      $region51: #{tpu_custom_call.1} parent=47 // pred_region
        _
      $region52: #{tpu_custom_call.1} parent=47 // pred_fallthru
        _
    $region48: #{tpu_custom_call.1} parent=5 // pred_fallthru
      _
    %p3545 = scmp.le.s32.totalorder 2, %s13
    // Predicated region
    $region53: #{tpu_custom_call.1} parent=5 // pred_check
      %p3546 = pneg %p3545
    $region54: #{tpu_custom_call.1} parent=5 // pred_check_branch
      %3548 = sbr.rel (%p3546) target = $region56
    $region55: #{tpu_custom_call.1} parent=5 // pred_region
      %s3549 = ssub.s32 %s13, 2
      // Predicated region
      $region57: #{tpu_custom_call.1} parent=55 // pred_check
        %p3550 = pneg %p194
      $region58: #{tpu_custom_call.1} parent=55 // pred_check_branch
        %3552 = sbr.rel (%p3550) target = $region60
      $region59: #{tpu_custom_call.1} parent=55 // pred_region
        %p3553 = scmp.lt.s32.totalorder %s19, 1
        %s3554 = scalar_select %p3553, %s19, 1
        %s3555 = smul.addr %s3554, 32
        %s3556 = smul.addr %s3555, 8
        %s3557 = scalar_lea.vmem %s7, %s3556
      $region60: #{tpu_custom_call.1} parent=55 // pred_fallthru
        _
    $region56: #{tpu_custom_call.1} parent=5 // pred_fallthru
      _
  $region6: #{tpu_custom_call.1} parent=0 // loop_footer
    %s17 = sadd.s32 1, %s13
  $region7: #{tpu_custom_call.1} parent=0 // loop_footer_branch
    %12 = sbr.rel target = $region3
  $region8: #{tpu_custom_call.1} parent=0 // loop_exit
    _

</llo_original>
